<compile_context>
chip_gen: v7x
topology: tpu7x:2x2x1
jax: 0.10.0
libtpu: 0.0.40
codegen_flags: <defaults>
</compile_context>

<pallas_src>
import jax
import jax.numpy as jnp
from jax import lax
from jax.experimental import pallas as pl
from jax.experimental.pallas import tpu as pltpu

VMEM_SPEC = pl.BlockSpec(memory_space=pltpu.MemorySpace.VMEM)


# ------------------------------ fused kernel -------------------------------


def _build_fused_kernel(num_lstm_layers):
    """One fused kernel: one-hot embed -> fc1 -> LSTM stack -> fc2/3/4 -> logits."""

    def kernel(*refs):
        (tok_ref, embed_ref, w1_ref, b1_ref) = refs[:4]
        lstm_refs = refs[4:4 + 3 * num_lstm_layers]
        (w2_ref, b2_ref, w3_ref, b3_ref,
         w4a_ref, w4b_ref, b4_ref,
         wf_ref, bf_ref, out_ref) = refs[4 + 3 * num_lstm_layers:]

        B, T, _ = out_ref.shape
        V = embed_ref.shape[0]
        N = B * T
        f32 = jnp.float32

        # Embedding lookup as a one-hot matmul (no gather, runs on the MXU).
        tok = tok_ref[...]                                    # (N, 1) int32, time-major
        lane = lax.broadcasted_iota(jnp.int32, (N, V), 1)
        onehot = (lane == tok).astype(f32)                    # (N, V)
        emb = jnp.dot(onehot, embed_ref[...], preferred_element_type=f32)

        # fc_1
        fc1 = jnp.dot(emb, w1_ref[...], preferred_element_type=f32) + b1_ref[...]

        # LSTM stack.  PyTorch gate order (i, f, g, o); bias = b_ih + b_hh.
        def lstm_layer(x, wih, whh, bias):
            H = whh.shape[0]
            # Hoisted input projection: one (N, 4H) matmul instead of T tiny ones.
            gates_x = jnp.dot(x, wih, preferred_element_type=f32) + bias
            h = jnp.zeros((B, H), f32)
            c = jnp.zeros((B, H), f32)
            hs = []
            for t in range(T):                    # static unroll: T small & fixed
                g = gates_x[t * B:(t + 1) * B, :] + jnp.dot(
                    h, whh, preferred_element_type=f32)
                i_g = jax.nn.sigmoid(g[:, 0 * H:1 * H])
                f_g = jax.nn.sigmoid(g[:, 1 * H:2 * H])
                g_g = jnp.tanh(g[:, 2 * H:3 * H])
                o_g = jax.nn.sigmoid(g[:, 3 * H:4 * H])
                c = f_g * c + i_g * g_g
                h = o_g * jnp.tanh(c)
                hs.append(h)
            return jnp.concatenate(hs, axis=0)    # (N, H), time-major

        x = fc1
        for l in range(num_lstm_layers):
            wih, whh, bias = lstm_refs[3 * l:3 * l + 3]
            x = lstm_layer(x, wih[...], whh[...], bias[...])
        lstm_out = x                                          # (N, LS)

        # Parallel fc chain (the reference module has no nonlinearities here).
        fc2 = jnp.dot(fc1, w2_ref[...], preferred_element_type=f32) + b2_ref[...]
        fc3 = jnp.dot(fc2, w3_ref[...], preferred_element_type=f32) + b3_ref[...]
        fc4 = (jnp.dot(lstm_out, w4a_ref[...], preferred_element_type=f32)
               + jnp.dot(fc3, w4b_ref[...], preferred_element_type=f32)
               + b4_ref[...])
        logits = jnp.dot(fc4, wf_ref[...], preferred_element_type=f32) + bf_ref[...]

        # Time-major rows (t*B + b) -> (B, T, V) output, all static slices and
        # contiguous per-batch stores (no dynamic indexing, no host transpose).
        for b in range(B):
            rows = [logits[t * B + b:t * B + b + 1, :] for t in range(T)]
            out_ref[b] = jnp.concatenate(rows, axis=0)

    return kernel


def tweet_model_forward(params, tokens):
    """train=True path: propagate(encoded_tweet)[0] -> (B, T, vocab) logits."""
    B, T = tokens.shape
    V, _ = params['embed'].shape
    num_layers = len(params['lstm'])

    # Time-major token order so the in-kernel recurrence uses contiguous
    # static slices.  This (2,8) int32 transpose is the only host-side glue.
    tok_tm = tokens.astype(jnp.int32).T.reshape(T * B, 1)

    args = [tok_tm, params['embed'], params['w1'], params['b1'].reshape(1, -1)]
    for layer in params['lstm']:
        args += [layer['wih'], layer['whh'], layer['b'].reshape(1, -1)]
    args += [params['w2'], params['b2'].reshape(1, -1),
             params['w3'], params['b3'].reshape(1, -1),
             params['w4a'], params['w4b'], params['b4'].reshape(1, -1),
             params['wf'], params['bf'].reshape(1, -1)]

    kernel = _build_fused_kernel(num_layers)
    return pl.pallas_call(
        kernel,
        out_shape=jax.ShapeDtypeStruct((B, T, V), jnp.float32),
        in_specs=[VMEM_SPEC] * len(args),
        out_specs=VMEM_SPEC,
    )(*args)


# TODO(synk): the train=False branch (autoregressive generation with
# torch.multinomial / temperature sampling) is stochastic and is not ported;
# only the propagate()/train path is implemented.


# --------------------------- parameter building ----------------------------


def _xavier_uniform(key, fan_in, fan_out):
    limit = (6.0 / (fan_in + fan_out)) ** 0.5
    return jax.random.uniform(key, (fan_in, fan_out), jnp.float32, -limit, limit)


def _uniform(key, shape, bound):
    return jax.random.uniform(key, shape, jnp.float32, -bound, bound)


def init_params(key, config):
    m = config['model']
    E = m['embedding_size']
    L = m['num_lstm_layers']
    LS = m['lstm_size']
    H = [m[f'hidden_size_{i + 1}'] for i in range(4)]
    V = 32  # vocab_size

    keys = iter(jax.random.split(key, 32))
    p = {}
    p['embed'] = jax.random.normal(next(keys), (V, E), jnp.float32)

    # fc weights stored as (in, out) so the kernel computes x @ W directly.
    p['w1'] = _xavier_uniform(next(keys), E, H[0])
    p['b1'] = _uniform(next(keys), (H[0],), 1.0 / (E ** 0.5))
    p['w2'] = _xavier_uniform(next(keys), H[0], H[1])
    p['b2'] = _uniform(next(keys), (H[1],), 1.0 / (H[0] ** 0.5))
    p['w3'] = _xavier_uniform(next(keys), H[1], H[2])
    p['b3'] = _uniform(next(keys), (H[2],), 1.0 / (H[1] ** 0.5))
    # fc_4 acts on concat([lstm_out (LS), fc3_out (H2)]) -> split weight
    w4 = _xavier_uniform(next(keys), LS + H[2], H[3])
    p['w4a'] = w4[:LS, :]
    p['w4b'] = w4[LS:, :]
    p['b4'] = _uniform(next(keys), (H[3],), 1.0 / ((LS + H[2]) ** 0.5))
    p['wf'] = _xavier_uniform(next(keys), H[3], V)
    p['bf'] = _uniform(next(keys), (V,), 1.0 / (H[3] ** 0.5))

    bound = 1.0 / (LS ** 0.5)
    p['lstm'] = []
    for layer in range(L):
        hin = H[0] if layer == 0 else LS
        p['lstm'].append({
            'wih': _uniform(next(keys), (hin, 4 * LS), bound),
            'whh': _uniform(next(keys), (LS, 4 * LS), bound),
            'b': (_uniform(next(keys), (4 * LS,), bound)
                  + _uniform(next(keys), (4 * LS,), bound)),  # b_ih + b_hh fused
        })
    return p


# --------------------------- pure-JAX reference ----------------------------


def reference_forward(params, tokens):
    B, T = tokens.shape
    emb = jnp.take(params['embed'], tokens, axis=0)
    fc1 = emb @ params['w1'] + params['b1']                   # (B, T, H0)

    x = fc1
    for layer in params['lstm']:
        LS = layer['whh'].shape[0]

        def cell(carry, x_t, layer=layer, LS=LS):
            h, c = carry
            gates = x_t @ layer['wih'] + h @ layer['whh'] + layer['b']
            i = jax.nn.sigmoid(gates[:, 0 * LS:1 * LS])
            f = jax.nn.sigmoid(gates[:, 1 * LS:2 * LS])
            g = jnp.tanh(gates[:, 2 * LS:3 * LS])
            o = jax.nn.sigmoid(gates[:, 3 * LS:4 * LS])
            c = f * c + i * g
            h = o * jnp.tanh(c)
            return (h, c), h

        h0 = jnp.zeros((B, LS), jnp.float32)
        c0 = jnp.zeros((B, LS), jnp.float32)
        _, h_seq = lax.scan(cell, (h0, c0), x.transpose(1, 0, 2))
        x = h_seq.transpose(1, 0, 2)
    lstm_out = x

    fc2 = fc1 @ params['w2'] + params['b2']
    fc3 = fc2 @ params['w3'] + params['b3']
    fc4 = (lstm_out @ params['w4a'] + fc3 @ params['w4b'] + params['b4'])
    return fc4 @ params['wf'] + params['bf']


# ----------------------------------- main -----------------------------------

if __name__ == "__main__":
    config = {
        'model': {
            'embedding_size': 16,
            'num_lstm_layers': 2,
            'lstm_size': 32,
            'hidden_size_1': 32,
            'hidden_size_2': 32,
            'hidden_size_3': 32,
            'hidden_size_4': 32,
        }
    }

    key = jax.random.PRNGKey(0)
    k_params, k_tokens = jax.random.split(key)
    params = init_params(k_params, config)

    B, T = 2, 8
    tokens = jax.random.randint(k_tokens, (B, T), 0, 32, dtype=jnp.int32)

    forward = jax.jit(tweet_model_forward)
    logits = forward(params, tokens)
    logits = jax.block_until_ready(logits)

    ref = reference_forward(params, tokens)
    assert logits.shape == (B, T, 32), logits.shape
    assert jnp.allclose(logits, ref, atol=1e-4, rtol=1e-4), (
        float(jnp.max(jnp.abs(logits - ref))))

    print("KERNEL_OK")
</pallas_src>

<mosaic_0001>
module attributes {stable_mosaic.version = 11 : i64} {
  func.func @kernel(%arg0: memref<16x1xi32, #tpu.memory_space<vmem>>, %arg1: memref<32x16xf32, #tpu.memory_space<vmem>>, %arg2: memref<16x32xf32, #tpu.memory_space<vmem>>, %arg3: memref<1x32xf32, #tpu.memory_space<vmem>>, %arg4: memref<32x128xf32, #tpu.memory_space<vmem>>, %arg5: memref<32x128xf32, #tpu.memory_space<vmem>>, %arg6: memref<1x128xf32, #tpu.memory_space<vmem>>, %arg7: memref<32x128xf32, #tpu.memory_space<vmem>>, %arg8: memref<32x128xf32, #tpu.memory_space<vmem>>, %arg9: memref<1x128xf32, #tpu.memory_space<vmem>>, %arg10: memref<32x32xf32, #tpu.memory_space<vmem>>, %arg11: memref<1x32xf32, #tpu.memory_space<vmem>>, %arg12: memref<32x32xf32, #tpu.memory_space<vmem>>, %arg13: memref<1x32xf32, #tpu.memory_space<vmem>>, %arg14: memref<32x32xf32, #tpu.memory_space<vmem>>, %arg15: memref<32x32xf32, #tpu.memory_space<vmem>>, %arg16: memref<1x32xf32, #tpu.memory_space<vmem>>, %arg17: memref<32x32xf32, #tpu.memory_space<vmem>>, %arg18: memref<1x32xf32, #tpu.memory_space<vmem>>, %arg19: memref<2x8x32xf32, #tpu.memory_space<vmem>>) attributes {dimension_semantics = [], scalar_prefetch = 0 : i64, scratch_operands = 0 : i64, tpu.core_type = #tpu.core_type<tc>} {
    %c0 = arith.constant 0 : index
    %c0_0 = arith.constant 0 : index
    %0 = vector.load %arg0[%c0, %c0_0] : memref<16x1xi32, #tpu.memory_space<vmem>>, vector<16x1xi32>
    %1 = tpu.iota {dimensions = array<i32: 1>} : vector<16x32xi32>
    %2 = vector.broadcast %0 : vector<16x1xi32> to vector<16x32xi32>
    %3 = arith.cmpi eq, %1, %2 : vector<16x32xi32>
    %4 = arith.extui %3 : vector<16x32xi1> to vector<16x32xi32>
    %5 = arith.sitofp %4 : vector<16x32xi32> to vector<16x32xf32>
    %c0_1 = arith.constant 0 : index
    %c0_2 = arith.constant 0 : index
    %6 = vector.load %arg1[%c0_1, %c0_2] : memref<32x16xf32, #tpu.memory_space<vmem>>, vector<32x16xf32>
    %cst = arith.constant dense<0.000000e+00> : vector<16x16xf32>
    %7 = tpu.matmul %5, %6, %cst {dimension_numbers = #tpu.dot_dimension_numbers<[1], [0], [0], [1], [0, 0, 1, 1], [], []>} : vector<16x32xf32>, vector<32x16xf32>, vector<16x16xf32> -> vector<16x16xf32>
    %c0_3 = arith.constant 0 : index
    %c0_4 = arith.constant 0 : index
    %8 = vector.load %arg2[%c0_3, %c0_4] : memref<16x32xf32, #tpu.memory_space<vmem>>, vector<16x32xf32>
    %cst_5 = arith.constant dense<0.000000e+00> : vector<16x32xf32>
    %9 = tpu.matmul %7, %8, %cst_5 {dimension_numbers = #tpu.dot_dimension_numbers<[1], [0], [0], [1], [0, 0, 1, 1], [], []>} : vector<16x16xf32>, vector<16x32xf32>, vector<16x32xf32> -> vector<16x32xf32>
    %c0_6 = arith.constant 0 : index
    %c0_7 = arith.constant 0 : index
    %10 = vector.load %arg3[%c0_6, %c0_7] : memref<1x32xf32, #tpu.memory_space<vmem>>, vector<1x32xf32>
    %11 = vector.broadcast %10 : vector<1x32xf32> to vector<16x32xf32>
    %12 = arith.addf %9, %11 : vector<16x32xf32>
    %c0_8 = arith.constant 0 : index
    %c0_9 = arith.constant 0 : index
    %13 = vector.load %arg4[%c0_8, %c0_9] : memref<32x128xf32, #tpu.memory_space<vmem>>, vector<32x128xf32>
    %c0_10 = arith.constant 0 : index
    %c0_11 = arith.constant 0 : index
    %14 = vector.load %arg5[%c0_10, %c0_11] : memref<32x128xf32, #tpu.memory_space<vmem>>, vector<32x128xf32>
    %c0_12 = arith.constant 0 : index
    %c0_13 = arith.constant 0 : index
    %15 = vector.load %arg6[%c0_12, %c0_13] : memref<1x128xf32, #tpu.memory_space<vmem>>, vector<1x128xf32>
    %cst_14 = arith.constant dense<0.000000e+00> : vector<16x128xf32>
    %16 = tpu.matmul %12, %13, %cst_14 {dimension_numbers = #tpu.dot_dimension_numbers<[1], [0], [0], [1], [0, 0, 1, 1], [], []>} : vector<16x32xf32>, vector<32x128xf32>, vector<16x128xf32> -> vector<16x128xf32>
    %17 = vector.broadcast %15 : vector<1x128xf32> to vector<16x128xf32>
    %18 = arith.addf %16, %17 : vector<16x128xf32>
    %cst_15 = arith.constant 0.000000e+00 : f32
    %19 = vector.broadcast %cst_15 : f32 to vector<2x32xf32>
    %cst_16 = arith.constant 0.000000e+00 : f32
    %20 = vector.broadcast %cst_16 : f32 to vector<2x32xf32>
    %21 = vector.extract_strided_slice %18 {offsets = [0, 0], sizes = [2, 128], strides = [1, 1]} : vector<16x128xf32> to vector<2x128xf32>
    %cst_17 = arith.constant dense<0.000000e+00> : vector<2x128xf32>
    %22 = tpu.matmul %19, %14, %cst_17 {dimension_numbers = #tpu.dot_dimension_numbers<[1], [0], [0], [1], [0, 0, 1, 1], [], []>} : vector<2x32xf32>, vector<32x128xf32>, vector<2x128xf32> -> vector<2x128xf32>
    %23 = arith.addf %21, %22 : vector<2x128xf32>
    %24 = vector.extract_strided_slice %23 {offsets = [0, 0], sizes = [2, 32], strides = [1, 1]} : vector<2x128xf32> to vector<2x32xf32>
    %25 = arith.negf %24 : vector<2x32xf32>
    %26 = math.exp %25 : vector<2x32xf32>
    %cst_18 = arith.constant 1.000000e+00 : f32
    %27 = vector.broadcast %cst_18 : f32 to vector<2x32xf32>
    %28 = arith.addf %27, %26 : vector<2x32xf32>
    %29 = arith.divf %27, %28 : vector<2x32xf32>
    %30 = vector.extract_strided_slice %23 {offsets = [0, 32], sizes = [2, 32], strides = [1, 1]} : vector<2x128xf32> to vector<2x32xf32>
    %31 = arith.negf %30 : vector<2x32xf32>
    %32 = math.exp %31 : vector<2x32xf32>
    %cst_19 = arith.constant 1.000000e+00 : f32
    %33 = vector.broadcast %cst_19 : f32 to vector<2x32xf32>
    %34 = arith.addf %33, %32 : vector<2x32xf32>
    %35 = arith.divf %33, %34 : vector<2x32xf32>
    %36 = vector.extract_strided_slice %23 {offsets = [0, 64], sizes = [2, 32], strides = [1, 1]} : vector<2x128xf32> to vector<2x32xf32>
    %37 = math.tanh %36 : vector<2x32xf32>
    %38 = vector.extract_strided_slice %23 {offsets = [0, 96], sizes = [2, 32], strides = [1, 1]} : vector<2x128xf32> to vector<2x32xf32>
    %39 = arith.negf %38 : vector<2x32xf32>
    %40 = math.exp %39 : vector<2x32xf32>
    %cst_20 = arith.constant 1.000000e+00 : f32
    %41 = vector.broadcast %cst_20 : f32 to vector<2x32xf32>
    %42 = arith.addf %41, %40 : vector<2x32xf32>
    %43 = arith.divf %41, %42 : vector<2x32xf32>
    %44 = arith.mulf %35, %20 : vector<2x32xf32>
    %45 = arith.mulf %29, %37 : vector<2x32xf32>
    %46 = arith.addf %44, %45 : vector<2x32xf32>
    %47 = math.tanh %46 : vector<2x32xf32>
    %48 = arith.mulf %43, %47 : vector<2x32xf32>
    %49 = vector.extract_strided_slice %18 {offsets = [2, 0], sizes = [2, 128], strides = [1, 1]} : vector<16x128xf32> to vector<2x128xf32>
    %cst_21 = arith.constant dense<0.000000e+00> : vector<2x128xf32>
    %50 = tpu.matmul %48, %14, %cst_21 {dimension_numbers = #tpu.dot_dimension_numbers<[1], [0], [0], [1], [0, 0, 1, 1], [], []>} : vector<2x32xf32>, vector<32x128xf32>, vector<2x128xf32> -> vector<2x128xf32>
    %51 = arith.addf %49, %50 : vector<2x128xf32>
    %52 = vector.extract_strided_slice %51 {offsets = [0, 0], sizes = [2, 32], strides = [1, 1]} : vector<2x128xf32> to vector<2x32xf32>
    %53 = arith.negf %52 : vector<2x32xf32>
    %54 = math.exp %53 : vector<2x32xf32>
    %cst_22 = arith.constant 1.000000e+00 : f32
    %55 = vector.broadcast %cst_22 : f32 to vector<2x32xf32>
    %56 = arith.addf %55, %54 : vector<2x32xf32>
    %57 = arith.divf %55, %56 : vector<2x32xf32>
    %58 = vector.extract_strided_slice %51 {offsets = [0, 32], sizes = [2, 32], strides = [1, 1]} : vector<2x128xf32> to vector<2x32xf32>
    %59 = arith.negf %58 : vector<2x32xf32>
    %60 = math.exp %59 : vector<2x32xf32>
    %cst_23 = arith.constant 1.000000e+00 : f32
    %61 = vector.broadcast %cst_23 : f32 to vector<2x32xf32>
    %62 = arith.addf %61, %60 : vector<2x32xf32>
    %63 = arith.divf %61, %62 : vector<2x32xf32>
    %64 = vector.extract_strided_slice %51 {offsets = [0, 64], sizes = [2, 32], strides = [1, 1]} : vector<2x128xf32> to vector<2x32xf32>
    %65 = math.tanh %64 : vector<2x32xf32>
    %66 = vector.extract_strided_slice %51 {offsets = [0, 96], sizes = [2, 32], strides = [1, 1]} : vector<2x128xf32> to vector<2x32xf32>
    %67 = arith.negf %66 : vector<2x32xf32>
    %68 = math.exp %67 : vector<2x32xf32>
    %cst_24 = arith.constant 1.000000e+00 : f32
    %69 = vector.broadcast %cst_24 : f32 to vector<2x32xf32>
    %70 = arith.addf %69, %68 : vector<2x32xf32>
    %71 = arith.divf %69, %70 : vector<2x32xf32>
    %72 = arith.mulf %63, %46 : vector<2x32xf32>
    %73 = arith.mulf %57, %65 : vector<2x32xf32>
    %74 = arith.addf %72, %73 : vector<2x32xf32>
    %75 = math.tanh %74 : vector<2x32xf32>
    %76 = arith.mulf %71, %75 : vector<2x32xf32>
    %77 = vector.extract_strided_slice %18 {offsets = [4, 0], sizes = [2, 128], strides = [1, 1]} : vector<16x128xf32> to vector<2x128xf32>
    %cst_25 = arith.constant dense<0.000000e+00> : vector<2x128xf32>
    %78 = tpu.matmul %76, %14, %cst_25 {dimension_numbers = #tpu.dot_dimension_numbers<[1], [0], [0], [1], [0, 0, 1, 1], [], []>} : vector<2x32xf32>, vector<32x128xf32>, vector<2x128xf32> -> vector<2x128xf32>
    %79 = arith.addf %77, %78 : vector<2x128xf32>
    %80 = vector.extract_strided_slice %79 {offsets = [0, 0], sizes = [2, 32], strides = [1, 1]} : vector<2x128xf32> to vector<2x32xf32>
    %81 = arith.negf %80 : vector<2x32xf32>
    %82 = math.exp %81 : vector<2x32xf32>
    %cst_26 = arith.constant 1.000000e+00 : f32
    %83 = vector.broadcast %cst_26 : f32 to vector<2x32xf32>
    %84 = arith.addf %83, %82 : vector<2x32xf32>
    %85 = arith.divf %83, %84 : vector<2x32xf32>
    %86 = vector.extract_strided_slice %79 {offsets = [0, 32], sizes = [2, 32], strides = [1, 1]} : vector<2x128xf32> to vector<2x32xf32>
    %87 = arith.negf %86 : vector<2x32xf32>
    %88 = math.exp %87 : vector<2x32xf32>
    %cst_27 = arith.constant 1.000000e+00 : f32
    %89 = vector.broadcast %cst_27 : f32 to vector<2x32xf32>
    %90 = arith.addf %89, %88 : vector<2x32xf32>
    %91 = arith.divf %89, %90 : vector<2x32xf32>
    %92 = vector.extract_strided_slice %79 {offsets = [0, 64], sizes = [2, 32], strides = [1, 1]} : vector<2x128xf32> to vector<2x32xf32>
    %93 = math.tanh %92 : vector<2x32xf32>
    %94 = vector.extract_strided_slice %79 {offsets = [0, 96], sizes = [2, 32], strides = [1, 1]} : vector<2x128xf32> to vector<2x32xf32>
    %95 = arith.negf %94 : vector<2x32xf32>
    %96 = math.exp %95 : vector<2x32xf32>
    %cst_28 = arith.constant 1.000000e+00 : f32
    %97 = vector.broadcast %cst_28 : f32 to vector<2x32xf32>
    %98 = arith.addf %97, %96 : vector<2x32xf32>
    %99 = arith.divf %97, %98 : vector<2x32xf32>
    %100 = arith.mulf %91, %74 : vector<2x32xf32>
    %101 = arith.mulf %85, %93 : vector<2x32xf32>
    %102 = arith.addf %100, %101 : vector<2x32xf32>
    %103 = math.tanh %102 : vector<2x32xf32>
    %104 = arith.mulf %99, %103 : vector<2x32xf32>
    %105 = vector.extract_strided_slice %18 {offsets = [6, 0], sizes = [2, 128], strides = [1, 1]} : vector<16x128xf32> to vector<2x128xf32>
    %cst_29 = arith.constant dense<0.000000e+00> : vector<2x128xf32>
    %106 = tpu.matmul %104, %14, %cst_29 {dimension_numbers = #tpu.dot_dimension_numbers<[1], [0], [0], [1], [0, 0, 1, 1], [], []>} : vector<2x32xf32>, vector<32x128xf32>, vector<2x128xf32> -> vector<2x128xf32>
    %107 = arith.addf %105, %106 : vector<2x128xf32>
    %108 = vector.extract_strided_slice %107 {offsets = [0, 0], sizes = [2, 32], strides = [1, 1]} : vector<2x128xf32> to vector<2x32xf32>
    %109 = arith.negf %108 : vector<2x32xf32>
    %110 = math.exp %109 : vector<2x32xf32>
    %cst_30 = arith.constant 1.000000e+00 : f32
    %111 = vector.broadcast %cst_30 : f32 to vector<2x32xf32>
    %112 = arith.addf %111, %110 : vector<2x32xf32>
    %113 = arith.divf %111, %112 : vector<2x32xf32>
    %114 = vector.extract_strided_slice %107 {offsets = [0, 32], sizes = [2, 32], strides = [1, 1]} : vector<2x128xf32> to vector<2x32xf32>
    %115 = arith.negf %114 : vector<2x32xf32>
    %116 = math.exp %115 : vector<2x32xf32>
    %cst_31 = arith.constant 1.000000e+00 : f32
    %117 = vector.broadcast %cst_31 : f32 to vector<2x32xf32>
    %118 = arith.addf %117, %116 : vector<2x32xf32>
    %119 = arith.divf %117, %118 : vector<2x32xf32>
    %120 = vector.extract_strided_slice %107 {offsets = [0, 64], sizes = [2, 32], strides = [1, 1]} : vector<2x128xf32> to vector<2x32xf32>
    %121 = math.tanh %120 : vector<2x32xf32>
    %122 = vector.extract_strided_slice %107 {offsets = [0, 96], sizes = [2, 32], strides = [1, 1]} : vector<2x128xf32> to vector<2x32xf32>
    %123 = arith.negf %122 : vector<2x32xf32>
    %124 = math.exp %123 : vector<2x32xf32>
    %cst_32 = arith.constant 1.000000e+00 : f32
    %125 = vector.broadcast %cst_32 : f32 to vector<2x32xf32>
    %126 = arith.addf %125, %124 : vector<2x32xf32>
    %127 = arith.divf %125, %126 : vector<2x32xf32>
    %128 = arith.mulf %119, %102 : vector<2x32xf32>
    %129 = arith.mulf %113, %121 : vector<2x32xf32>
    %130 = arith.addf %128, %129 : vector<2x32xf32>
    %131 = math.tanh %130 : vector<2x32xf32>
    %132 = arith.mulf %127, %131 : vector<2x32xf32>
    %133 = vector.extract_strided_slice %18 {offsets = [8, 0], sizes = [2, 128], strides = [1, 1]} : vector<16x128xf32> to vector<2x128xf32>
    %cst_33 = arith.constant dense<0.000000e+00> : vector<2x128xf32>
    %134 = tpu.matmul %132, %14, %cst_33 {dimension_numbers = #tpu.dot_dimension_numbers<[1], [0], [0], [1], [0, 0, 1, 1], [], []>} : vector<2x32xf32>, vector<32x128xf32>, vector<2x128xf32> -> vector<2x128xf32>
    %135 = arith.addf %133, %134 : vector<2x128xf32>
    %136 = vector.extract_strided_slice %135 {offsets = [0, 0], sizes = [2, 32], strides = [1, 1]} : vector<2x128xf32> to vector<2x32xf32>
    %137 = arith.negf %136 : vector<2x32xf32>
    %138 = math.exp %137 : vector<2x32xf32>
    %cst_34 = arith.constant 1.000000e+00 : f32
    %139 = vector.broadcast %cst_34 : f32 to vector<2x32xf32>
    %140 = arith.addf %139, %138 : vector<2x32xf32>
    %141 = arith.divf %139, %140 : vector<2x32xf32>
    %142 = vector.extract_strided_slice %135 {offsets = [0, 32], sizes = [2, 32], strides = [1, 1]} : vector<2x128xf32> to vector<2x32xf32>
    %143 = arith.negf %142 : vector<2x32xf32>
    %144 = math.exp %143 : vector<2x32xf32>
    %cst_35 = arith.constant 1.000000e+00 : f32
    %145 = vector.broadcast %cst_35 : f32 to vector<2x32xf32>
    %146 = arith.addf %145, %144 : vector<2x32xf32>
    %147 = arith.divf %145, %146 : vector<2x32xf32>
    %148 = vector.extract_strided_slice %135 {offsets = [0, 64], sizes = [2, 32], strides = [1, 1]} : vector<2x128xf32> to vector<2x32xf32>
    %149 = math.tanh %148 : vector<2x32xf32>
    %150 = vector.extract_strided_slice %135 {offsets = [0, 96], sizes = [2, 32], strides = [1, 1]} : vector<2x128xf32> to vector<2x32xf32>
    %151 = arith.negf %150 : vector<2x32xf32>
    %152 = math.exp %151 : vector<2x32xf32>
    %cst_36 = arith.constant 1.000000e+00 : f32
    %153 = vector.broadcast %cst_36 : f32 to vector<2x32xf32>
    %154 = arith.addf %153, %152 : vector<2x32xf32>
    %155 = arith.divf %153, %154 : vector<2x32xf32>
    %156 = arith.mulf %147, %130 : vector<2x32xf32>
    %157 = arith.mulf %141, %149 : vector<2x32xf32>
    %158 = arith.addf %156, %157 : vector<2x32xf32>
    %159 = math.tanh %158 : vector<2x32xf32>
    %160 = arith.mulf %155, %159 : vector<2x32xf32>
    %161 = vector.extract_strided_slice %18 {offsets = [10, 0], sizes = [2, 128], strides = [1, 1]} : vector<16x128xf32> to vector<2x128xf32>
    %cst_37 = arith.constant dense<0.000000e+00> : vector<2x128xf32>
    %162 = tpu.matmul %160, %14, %cst_37 {dimension_numbers = #tpu.dot_dimension_numbers<[1], [0], [0], [1], [0, 0, 1, 1], [], []>} : vector<2x32xf32>, vector<32x128xf32>, vector<2x128xf32> -> vector<2x128xf32>
    %163 = arith.addf %161, %162 : vector<2x128xf32>
    %164 = vector.extract_strided_slice %163 {offsets = [0, 0], sizes = [2, 32], strides = [1, 1]} : vector<2x128xf32> to vector<2x32xf32>
    %165 = arith.negf %164 : vector<2x32xf32>
    %166 = math.exp %165 : vector<2x32xf32>
    %cst_38 = arith.constant 1.000000e+00 : f32
    %167 = vector.broadcast %cst_38 : f32 to vector<2x32xf32>
    %168 = arith.addf %167, %166 : vector<2x32xf32>
    %169 = arith.divf %167, %168 : vector<2x32xf32>
    %170 = vector.extract_strided_slice %163 {offsets = [0, 32], sizes = [2, 32], strides = [1, 1]} : vector<2x128xf32> to vector<2x32xf32>
    %171 = arith.negf %170 : vector<2x32xf32>
    %172 = math.exp %171 : vector<2x32xf32>
    %cst_39 = arith.constant 1.000000e+00 : f32
    %173 = vector.broadcast %cst_39 : f32 to vector<2x32xf32>
    %174 = arith.addf %173, %172 : vector<2x32xf32>
    %175 = arith.divf %173, %174 : vector<2x32xf32>
    %176 = vector.extract_strided_slice %163 {offsets = [0, 64], sizes = [2, 32], strides = [1, 1]} : vector<2x128xf32> to vector<2x32xf32>
    %177 = math.tanh %176 : vector<2x32xf32>
    %178 = vector.extract_strided_slice %163 {offsets = [0, 96], sizes = [2, 32], strides = [1, 1]} : vector<2x128xf32> to vector<2x32xf32>
    %179 = arith.negf %178 : vector<2x32xf32>
    %180 = math.exp %179 : vector<2x32xf32>
    %cst_40 = arith.constant 1.000000e+00 : f32
    %181 = vector.broadcast %cst_40 : f32 to vector<2x32xf32>
    %182 = arith.addf %181, %180 : vector<2x32xf32>
    %183 = arith.divf %181, %182 : vector<2x32xf32>
    %184 = arith.mulf %175, %158 : vector<2x32xf32>
    %185 = arith.mulf %169, %177 : vector<2x32xf32>
    %186 = arith.addf %184, %185 : vector<2x32xf32>
    %187 = math.tanh %186 : vector<2x32xf32>
    %188 = arith.mulf %183, %187 : vector<2x32xf32>
    %189 = vector.extract_strided_slice %18 {offsets = [12, 0], sizes = [2, 128], strides = [1, 1]} : vector<16x128xf32> to vector<2x128xf32>
    %cst_41 = arith.constant dense<0.000000e+00> : vector<2x128xf32>
    %190 = tpu.matmul %188, %14, %cst_41 {dimension_numbers = #tpu.dot_dimension_numbers<[1], [0], [0], [1], [0, 0, 1, 1], [], []>} : vector<2x32xf32>, vector<32x128xf32>, vector<2x128xf32> -> vector<2x128xf32>
    %191 = arith.addf %189, %190 : vector<2x128xf32>
    %192 = vector.extract_strided_slice %191 {offsets = [0, 0], sizes = [2, 32], strides = [1, 1]} : vector<2x128xf32> to vector<2x32xf32>
    %193 = arith.negf %192 : vector<2x32xf32>
    %194 = math.exp %193 : vector<2x32xf32>
    %cst_42 = arith.constant 1.000000e+00 : f32
    %195 = vector.broadcast %cst_42 : f32 to vector<2x32xf32>
    %196 = arith.addf %195, %194 : vector<2x32xf32>
    %197 = arith.divf %195, %196 : vector<2x32xf32>
    %198 = vector.extract_strided_slice %191 {offsets = [0, 32], sizes = [2, 32], strides = [1, 1]} : vector<2x128xf32> to vector<2x32xf32>
    %199 = arith.negf %198 : vector<2x32xf32>
    %200 = math.exp %199 : vector<2x32xf32>
    %cst_43 = arith.constant 1.000000e+00 : f32
    %201 = vector.broadcast %cst_43 : f32 to vector<2x32xf32>
    %202 = arith.addf %201, %200 : vector<2x32xf32>
    %203 = arith.divf %201, %202 : vector<2x32xf32>
    %204 = vector.extract_strided_slice %191 {offsets = [0, 64], sizes = [2, 32], strides = [1, 1]} : vector<2x128xf32> to vector<2x32xf32>
    %205 = math.tanh %204 : vector<2x32xf32>
    %206 = vector.extract_strided_slice %191 {offsets = [0, 96], sizes = [2, 32], strides = [1, 1]} : vector<2x128xf32> to vector<2x32xf32>
    %207 = arith.negf %206 : vector<2x32xf32>
    %208 = math.exp %207 : vector<2x32xf32>
    %cst_44 = arith.constant 1.000000e+00 : f32
    %209 = vector.broadcast %cst_44 : f32 to vector<2x32xf32>
    %210 = arith.addf %209, %208 : vector<2x32xf32>
    %211 = arith.divf %209, %210 : vector<2x32xf32>
    %212 = arith.mulf %203, %186 : vector<2x32xf32>
    %213 = arith.mulf %197, %205 : vector<2x32xf32>
    %214 = arith.addf %212, %213 : vector<2x32xf32>
    %215 = math.tanh %214 : vector<2x32xf32>
    %216 = arith.mulf %211, %215 : vector<2x32xf32>
    %217 = vector.extract_strided_slice %18 {offsets = [14, 0], sizes = [2, 128], strides = [1, 1]} : vector<16x128xf32> to vector<2x128xf32>
    %cst_45 = arith.constant dense<0.000000e+00> : vector<2x128xf32>
    %218 = tpu.matmul %216, %14, %cst_45 {dimension_numbers = #tpu.dot_dimension_numbers<[1], [0], [0], [1], [0, 0, 1, 1], [], []>} : vector<2x32xf32>, vector<32x128xf32>, vector<2x128xf32> -> vector<2x128xf32>
    %219 = arith.addf %217, %218 : vector<2x128xf32>
    %220 = vector.extract_strided_slice %219 {offsets = [0, 0], sizes = [2, 32], strides = [1, 1]} : vector<2x128xf32> to vector<2x32xf32>
    %221 = arith.negf %220 : vector<2x32xf32>
    %222 = math.exp %221 : vector<2x32xf32>
    %cst_46 = arith.constant 1.000000e+00 : f32
    %223 = vector.broadcast %cst_46 : f32 to vector<2x32xf32>
    %224 = arith.addf %223, %222 : vector<2x32xf32>
    %225 = arith.divf %223, %224 : vector<2x32xf32>
    %226 = vector.extract_strided_slice %219 {offsets = [0, 32], sizes = [2, 32], strides = [1, 1]} : vector<2x128xf32> to vector<2x32xf32>
    %227 = arith.negf %226 : vector<2x32xf32>
    %228 = math.exp %227 : vector<2x32xf32>
    %cst_47 = arith.constant 1.000000e+00 : f32
    %229 = vector.broadcast %cst_47 : f32 to vector<2x32xf32>
    %230 = arith.addf %229, %228 : vector<2x32xf32>
    %231 = arith.divf %229, %230 : vector<2x32xf32>
    %232 = vector.extract_strided_slice %219 {offsets = [0, 64], sizes = [2, 32], strides = [1, 1]} : vector<2x128xf32> to vector<2x32xf32>
    %233 = math.tanh %232 : vector<2x32xf32>
    %234 = vector.extract_strided_slice %219 {offsets = [0, 96], sizes = [2, 32], strides = [1, 1]} : vector<2x128xf32> to vector<2x32xf32>
    %235 = arith.negf %234 : vector<2x32xf32>
    %236 = math.exp %235 : vector<2x32xf32>
    %cst_48 = arith.constant 1.000000e+00 : f32
    %237 = vector.broadcast %cst_48 : f32 to vector<2x32xf32>
    %238 = arith.addf %237, %236 : vector<2x32xf32>
    %239 = arith.divf %237, %238 : vector<2x32xf32>
    %240 = arith.mulf %231, %214 : vector<2x32xf32>
    %241 = arith.mulf %225, %233 : vector<2x32xf32>
    %242 = arith.addf %240, %241 : vector<2x32xf32>
    %243 = math.tanh %242 : vector<2x32xf32>
    %244 = arith.mulf %239, %243 : vector<2x32xf32>
    %245 = tpu.concatenate %48, %76, %104, %132, %160, %188, %216, %244 in 0 : vector<2x32xf32>, vector<2x32xf32>, vector<2x32xf32>, vector<2x32xf32>, vector<2x32xf32>, vector<2x32xf32>, vector<2x32xf32>, vector<2x32xf32> -> vector<16x32xf32>
    %c0_49 = arith.constant 0 : index
    %c0_50 = arith.constant 0 : index
    %246 = vector.load %arg7[%c0_49, %c0_50] : memref<32x128xf32, #tpu.memory_space<vmem>>, vector<32x128xf32>
    %c0_51 = arith.constant 0 : index
    %c0_52 = arith.constant 0 : index
    %247 = vector.load %arg8[%c0_51, %c0_52] : memref<32x128xf32, #tpu.memory_space<vmem>>, vector<32x128xf32>
    %c0_53 = arith.constant 0 : index
    %c0_54 = arith.constant 0 : index
    %248 = vector.load %arg9[%c0_53, %c0_54] : memref<1x128xf32, #tpu.memory_space<vmem>>, vector<1x128xf32>
    %cst_55 = arith.constant dense<0.000000e+00> : vector<16x128xf32>
    %249 = tpu.matmul %245, %246, %cst_55 {dimension_numbers = #tpu.dot_dimension_numbers<[1], [0], [0], [1], [0, 0, 1, 1], [], []>} : vector<16x32xf32>, vector<32x128xf32>, vector<16x128xf32> -> vector<16x128xf32>
    %250 = vector.broadcast %248 : vector<1x128xf32> to vector<16x128xf32>
    %251 = arith.addf %249, %250 : vector<16x128xf32>
    %cst_56 = arith.constant 0.000000e+00 : f32
    %252 = vector.broadcast %cst_56 : f32 to vector<2x32xf32>
    %cst_57 = arith.constant 0.000000e+00 : f32
    %253 = vector.broadcast %cst_57 : f32 to vector<2x32xf32>
    %254 = vector.extract_strided_slice %251 {offsets = [0, 0], sizes = [2, 128], strides = [1, 1]} : vector<16x128xf32> to vector<2x128xf32>
    %cst_58 = arith.constant dense<0.000000e+00> : vector<2x128xf32>
    %255 = tpu.matmul %252, %247, %cst_58 {dimension_numbers = #tpu.dot_dimension_numbers<[1], [0], [0], [1], [0, 0, 1, 1], [], []>} : vector<2x32xf32>, vector<32x128xf32>, vector<2x128xf32> -> vector<2x128xf32>
    %256 = arith.addf %254, %255 : vector<2x128xf32>
    %257 = vector.extract_strided_slice %256 {offsets = [0, 0], sizes = [2, 32], strides = [1, 1]} : vector<2x128xf32> to vector<2x32xf32>
    %258 = arith.negf %257 : vector<2x32xf32>
    %259 = math.exp %258 : vector<2x32xf32>
    %cst_59 = arith.constant 1.000000e+00 : f32
    %260 = vector.broadcast %cst_59 : f32 to vector<2x32xf32>
    %261 = arith.addf %260, %259 : vector<2x32xf32>
    %262 = arith.divf %260, %261 : vector<2x32xf32>
    %263 = vector.extract_strided_slice %256 {offsets = [0, 32], sizes = [2, 32], strides = [1, 1]} : vector<2x128xf32> to vector<2x32xf32>
    %264 = arith.negf %263 : vector<2x32xf32>
    %265 = math.exp %264 : vector<2x32xf32>
    %cst_60 = arith.constant 1.000000e+00 : f32
    %266 = vector.broadcast %cst_60 : f32 to vector<2x32xf32>
    %267 = arith.addf %266, %265 : vector<2x32xf32>
    %268 = arith.divf %266, %267 : vector<2x32xf32>
    %269 = vector.extract_strided_slice %256 {offsets = [0, 64], sizes = [2, 32], strides = [1, 1]} : vector<2x128xf32> to vector<2x32xf32>
    %270 = math.tanh %269 : vector<2x32xf32>
    %271 = vector.extract_strided_slice %256 {offsets = [0, 96], sizes = [2, 32], strides = [1, 1]} : vector<2x128xf32> to vector<2x32xf32>
    %272 = arith.negf %271 : vector<2x32xf32>
    %273 = math.exp %272 : vector<2x32xf32>
    %cst_61 = arith.constant 1.000000e+00 : f32
    %274 = vector.broadcast %cst_61 : f32 to vector<2x32xf32>
    %275 = arith.addf %274, %273 : vector<2x32xf32>
    %276 = arith.divf %274, %275 : vector<2x32xf32>
    %277 = arith.mulf %268, %253 : vector<2x32xf32>
    %278 = arith.mulf %262, %270 : vector<2x32xf32>
    %279 = arith.addf %277, %278 : vector<2x32xf32>
    %280 = math.tanh %279 : vector<2x32xf32>
    %281 = arith.mulf %276, %280 : vector<2x32xf32>
    %282 = vector.extract_strided_slice %251 {offsets = [2, 0], sizes = [2, 128], strides = [1, 1]} : vector<16x128xf32> to vector<2x128xf32>
    %cst_62 = arith.constant dense<0.000000e+00> : vector<2x128xf32>
    %283 = tpu.matmul %281, %247, %cst_62 {dimension_numbers = #tpu.dot_dimension_numbers<[1], [0], [0], [1], [0, 0, 1, 1], [], []>} : vector<2x32xf32>, vector<32x128xf32>, vector<2x128xf32> -> vector<2x128xf32>
    %284 = arith.addf %282, %283 : vector<2x128xf32>
    %285 = vector.extract_strided_slice %284 {offsets = [0, 0], sizes = [2, 32], strides = [1, 1]} : vector<2x128xf32> to vector<2x32xf32>
    %286 = arith.negf %285 : vector<2x32xf32>
    %287 = math.exp %286 : vector<2x32xf32>
    %cst_63 = arith.constant 1.000000e+00 : f32
    %288 = vector.broadcast %cst_63 : f32 to vector<2x32xf32>
    %289 = arith.addf %288, %287 : vector<2x32xf32>
    %290 = arith.divf %288, %289 : vector<2x32xf32>
    %291 = vector.extract_strided_slice %284 {offsets = [0, 32], sizes = [2, 32], strides = [1, 1]} : vector<2x128xf32> to vector<2x32xf32>
    %292 = arith.negf %291 : vector<2x32xf32>
    %293 = math.exp %292 : vector<2x32xf32>
    %cst_64 = arith.constant 1.000000e+00 : f32
    %294 = vector.broadcast %cst_64 : f32 to vector<2x32xf32>
    %295 = arith.addf %294, %293 : vector<2x32xf32>
    %296 = arith.divf %294, %295 : vector<2x32xf32>
    %297 = vector.extract_strided_slice %284 {offsets = [0, 64], sizes = [2, 32], strides = [1, 1]} : vector<2x128xf32> to vector<2x32xf32>
    %298 = math.tanh %297 : vector<2x32xf32>
    %299 = vector.extract_strided_slice %284 {offsets = [0, 96], sizes = [2, 32], strides = [1, 1]} : vector<2x128xf32> to vector<2x32xf32>
    %300 = arith.negf %299 : vector<2x32xf32>
    %301 = math.exp %300 : vector<2x32xf32>
    %cst_65 = arith.constant 1.000000e+00 : f32
    %302 = vector.broadcast %cst_65 : f32 to vector<2x32xf32>
    %303 = arith.addf %302, %301 : vector<2x32xf32>
    %304 = arith.divf %302, %303 : vector<2x32xf32>
    %305 = arith.mulf %296, %279 : vector<2x32xf32>
    %306 = arith.mulf %290, %298 : vector<2x32xf32>
    %307 = arith.addf %305, %306 : vector<2x32xf32>
    %308 = math.tanh %307 : vector<2x32xf32>
    %309 = arith.mulf %304, %308 : vector<2x32xf32>
    %310 = vector.extract_strided_slice %251 {offsets = [4, 0], sizes = [2, 128], strides = [1, 1]} : vector<16x128xf32> to vector<2x128xf32>
    %cst_66 = arith.constant dense<0.000000e+00> : vector<2x128xf32>
    %311 = tpu.matmul %309, %247, %cst_66 {dimension_numbers = #tpu.dot_dimension_numbers<[1], [0], [0], [1], [0, 0, 1, 1], [], []>} : vector<2x32xf32>, vector<32x128xf32>, vector<2x128xf32> -> vector<2x128xf32>
    %312 = arith.addf %310, %311 : vector<2x128xf32>
    %313 = vector.extract_strided_slice %312 {offsets = [0, 0], sizes = [2, 32], strides = [1, 1]} : vector<2x128xf32> to vector<2x32xf32>
    %314 = arith.negf %313 : vector<2x32xf32>
    %315 = math.exp %314 : vector<2x32xf32>
    %cst_67 = arith.constant 1.000000e+00 : f32
    %316 = vector.broadcast %cst_67 : f32 to vector<2x32xf32>
    %317 = arith.addf %316, %315 : vector<2x32xf32>
    %318 = arith.divf %316, %317 : vector<2x32xf32>
    %319 = vector.extract_strided_slice %312 {offsets = [0, 32], sizes = [2, 32], strides = [1, 1]} : vector<2x128xf32> to vector<2x32xf32>
    %320 = arith.negf %319 : vector<2x32xf32>
    %321 = math.exp %320 : vector<2x32xf32>
    %cst_68 = arith.constant 1.000000e+00 : f32
    %322 = vector.broadcast %cst_68 : f32 to vector<2x32xf32>
    %323 = arith.addf %322, %321 : vector<2x32xf32>
    %324 = arith.divf %322, %323 : vector<2x32xf32>
    %325 = vector.extract_strided_slice %312 {offsets = [0, 64], sizes = [2, 32], strides = [1, 1]} : vector<2x128xf32> to vector<2x32xf32>
    %326 = math.tanh %325 : vector<2x32xf32>
    %327 = vector.extract_strided_slice %312 {offsets = [0, 96], sizes = [2, 32], strides = [1, 1]} : vector<2x128xf32> to vector<2x32xf32>
    %328 = arith.negf %327 : vector<2x32xf32>
    %329 = math.exp %328 : vector<2x32xf32>
    %cst_69 = arith.constant 1.000000e+00 : f32
    %330 = vector.broadcast %cst_69 : f32 to vector<2x32xf32>
    %331 = arith.addf %330, %329 : vector<2x32xf32>
    %332 = arith.divf %330, %331 : vector<2x32xf32>
    %333 = arith.mulf %324, %307 : vector<2x32xf32>
    %334 = arith.mulf %318, %326 : vector<2x32xf32>
    %335 = arith.addf %333, %334 : vector<2x32xf32>
    %336 = math.tanh %335 : vector<2x32xf32>
    %337 = arith.mulf %332, %336 : vector<2x32xf32>
    %338 = vector.extract_strided_slice %251 {offsets = [6, 0], sizes = [2, 128], strides = [1, 1]} : vector<16x128xf32> to vector<2x128xf32>
    %cst_70 = arith.constant dense<0.000000e+00> : vector<2x128xf32>
    %339 = tpu.matmul %337, %247, %cst_70 {dimension_numbers = #tpu.dot_dimension_numbers<[1], [0], [0], [1], [0, 0, 1, 1], [], []>} : vector<2x32xf32>, vector<32x128xf32>, vector<2x128xf32> -> vector<2x128xf32>
    %340 = arith.addf %338, %339 : vector<2x128xf32>
    %341 = vector.extract_strided_slice %340 {offsets = [0, 0], sizes = [2, 32], strides = [1, 1]} : vector<2x128xf32> to vector<2x32xf32>
    %342 = arith.negf %341 : vector<2x32xf32>
    %343 = math.exp %342 : vector<2x32xf32>
    %cst_71 = arith.constant 1.000000e+00 : f32
    %344 = vector.broadcast %cst_71 : f32 to vector<2x32xf32>
    %345 = arith.addf %344, %343 : vector<2x32xf32>
    %346 = arith.divf %344, %345 : vector<2x32xf32>
    %347 = vector.extract_strided_slice %340 {offsets = [0, 32], sizes = [2, 32], strides = [1, 1]} : vector<2x128xf32> to vector<2x32xf32>
    %348 = arith.negf %347 : vector<2x32xf32>
    %349 = math.exp %348 : vector<2x32xf32>
    %cst_72 = arith.constant 1.000000e+00 : f32
    %350 = vector.broadcast %cst_72 : f32 to vector<2x32xf32>
    %351 = arith.addf %350, %349 : vector<2x32xf32>
    %352 = arith.divf %350, %351 : vector<2x32xf32>
    %353 = vector.extract_strided_slice %340 {offsets = [0, 64], sizes = [2, 32], strides = [1, 1]} : vector<2x128xf32> to vector<2x32xf32>
    %354 = math.tanh %353 : vector<2x32xf32>
    %355 = vector.extract_strided_slice %340 {offsets = [0, 96], sizes = [2, 32], strides = [1, 1]} : vector<2x128xf32> to vector<2x32xf32>
    %356 = arith.negf %355 : vector<2x32xf32>
    %357 = math.exp %356 : vector<2x32xf32>
    %cst_73 = arith.constant 1.000000e+00 : f32
    %358 = vector.broadcast %cst_73 : f32 to vector<2x32xf32>
    %359 = arith.addf %358, %357 : vector<2x32xf32>
    %360 = arith.divf %358, %359 : vector<2x32xf32>
    %361 = arith.mulf %352, %335 : vector<2x32xf32>
    %362 = arith.mulf %346, %354 : vector<2x32xf32>
    %363 = arith.addf %361, %362 : vector<2x32xf32>
    %364 = math.tanh %363 : vector<2x32xf32>
    %365 = arith.mulf %360, %364 : vector<2x32xf32>
    %366 = vector.extract_strided_slice %251 {offsets = [8, 0], sizes = [2, 128], strides = [1, 1]} : vector<16x128xf32> to vector<2x128xf32>
    %cst_74 = arith.constant dense<0.000000e+00> : vector<2x128xf32>
    %367 = tpu.matmul %365, %247, %cst_74 {dimension_numbers = #tpu.dot_dimension_numbers<[1], [0], [0], [1], [0, 0, 1, 1], [], []>} : vector<2x32xf32>, vector<32x128xf32>, vector<2x128xf32> -> vector<2x128xf32>
    %368 = arith.addf %366, %367 : vector<2x128xf32>
    %369 = vector.extract_strided_slice %368 {offsets = [0, 0], sizes = [2, 32], strides = [1, 1]} : vector<2x128xf32> to vector<2x32xf32>
    %370 = arith.negf %369 : vector<2x32xf32>
    %371 = math.exp %370 : vector<2x32xf32>
    %cst_75 = arith.constant 1.000000e+00 : f32
    %372 = vector.broadcast %cst_75 : f32 to vector<2x32xf32>
    %373 = arith.addf %372, %371 : vector<2x32xf32>
    %374 = arith.divf %372, %373 : vector<2x32xf32>
    %375 = vector.extract_strided_slice %368 {offsets = [0, 32], sizes = [2, 32], strides = [1, 1]} : vector<2x128xf32> to vector<2x32xf32>
    %376 = arith.negf %375 : vector<2x32xf32>
    %377 = math.exp %376 : vector<2x32xf32>
    %cst_76 = arith.constant 1.000000e+00 : f32
    %378 = vector.broadcast %cst_76 : f32 to vector<2x32xf32>
    %379 = arith.addf %378, %377 : vector<2x32xf32>
    %380 = arith.divf %378, %379 : vector<2x32xf32>
    %381 = vector.extract_strided_slice %368 {offsets = [0, 64], sizes = [2, 32], strides = [1, 1]} : vector<2x128xf32> to vector<2x32xf32>
    %382 = math.tanh %381 : vector<2x32xf32>
    %383 = vector.extract_strided_slice %368 {offsets = [0, 96], sizes = [2, 32], strides = [1, 1]} : vector<2x128xf32> to vector<2x32xf32>
    %384 = arith.negf %383 : vector<2x32xf32>
    %385 = math.exp %384 : vector<2x32xf32>
    %cst_77 = arith.constant 1.000000e+00 : f32
    %386 = vector.broadcast %cst_77 : f32 to vector<2x32xf32>
    %387 = arith.addf %386, %385 : vector<2x32xf32>
    %388 = arith.divf %386, %387 : vector<2x32xf32>
    %389 = arith.mulf %380, %363 : vector<2x32xf32>
    %390 = arith.mulf %374, %382 : vector<2x32xf32>
    %391 = arith.addf %389, %390 : vector<2x32xf32>
    %392 = math.tanh %391 : vector<2x32xf32>
    %393 = arith.mulf %388, %392 : vector<2x32xf32>
    %394 = vector.extract_strided_slice %251 {offsets = [10, 0], sizes = [2, 128], strides = [1, 1]} : vector<16x128xf32> to vector<2x128xf32>
    %cst_78 = arith.constant dense<0.000000e+00> : vector<2x128xf32>
    %395 = tpu.matmul %393, %247, %cst_78 {dimension_numbers = #tpu.dot_dimension_numbers<[1], [0], [0], [1], [0, 0, 1, 1], [], []>} : vector<2x32xf32>, vector<32x128xf32>, vector<2x128xf32> -> vector<2x128xf32>
    %396 = arith.addf %394, %395 : vector<2x128xf32>
    %397 = vector.extract_strided_slice %396 {offsets = [0, 0], sizes = [2, 32], strides = [1, 1]} : vector<2x128xf32> to vector<2x32xf32>
    %398 = arith.negf %397 : vector<2x32xf32>
    %399 = math.exp %398 : vector<2x32xf32>
    %cst_79 = arith.constant 1.000000e+00 : f32
    %400 = vector.broadcast %cst_79 : f32 to vector<2x32xf32>
    %401 = arith.addf %400, %399 : vector<2x32xf32>
    %402 = arith.divf %400, %401 : vector<2x32xf32>
    %403 = vector.extract_strided_slice %396 {offsets = [0, 32], sizes = [2, 32], strides = [1, 1]} : vector<2x128xf32> to vector<2x32xf32>
    %404 = arith.negf %403 : vector<2x32xf32>
    %405 = math.exp %404 : vector<2x32xf32>
    %cst_80 = arith.constant 1.000000e+00 : f32
    %406 = vector.broadcast %cst_80 : f32 to vector<2x32xf32>
    %407 = arith.addf %406, %405 : vector<2x32xf32>
    %408 = arith.divf %406, %407 : vector<2x32xf32>
    %409 = vector.extract_strided_slice %396 {offsets = [0, 64], sizes = [2, 32], strides = [1, 1]} : vector<2x128xf32> to vector<2x32xf32>
    %410 = math.tanh %409 : vector<2x32xf32>
    %411 = vector.extract_strided_slice %396 {offsets = [0, 96], sizes = [2, 32], strides = [1, 1]} : vector<2x128xf32> to vector<2x32xf32>
    %412 = arith.negf %411 : vector<2x32xf32>
    %413 = math.exp %412 : vector<2x32xf32>
    %cst_81 = arith.constant 1.000000e+00 : f32
    %414 = vector.broadcast %cst_81 : f32 to vector<2x32xf32>
    %415 = arith.addf %414, %413 : vector<2x32xf32>
    %416 = arith.divf %414, %415 : vector<2x32xf32>
    %417 = arith.mulf %408, %391 : vector<2x32xf32>
    %418 = arith.mulf %402, %410 : vector<2x32xf32>
    %419 = arith.addf %417, %418 : vector<2x32xf32>
    %420 = math.tanh %419 : vector<2x32xf32>
    %421 = arith.mulf %416, %420 : vector<2x32xf32>
    %422 = vector.extract_strided_slice %251 {offsets = [12, 0], sizes = [2, 128], strides = [1, 1]} : vector<16x128xf32> to vector<2x128xf32>
    %cst_82 = arith.constant dense<0.000000e+00> : vector<2x128xf32>
    %423 = tpu.matmul %421, %247, %cst_82 {dimension_numbers = #tpu.dot_dimension_numbers<[1], [0], [0], [1], [0, 0, 1, 1], [], []>} : vector<2x32xf32>, vector<32x128xf32>, vector<2x128xf32> -> vector<2x128xf32>
    %424 = arith.addf %422, %423 : vector<2x128xf32>
    %425 = vector.extract_strided_slice %424 {offsets = [0, 0], sizes = [2, 32], strides = [1, 1]} : vector<2x128xf32> to vector<2x32xf32>
    %426 = arith.negf %425 : vector<2x32xf32>
    %427 = math.exp %426 : vector<2x32xf32>
    %cst_83 = arith.constant 1.000000e+00 : f32
    %428 = vector.broadcast %cst_83 : f32 to vector<2x32xf32>
    %429 = arith.addf %428, %427 : vector<2x32xf32>
    %430 = arith.divf %428, %429 : vector<2x32xf32>
    %431 = vector.extract_strided_slice %424 {offsets = [0, 32], sizes = [2, 32], strides = [1, 1]} : vector<2x128xf32> to vector<2x32xf32>
    %432 = arith.negf %431 : vector<2x32xf32>
    %433 = math.exp %432 : vector<2x32xf32>
    %cst_84 = arith.constant 1.000000e+00 : f32
    %434 = vector.broadcast %cst_84 : f32 to vector<2x32xf32>
    %435 = arith.addf %434, %433 : vector<2x32xf32>
    %436 = arith.divf %434, %435 : vector<2x32xf32>
    %437 = vector.extract_strided_slice %424 {offsets = [0, 64], sizes = [2, 32], strides = [1, 1]} : vector<2x128xf32> to vector<2x32xf32>
    %438 = math.tanh %437 : vector<2x32xf32>
    %439 = vector.extract_strided_slice %424 {offsets = [0, 96], sizes = [2, 32], strides = [1, 1]} : vector<2x128xf32> to vector<2x32xf32>
    %440 = arith.negf %439 : vector<2x32xf32>
    %441 = math.exp %440 : vector<2x32xf32>
    %cst_85 = arith.constant 1.000000e+00 : f32
    %442 = vector.broadcast %cst_85 : f32 to vector<2x32xf32>
    %443 = arith.addf %442, %441 : vector<2x32xf32>
    %444 = arith.divf %442, %443 : vector<2x32xf32>
    %445 = arith.mulf %436, %419 : vector<2x32xf32>
    %446 = arith.mulf %430, %438 : vector<2x32xf32>
    %447 = arith.addf %445, %446 : vector<2x32xf32>
    %448 = math.tanh %447 : vector<2x32xf32>
    %449 = arith.mulf %444, %448 : vector<2x32xf32>
    %450 = vector.extract_strided_slice %251 {offsets = [14, 0], sizes = [2, 128], strides = [1, 1]} : vector<16x128xf32> to vector<2x128xf32>
    %cst_86 = arith.constant dense<0.000000e+00> : vector<2x128xf32>
    %451 = tpu.matmul %449, %247, %cst_86 {dimension_numbers = #tpu.dot_dimension_numbers<[1], [0], [0], [1], [0, 0, 1, 1], [], []>} : vector<2x32xf32>, vector<32x128xf32>, vector<2x128xf32> -> vector<2x128xf32>
    %452 = arith.addf %450, %451 : vector<2x128xf32>
    %453 = vector.extract_strided_slice %452 {offsets = [0, 0], sizes = [2, 32], strides = [1, 1]} : vector<2x128xf32> to vector<2x32xf32>
    %454 = arith.negf %453 : vector<2x32xf32>
    %455 = math.exp %454 : vector<2x32xf32>
    %cst_87 = arith.constant 1.000000e+00 : f32
    %456 = vector.broadcast %cst_87 : f32 to vector<2x32xf32>
    %457 = arith.addf %456, %455 : vector<2x32xf32>
    %458 = arith.divf %456, %457 : vector<2x32xf32>
    %459 = vector.extract_strided_slice %452 {offsets = [0, 32], sizes = [2, 32], strides = [1, 1]} : vector<2x128xf32> to vector<2x32xf32>
    %460 = arith.negf %459 : vector<2x32xf32>
    %461 = math.exp %460 : vector<2x32xf32>
    %cst_88 = arith.constant 1.000000e+00 : f32
    %462 = vector.broadcast %cst_88 : f32 to vector<2x32xf32>
    %463 = arith.addf %462, %461 : vector<2x32xf32>
    %464 = arith.divf %462, %463 : vector<2x32xf32>
    %465 = vector.extract_strided_slice %452 {offsets = [0, 64], sizes = [2, 32], strides = [1, 1]} : vector<2x128xf32> to vector<2x32xf32>
    %466 = math.tanh %465 : vector<2x32xf32>
    %467 = vector.extract_strided_slice %452 {offsets = [0, 96], sizes = [2, 32], strides = [1, 1]} : vector<2x128xf32> to vector<2x32xf32>
    %468 = arith.negf %467 : vector<2x32xf32>
    %469 = math.exp %468 : vector<2x32xf32>
    %cst_89 = arith.constant 1.000000e+00 : f32
    %470 = vector.broadcast %cst_89 : f32 to vector<2x32xf32>
    %471 = arith.addf %470, %469 : vector<2x32xf32>
    %472 = arith.divf %470, %471 : vector<2x32xf32>
    %473 = arith.mulf %464, %447 : vector<2x32xf32>
    %474 = arith.mulf %458, %466 : vector<2x32xf32>
    %475 = arith.addf %473, %474 : vector<2x32xf32>
    %476 = math.tanh %475 : vector<2x32xf32>
    %477 = arith.mulf %472, %476 : vector<2x32xf32>
    %478 = tpu.concatenate %281, %309, %337, %365, %393, %421, %449, %477 in 0 : vector<2x32xf32>, vector<2x32xf32>, vector<2x32xf32>, vector<2x32xf32>, vector<2x32xf32>, vector<2x32xf32>, vector<2x32xf32>, vector<2x32xf32> -> vector<16x32xf32>
    %c0_90 = arith.constant 0 : index
    %c0_91 = arith.constant 0 : index
    %479 = vector.load %arg10[%c0_90, %c0_91] : memref<32x32xf32, #tpu.memory_space<vmem>>, vector<32x32xf32>
    %cst_92 = arith.constant dense<0.000000e+00> : vector<16x32xf32>
    %480 = tpu.matmul %12, %479, %cst_92 {dimension_numbers = #tpu.dot_dimension_numbers<[1], [0], [0], [1], [0, 0, 1, 1], [], []>} : vector<16x32xf32>, vector<32x32xf32>, vector<16x32xf32> -> vector<16x32xf32>
    %c0_93 = arith.constant 0 : index
    %c0_94 = arith.constant 0 : index
    %481 = vector.load %arg11[%c0_93, %c0_94] : memref<1x32xf32, #tpu.memory_space<vmem>>, vector<1x32xf32>
    %482 = vector.broadcast %481 : vector<1x32xf32> to vector<16x32xf32>
    %483 = arith.addf %480, %482 : vector<16x32xf32>
    %c0_95 = arith.constant 0 : index
    %c0_96 = arith.constant 0 : index
    %484 = vector.load %arg12[%c0_95, %c0_96] : memref<32x32xf32, #tpu.memory_space<vmem>>, vector<32x32xf32>
    %cst_97 = arith.constant dense<0.000000e+00> : vector<16x32xf32>
    %485 = tpu.matmul %483, %484, %cst_97 {dimension_numbers = #tpu.dot_dimension_numbers<[1], [0], [0], [1], [0, 0, 1, 1], [], []>} : vector<16x32xf32>, vector<32x32xf32>, vector<16x32xf32> -> vector<16x32xf32>
    %c0_98 = arith.constant 0 : index
    %c0_99 = arith.constant 0 : index
    %486 = vector.load %arg13[%c0_98, %c0_99] : memref<1x32xf32, #tpu.memory_space<vmem>>, vector<1x32xf32>
    %487 = vector.broadcast %486 : vector<1x32xf32> to vector<16x32xf32>
    %488 = arith.addf %485, %487 : vector<16x32xf32>
    %c0_100 = arith.constant 0 : index
    %c0_101 = arith.constant 0 : index
    %489 = vector.load %arg14[%c0_100, %c0_101] : memref<32x32xf32, #tpu.memory_space<vmem>>, vector<32x32xf32>
    %cst_102 = arith.constant dense<0.000000e+00> : vector<16x32xf32>
    %490 = tpu.matmul %478, %489, %cst_102 {dimension_numbers = #tpu.dot_dimension_numbers<[1], [0], [0], [1], [0, 0, 1, 1], [], []>} : vector<16x32xf32>, vector<32x32xf32>, vector<16x32xf32> -> vector<16x32xf32>
    %c0_103 = arith.constant 0 : index
    %c0_104 = arith.constant 0 : index
    %491 = vector.load %arg15[%c0_103, %c0_104] : memref<32x32xf32, #tpu.memory_space<vmem>>, vector<32x32xf32>
    %cst_105 = arith.constant dense<0.000000e+00> : vector<16x32xf32>
    %492 = tpu.matmul %488, %491, %cst_105 {dimension_numbers = #tpu.dot_dimension_numbers<[1], [0], [0], [1], [0, 0, 1, 1], [], []>} : vector<16x32xf32>, vector<32x32xf32>, vector<16x32xf32> -> vector<16x32xf32>
    %493 = arith.addf %490, %492 : vector<16x32xf32>
    %c0_106 = arith.constant 0 : index
    %c0_107 = arith.constant 0 : index
    %494 = vector.load %arg16[%c0_106, %c0_107] : memref<1x32xf32, #tpu.memory_space<vmem>>, vector<1x32xf32>
    %495 = vector.broadcast %494 : vector<1x32xf32> to vector<16x32xf32>
    %496 = arith.addf %493, %495 : vector<16x32xf32>
    %c0_108 = arith.constant 0 : index
    %c0_109 = arith.constant 0 : index
    %497 = vector.load %arg17[%c0_108, %c0_109] : memref<32x32xf32, #tpu.memory_space<vmem>>, vector<32x32xf32>
    %cst_110 = arith.constant dense<0.000000e+00> : vector<16x32xf32>
    %498 = tpu.matmul %496, %497, %cst_110 {dimension_numbers = #tpu.dot_dimension_numbers<[1], [0], [0], [1], [0, 0, 1, 1], [], []>} : vector<16x32xf32>, vector<32x32xf32>, vector<16x32xf32> -> vector<16x32xf32>
    %c0_111 = arith.constant 0 : index
    %c0_112 = arith.constant 0 : index
    %499 = vector.load %arg18[%c0_111, %c0_112] : memref<1x32xf32, #tpu.memory_space<vmem>>, vector<1x32xf32>
    %500 = vector.broadcast %499 : vector<1x32xf32> to vector<16x32xf32>
    %501 = arith.addf %498, %500 : vector<16x32xf32>
    %502 = vector.extract_strided_slice %501 {offsets = [0, 0], sizes = [1, 32], strides = [1, 1]} : vector<16x32xf32> to vector<1x32xf32>
    %503 = vector.extract_strided_slice %501 {offsets = [2, 0], sizes = [1, 32], strides = [1, 1]} : vector<16x32xf32> to vector<1x32xf32>
    %504 = vector.extract_strided_slice %501 {offsets = [4, 0], sizes = [1, 32], strides = [1, 1]} : vector<16x32xf32> to vector<1x32xf32>
    %505 = vector.extract_strided_slice %501 {offsets = [6, 0], sizes = [1, 32], strides = [1, 1]} : vector<16x32xf32> to vector<1x32xf32>
    %506 = vector.extract_strided_slice %501 {offsets = [8, 0], sizes = [1, 32], strides = [1, 1]} : vector<16x32xf32> to vector<1x32xf32>
    %507 = vector.extract_strided_slice %501 {offsets = [10, 0], sizes = [1, 32], strides = [1, 1]} : vector<16x32xf32> to vector<1x32xf32>
    %508 = vector.extract_strided_slice %501 {offsets = [12, 0], sizes = [1, 32], strides = [1, 1]} : vector<16x32xf32> to vector<1x32xf32>
    %509 = vector.extract_strided_slice %501 {offsets = [14, 0], sizes = [1, 32], strides = [1, 1]} : vector<16x32xf32> to vector<1x32xf32>
    %510 = tpu.concatenate %502, %503, %504, %505, %506, %507, %508, %509 in 0 : vector<1x32xf32>, vector<1x32xf32>, vector<1x32xf32>, vector<1x32xf32>, vector<1x32xf32>, vector<1x32xf32>, vector<1x32xf32>, vector<1x32xf32> -> vector<8x32xf32>
    %c0_113 = arith.constant 0 : index
    %c0_114 = arith.constant 0 : index
    %c0_115 = arith.constant 0 : index
    %511 = vector.load %arg19[%c0_113, %c0_114, %c0_115] : memref<2x8x32xf32, #tpu.memory_space<vmem>>, vector<1x8x32xf32>
    %512 = vector.shape_cast %511 : vector<1x8x32xf32> to vector<8x32xf32>
    %513 = vector.shape_cast %510 : vector<8x32xf32> to vector<1x8x32xf32>
    tpu.vector_store %arg19[%c0_113, %c0_114, %c0_115], %513 {strides = array<i32>} : memref<2x8x32xf32, #tpu.memory_space<vmem>>, vector<1x8x32xf32>,
    %514 = vector.extract_strided_slice %501 {offsets = [1, 0], sizes = [1, 32], strides = [1, 1]} : vector<16x32xf32> to vector<1x32xf32>
    %515 = vector.extract_strided_slice %501 {offsets = [3, 0], sizes = [1, 32], strides = [1, 1]} : vector<16x32xf32> to vector<1x32xf32>
    %516 = vector.extract_strided_slice %501 {offsets = [5, 0], sizes = [1, 32], strides = [1, 1]} : vector<16x32xf32> to vector<1x32xf32>
    %517 = vector.extract_strided_slice %501 {offsets = [7, 0], sizes = [1, 32], strides = [1, 1]} : vector<16x32xf32> to vector<1x32xf32>
    %518 = vector.extract_strided_slice %501 {offsets = [9, 0], sizes = [1, 32], strides = [1, 1]} : vector<16x32xf32> to vector<1x32xf32>
    %519 = vector.extract_strided_slice %501 {offsets = [11, 0], sizes = [1, 32], strides = [1, 1]} : vector<16x32xf32> to vector<1x32xf32>
    %520 = vector.extract_strided_slice %501 {offsets = [13, 0], sizes = [1, 32], strides = [1, 1]} : vector<16x32xf32> to vector<1x32xf32>
    %521 = vector.extract_strided_slice %501 {offsets = [15, 0], sizes = [1, 32], strides = [1, 1]} : vector<16x32xf32> to vector<1x32xf32>
    %522 = tpu.concatenate %514, %515, %516, %517, %518, %519, %520, %521 in 0 : vector<1x32xf32>, vector<1x32xf32>, vector<1x32xf32>, vector<1x32xf32>, vector<1x32xf32>, vector<1x32xf32>, vector<1x32xf32>, vector<1x32xf32> -> vector<8x32xf32>
    %c1 = arith.constant 1 : index
    %c0_116 = arith.constant 0 : index
    %c0_117 = arith.constant 0 : index
    %523 = vector.load %arg19[%c1, %c0_116, %c0_117] : memref<2x8x32xf32, #tpu.memory_space<vmem>>, vector<1x8x32xf32>
    %524 = vector.shape_cast %523 : vector<1x8x32xf32> to vector<8x32xf32>
    %525 = vector.shape_cast %522 : vector<8x32xf32> to vector<1x8x32xf32>
    tpu.vector_store %arg19[%c1, %c0_116, %c0_117], %525 {strides = array<i32>} : memref<2x8x32xf32, #tpu.memory_space<vmem>>, vector<1x8x32xf32>,
    return
  }
}

</mosaic_0001>

<llo_original>
// kernel: tweet_model_forward.1
$region0: #{tweet_model_forward.1}
  #allocation0 [shape = 'u32[]', space=smem, size = 0x4, offset = 0x4, fixed_abs, tag = 'smem constant byte address 0x4 - core index']
  #allocation1 [shape = 'u32[144,128]{1,0:T(1,128)}', space=vmem, size = 0x12000, scoped, tag = 'internal scratch']
  %s0 = inlined_call_operand.vmem [shape: s32[16,1], index: 0, kind: input, shape index: {}]
  %s1 = inlined_call_operand.vmem [shape: f32[32,16], index: 1, kind: input, shape index: {}]
  %s2 = inlined_call_operand.hbm [shape: f32[16,32], index: 2, kind: input, shape index: {}]
  %s3 = inlined_call_operand.vmem [shape: f32[1,32], index: 3, kind: input, shape index: {}]
  %s4 = inlined_call_operand.vmem [shape: f32[32,128], index: 4, kind: input, shape index: {}]
  %s5 = inlined_call_operand.vmem [shape: f32[32,128], index: 5, kind: input, shape index: {}]
  %s6 = inlined_call_operand.hbm [shape: f32[1,128], index: 6, kind: input, shape index: {}]
  %s7 = inlined_call_operand.vmem [shape: f32[32,128], index: 7, kind: input, shape index: {}]
  %s8 = inlined_call_operand.vmem [shape: f32[32,128], index: 8, kind: input, shape index: {}]
  %s9 = inlined_call_operand.hbm [shape: f32[1,128], index: 9, kind: input, shape index: {}]
  %s10 = inlined_call_operand.vmem [shape: f32[32,32], index: 10, kind: input, shape index: {}]
  %s11 = inlined_call_operand.hbm [shape: f32[1,32], index: 11, kind: input, shape index: {}]
  %s12 = inlined_call_operand.hbm [shape: f32[32,32], index: 12, kind: input, shape index: {}]
  %s13 = inlined_call_operand.hbm [shape: f32[1,32], index: 13, kind: input, shape index: {}]
  %s14 = inlined_call_operand.hbm [shape: f32[32,32], index: 14, kind: input, shape index: {}]
  %s15 = inlined_call_operand.hbm [shape: f32[32,32], index: 15, kind: input, shape index: {}]
  %s16 = inlined_call_operand.hbm [shape: f32[1,32], index: 16, kind: input, shape index: {}]
  %s17 = inlined_call_operand.hbm [shape: f32[32,32], index: 17, kind: input, shape index: {}]
  %s18 = inlined_call_operand.hbm [shape: f32[1,32], index: 18, kind: input, shape index: {}]
  %s19 = inlined_call_operand.hbm [shape: f32[2,8,32], index: 19, kind: output, shape index: {}]
  %s20 = sld [smem:[#allocation0]]
  $region130: #{tweet_model_forward.1} parent=0
    _
  %s22 = ssub.s32 1, %s20
  %s23 = scalar_select 0, %s22, %s20
  $region1: #{tweet_model_forward.1} parent=0
    #allocation2 [shape = 'u8[8192]{0}', space=vmem, size = 0x2000, scoped, tag = 'input window, operand 2, single buffered']
    #allocation3 [shape = 's32[1]{0}', space=sflag, size = 0x4, scoped, tag = 'scoped memory for tweet_model_forward.1']
    #allocation4 [shape = 's32[1]{0}', space=sflag, size = 0x4, scoped, tag = 'scoped memory for tweet_model_forward.1']
    #allocation5 [shape = 'u8[512]{0}', space=vmem, size = 0x400, scoped, tag = 'input window, operand 6, single buffered']
    #allocation6 [shape = 's32[1]{0}', space=sflag, size = 0x4, scoped, tag = 'scoped memory for tweet_model_forward.1']
    #allocation7 [shape = 'u8[512]{0}', space=vmem, size = 0x400, scoped, tag = 'input window, operand 9, single buffered']
    #allocation8 [shape = 'u8[512]{0}', space=vmem, size = 0x400, scoped, tag = 'input window, operand 11, single buffered']
    #allocation9 [shape = 's32[1]{0}', space=sflag, size = 0x4, scoped, tag = 'scoped memory for tweet_model_forward.1']
    #allocation10 [shape = 'u8[16384]{0}', space=vmem, size = 0x4000, scoped, tag = 'input window, operand 12, single buffered']
    #allocation11 [shape = 'u8[512]{0}', space=vmem, size = 0x400, scoped, tag = 'input window, operand 13, single buffered']
    #allocation12 [shape = 's32[1]{0}', space=sflag, size = 0x4, scoped, tag = 'scoped memory for tweet_model_forward.1']
    #allocation13 [shape = 'u8[16384]{0}', space=vmem, size = 0x4000, scoped, tag = 'input window, operand 14, single buffered']
    #allocation14 [shape = 'u8[16384]{0}', space=vmem, size = 0x4000, scoped, tag = 'input window, operand 15, single buffered']
    #allocation15 [shape = 's32[1]{0}', space=sflag, size = 0x4, scoped, tag = 'scoped memory for tweet_model_forward.1']
    #allocation16 [shape = 'u8[512]{0}', space=vmem, size = 0x400, scoped, tag = 'input window, operand 16, single buffered']
    #allocation17 [shape = 'u8[16384]{0}', space=vmem, size = 0x4000, scoped, tag = 'input window, operand 17, single buffered']
    #allocation18 [shape = 's32[1]{0}', space=sflag, size = 0x4, scoped, tag = 'scoped memory for tweet_model_forward.1']
    #allocation19 [shape = 'u8[512]{0}', space=vmem, size = 0x400, scoped, tag = 'input window, operand 18, single buffered']
    #allocation20 [shape = 'u8[8192]{0}', space=vmem, size = 0x2000, scoped, tag = 'output window, operand 0, single buffered']
    %24 = vsyncpa [#allocation3], 0
    %25 = vsyncpa [#allocation6], 0
    %26 = vsyncpa [#allocation9], 0
    %27 = vsyncpa [#allocation12], 0
    %28 = vsyncpa [#allocation15], 0
    %29 = vsyncpa [#allocation18], 0
    %30 = vsyncpa [#allocation4], 0
    // Predicated region
    $region2: #{tweet_model_forward.1} parent=1 // pred_check
      _
    $region3: #{tweet_model_forward.1} parent=1 // pred_check_branch
      %32 = sbr.rel (0) target = $region5
    $region4: #{tweet_model_forward.1} parent=1 // pred_region
      _
    $region5: #{tweet_model_forward.1} parent=1 // pred_fallthru
      _
    // Predicated region
    $region6: #{tweet_model_forward.1} parent=1 // pred_check
      _
    $region7: #{tweet_model_forward.1} parent=1 // pred_check_branch
      %34 = sbr.rel (0) target = $region9
    $region8: #{tweet_model_forward.1} parent=1 // pred_region
      _
    $region9: #{tweet_model_forward.1} parent=1 // pred_fallthru
      _
    // Predicated region
    $region10: #{tweet_model_forward.1} parent=1 // pred_check
      _
    $region11: #{tweet_model_forward.1} parent=1 // pred_check_branch
      %36 = sbr.rel (0) target = $region13
    $region12: #{tweet_model_forward.1} parent=1 // pred_region
      %s38 = ssub.s32 256, 256
      %39 = vsyncadd [#allocation3], %s38
      %s40 = sshll.u32 [#allocation2], 4
      %s41 = int_to_ptr.vmem [resolvable:$true] %s40
      %46 = dma.hbm_to_vmem [thread:$0]  %s2, 256, %s41, [#allocation3], 128, 128, 8
    $region13: #{tweet_model_forward.1} parent=1 // pred_fallthru
      _
    // Predicated region
    $region14: #{tweet_model_forward.1} parent=1 // pred_check
      _
    $region15: #{tweet_model_forward.1} parent=1 // pred_check_branch
      %48 = sbr.rel (0) target = $region17
    $region16: #{tweet_model_forward.1} parent=1 // pred_region
      _
    $region17: #{tweet_model_forward.1} parent=1 // pred_fallthru
      _
    // Predicated region
    $region18: #{tweet_model_forward.1} parent=1 // pred_check
      _
    $region19: #{tweet_model_forward.1} parent=1 // pred_check_branch
      %50 = sbr.rel (0) target = $region21
    $region20: #{tweet_model_forward.1} parent=1 // pred_region
      _
    $region21: #{tweet_model_forward.1} parent=1 // pred_fallthru
      _
    // Predicated region
    $region22: #{tweet_model_forward.1} parent=1 // pred_check
      _
    $region23: #{tweet_model_forward.1} parent=1 // pred_check_branch
      %52 = sbr.rel (0) target = $region25
    $region24: #{tweet_model_forward.1} parent=1 // pred_region
      _
    $region25: #{tweet_model_forward.1} parent=1 // pred_fallthru
      _
    // Predicated region
    $region26: #{tweet_model_forward.1} parent=1 // pred_check
      _
    $region27: #{tweet_model_forward.1} parent=1 // pred_check_branch
      %54 = sbr.rel (0) target = $region29
    $region28: #{tweet_model_forward.1} parent=1 // pred_region
      %s56 = ssub.s32 16, 16
      %57 = vsyncadd [#allocation6], %s56
      %s59 = sshll.u32 [#allocation5], 4
      %s60 = int_to_ptr.vmem [resolvable:$true] %s59
      %62 = dma.hbm_to_vmem [thread:$0]  %s6, 16, %s60, [#allocation6]
    $region29: #{tweet_model_forward.1} parent=1 // pred_fallthru
      _
    // Predicated region
    $region30: #{tweet_model_forward.1} parent=1 // pred_check
      _
    $region31: #{tweet_model_forward.1} parent=1 // pred_check_branch
      %64 = sbr.rel (0) target = $region33
    $region32: #{tweet_model_forward.1} parent=1 // pred_region
      _
    $region33: #{tweet_model_forward.1} parent=1 // pred_fallthru
      _
    // Predicated region
    $region34: #{tweet_model_forward.1} parent=1 // pred_check
      _
    $region35: #{tweet_model_forward.1} parent=1 // pred_check_branch
      %66 = sbr.rel (0) target = $region37
    $region36: #{tweet_model_forward.1} parent=1 // pred_region
      _
    $region37: #{tweet_model_forward.1} parent=1 // pred_fallthru
      _
    // Predicated region
    $region38: #{tweet_model_forward.1} parent=1 // pred_check
      _
    $region39: #{tweet_model_forward.1} parent=1 // pred_check_branch
      %68 = sbr.rel (0) target = $region41
    $region40: #{tweet_model_forward.1} parent=1 // pred_region
      %s70 = ssub.s32 16, 16
      %71 = vsyncadd [#allocation6], %s70
      %s73 = sshll.u32 [#allocation7], 4
      %s74 = int_to_ptr.vmem [resolvable:$true] %s73
      %76 = dma.hbm_to_vmem [thread:$0]  %s9, 16, %s74, [#allocation6]
    $region41: #{tweet_model_forward.1} parent=1 // pred_fallthru
      _
    // Predicated region
    $region42: #{tweet_model_forward.1} parent=1 // pred_check
      _
    $region43: #{tweet_model_forward.1} parent=1 // pred_check_branch
      %78 = sbr.rel (0) target = $region45
    $region44: #{tweet_model_forward.1} parent=1 // pred_region
      _
    $region45: #{tweet_model_forward.1} parent=1 // pred_fallthru
      _
    // Predicated region
    $region46: #{tweet_model_forward.1} parent=1 // pred_check
      _
    $region47: #{tweet_model_forward.1} parent=1 // pred_check_branch
      %80 = sbr.rel (0) target = $region49
    $region48: #{tweet_model_forward.1} parent=1 // pred_region
      %s82 = ssub.s32 16, 16
      %83 = vsyncadd [#allocation9], %s82
      %s85 = sshll.u32 [#allocation8], 4
      %s86 = int_to_ptr.vmem [resolvable:$true] %s85
      %88 = dma.hbm_to_vmem [thread:$0]  %s11, 16, %s86, [#allocation9]
    $region49: #{tweet_model_forward.1} parent=1 // pred_fallthru
      _
    // Predicated region
    $region50: #{tweet_model_forward.1} parent=1 // pred_check
      _
    $region51: #{tweet_model_forward.1} parent=1 // pred_check_branch
      %90 = sbr.rel (0) target = $region53
    $region52: #{tweet_model_forward.1} parent=1 // pred_region
      %s92 = ssub.s32 512, 512
      %93 = vsyncadd [#allocation9], %s92
      %s94 = sshll.u32 [#allocation10], 4
      %s95 = int_to_ptr.vmem [resolvable:$true] %s94
      %100 = dma.hbm_to_vmem [thread:$0]  %s12, 512, %s95, [#allocation9], 128, 128, 8
    $region53: #{tweet_model_forward.1} parent=1 // pred_fallthru
      _
    // Predicated region
    $region54: #{tweet_model_forward.1} parent=1 // pred_check
      _
    $region55: #{tweet_model_forward.1} parent=1 // pred_check_branch
      %102 = sbr.rel (0) target = $region57
    $region56: #{tweet_model_forward.1} parent=1 // pred_region
      %s104 = ssub.s32 16, 16
      %105 = vsyncadd [#allocation12], %s104
      %s107 = sshll.u32 [#allocation11], 4
      %s108 = int_to_ptr.vmem [resolvable:$true] %s107
      %110 = dma.hbm_to_vmem [thread:$0]  %s13, 16, %s108, [#allocation12]
    $region57: #{tweet_model_forward.1} parent=1 // pred_fallthru
      _
    // Predicated region
    $region58: #{tweet_model_forward.1} parent=1 // pred_check
      _
    $region59: #{tweet_model_forward.1} parent=1 // pred_check_branch
      %112 = sbr.rel (0) target = $region61
    $region60: #{tweet_model_forward.1} parent=1 // pred_region
      %s114 = ssub.s32 512, 512
      %115 = vsyncadd [#allocation12], %s114
      %s116 = sshll.u32 [#allocation13], 4
      %s117 = int_to_ptr.vmem [resolvable:$true] %s116
      %122 = dma.hbm_to_vmem [thread:$0]  %s14, 512, %s117, [#allocation12], 128, 128, 8
    $region61: #{tweet_model_forward.1} parent=1 // pred_fallthru
      _
    // Predicated region
    $region62: #{tweet_model_forward.1} parent=1 // pred_check
      _
    $region63: #{tweet_model_forward.1} parent=1 // pred_check_branch
      %124 = sbr.rel (0) target = $region65
    $region64: #{tweet_model_forward.1} parent=1 // pred_region
      %s126 = ssub.s32 512, 512
      %127 = vsyncadd [#allocation15], %s126
      %s128 = sshll.u32 [#allocation14], 4
      %s129 = int_to_ptr.vmem [resolvable:$true] %s128
      %134 = dma.hbm_to_vmem [thread:$0]  %s15, 512, %s129, [#allocation15], 128, 128, 8
    $region65: #{tweet_model_forward.1} parent=1 // pred_fallthru
      _
    // Predicated region
    $region66: #{tweet_model_forward.1} parent=1 // pred_check
      _
    $region67: #{tweet_model_forward.1} parent=1 // pred_check_branch
      %136 = sbr.rel (0) target = $region69
    $region68: #{tweet_model_forward.1} parent=1 // pred_region
      %s138 = ssub.s32 16, 16
      %139 = vsyncadd [#allocation15], %s138
      %s141 = sshll.u32 [#allocation16], 4
      %s142 = int_to_ptr.vmem [resolvable:$true] %s141
      %144 = dma.hbm_to_vmem [thread:$0]  %s16, 16, %s142, [#allocation15]
    $region69: #{tweet_model_forward.1} parent=1 // pred_fallthru
      _
    // Predicated region
    $region70: #{tweet_model_forward.1} parent=1 // pred_check
      _
    $region71: #{tweet_model_forward.1} parent=1 // pred_check_branch
      %146 = sbr.rel (0) target = $region73
    $region72: #{tweet_model_forward.1} parent=1 // pred_region
      %s148 = ssub.s32 512, 512
      %149 = vsyncadd [#allocation18], %s148
      %s150 = sshll.u32 [#allocation17], 4
      %s151 = int_to_ptr.vmem [resolvable:$true] %s150
      %156 = dma.hbm_to_vmem [thread:$0]  %s17, 512, %s151, [#allocation18], 128, 128, 8
    $region73: #{tweet_model_forward.1} parent=1 // pred_fallthru
      _
    // Predicated region
    $region74: #{tweet_model_forward.1} parent=1 // pred_check
      _
    $region75: #{tweet_model_forward.1} parent=1 // pred_check_branch
      %158 = sbr.rel (0) target = $region77
    $region76: #{tweet_model_forward.1} parent=1 // pred_region
      %s160 = ssub.s32 16, 16
      %161 = vsyncadd [#allocation18], %s160
      %s163 = sshll.u32 [#allocation19], 4
      %s164 = int_to_ptr.vmem [resolvable:$true] %s163
      %166 = dma.hbm_to_vmem [thread:$0]  %s18, 16, %s164, [#allocation18]
    $region77: #{tweet_model_forward.1} parent=1 // pred_fallthru
      _
    // Predicated region
    $region78: #{tweet_model_forward.1} parent=1 // pred_check
      _
    $region79: #{tweet_model_forward.1} parent=1 // pred_check_branch
      %168 = sbr.rel (0) target = $region81
    $region80: #{tweet_model_forward.1} parent=1 // pred_region
      %169 = dma.done [#allocation3], 256
    $region81: #{tweet_model_forward.1} parent=1 // pred_fallthru
      _
    // Predicated region
    $region82: #{tweet_model_forward.1} parent=1 // pred_check
      _
    $region83: #{tweet_model_forward.1} parent=1 // pred_check_branch
      %171 = sbr.rel (0) target = $region85
    $region84: #{tweet_model_forward.1} parent=1 // pred_region
      %172 = dma.done [#allocation6], 16
    $region85: #{tweet_model_forward.1} parent=1 // pred_fallthru
      _
    // Predicated region
    $region86: #{tweet_model_forward.1} parent=1 // pred_check
      _
    $region87: #{tweet_model_forward.1} parent=1 // pred_check_branch
      %174 = sbr.rel (0) target = $region89
    $region88: #{tweet_model_forward.1} parent=1 // pred_region
      %175 = dma.done [#allocation6], 16
    $region89: #{tweet_model_forward.1} parent=1 // pred_fallthru
      _
    // Predicated region
    $region90: #{tweet_model_forward.1} parent=1 // pred_check
      _
    $region91: #{tweet_model_forward.1} parent=1 // pred_check_branch
      %177 = sbr.rel (0) target = $region93
    $region92: #{tweet_model_forward.1} parent=1 // pred_region
      %178 = dma.done [#allocation9], 16
    $region93: #{tweet_model_forward.1} parent=1 // pred_fallthru
      _
    // Predicated region
    $region94: #{tweet_model_forward.1} parent=1 // pred_check
      _
    $region95: #{tweet_model_forward.1} parent=1 // pred_check_branch
      %180 = sbr.rel (0) target = $region97
    $region96: #{tweet_model_forward.1} parent=1 // pred_region
      %181 = dma.done [#allocation9], 512
    $region97: #{tweet_model_forward.1} parent=1 // pred_fallthru
      _
    // Predicated region
    $region98: #{tweet_model_forward.1} parent=1 // pred_check
      _
    $region99: #{tweet_model_forward.1} parent=1 // pred_check_branch
      %183 = sbr.rel (0) target = $region101
    $region100: #{tweet_model_forward.1} parent=1 // pred_region
      %184 = dma.done [#allocation12], 16
    $region101: #{tweet_model_forward.1} parent=1 // pred_fallthru
      _
    // Predicated region
    $region102: #{tweet_model_forward.1} parent=1 // pred_check
      _
    $region103: #{tweet_model_forward.1} parent=1 // pred_check_branch
      %186 = sbr.rel (0) target = $region105
    $region104: #{tweet_model_forward.1} parent=1 // pred_region
      %187 = dma.done [#allocation12], 512
    $region105: #{tweet_model_forward.1} parent=1 // pred_fallthru
      _
    // Predicated region
    $region106: #{tweet_model_forward.1} parent=1 // pred_check
      _
    $region107: #{tweet_model_forward.1} parent=1 // pred_check_branch
      %189 = sbr.rel (0) target = $region109
    $region108: #{tweet_model_forward.1} parent=1 // pred_region
      %190 = dma.done [#allocation15], 512
    $region109: #{tweet_model_forward.1} parent=1 // pred_fallthru
      _
    // Predicated region
    $region110: #{tweet_model_forward.1} parent=1 // pred_check
      _
    $region111: #{tweet_model_forward.1} parent=1 // pred_check_branch
      %192 = sbr.rel (0) target = $region113
    $region112: #{tweet_model_forward.1} parent=1 // pred_region
      %193 = dma.done [#allocation15], 16
    $region113: #{tweet_model_forward.1} parent=1 // pred_fallthru
      _
    // Predicated region
    $region114: #{tweet_model_forward.1} parent=1 // pred_check
      _
    $region115: #{tweet_model_forward.1} parent=1 // pred_check_branch
      %195 = sbr.rel (0) target = $region117
    $region116: #{tweet_model_forward.1} parent=1 // pred_region
      %196 = dma.done [#allocation18], 512
    $region117: #{tweet_model_forward.1} parent=1 // pred_fallthru
      _
    // Predicated region
    $region118: #{tweet_model_forward.1} parent=1 // pred_check
      _
    $region119: #{tweet_model_forward.1} parent=1 // pred_check_branch
      %198 = sbr.rel (0) target = $region121
    $region120: #{tweet_model_forward.1} parent=1 // pred_region
      %199 = dma.done [#allocation18], 16
    $region121: #{tweet_model_forward.1} parent=1 // pred_fallthru
      _
    %v200 = vld [vmem:[%s0] sm:$0xff]
    %v201 = vld [vmem:[%s0 + $0x8] sm:$0xff]
    %v202 = vlaneseq
    %v203 = vand.u32 %v202, 127
    %204 = vset.pattern.permute.xlu0 0
    %205 = vperm.xlu0 %204, %v200
    %v206 = vpop.permute.xlu0 %205
    %207 = vset.pattern.permute.xlu0 0
    %208 = vperm.xlu0 %207, %v201
    %v209 = vpop.permute.xlu0 %208
    %vm210 = vcmp.eq.s32.totalorder %v203, %v206
    %vm211 = vcmp.eq.s32.totalorder %v203, %v209
    %v212 = vsel %vm210, 1, 0
    %v213 = vsel %vm211, 1, 0
    %v214 = vcvt.s32.f32 %v212
    %v215 = vcvt.s32.f32 %v213
    %v216 = vld [vmem:[%s1] sm:$0xff]
    %v217 = vld [vmem:[%s1 + $0x8] sm:$0xff]
    %v218 = vld [vmem:[%s1 + $0x10] sm:$0xff]
    %v219 = vld [vmem:[%s1 + $0x18] sm:$0xff]
    %vm220 = vcmask 261120
    %v222 = vsel %vm220, %v214, 0
    %v225 = vsel %vm220, %v215, 0
    %227 = vmatprep.subr.mxu0 0.0
    %228 = vmatpush1.msra.mxu0 %v216
    %229 = vmatprep.subr.mxu0 0.0
    %230 = vmatpush1.msra.mxu0 %v217
    %231 = vmatprep.subr.mxu0 0.0
    %232 = vmatpush1.msra.mxu0 %v218
    %233 = vmatprep.subr.mxu0 0.0
    %234 = vmatpush1.msra.mxu0 %v219
    %235 = vmatprep.subr.mxu0 0.0
    %236 = vmatpush1.msra.mxu0 0.0
    %237 = vmatprep.subr.mxu0 0.0
    %238 = vmatpush1.msra.mxu0 0.0
    %239 = vmatprep.subr.mxu0 0.0
    %240 = vmatpush1.msra.mxu0 0.0
    %241 = vmatprep.subr.mxu0 0.0
    %242 = vmatpush1.msra.mxu0 0.0
    %243 = vmatprep.subr.mxu0 0.0
    %244 = vmatpush1.msra.mxu0 0.0
    %245 = vmatprep.subr.mxu0 0.0
    %246 = vmatpush1.msra.mxu0 0.0
    %247 = vmatprep.subr.mxu0 0.0
    %248 = vmatpush1.msra.mxu0 0.0
    %249 = vmatprep.subr.mxu0 0.0
    %250 = vmatpush1.msra.mxu0 0.0
    %251 = vmatprep.subr.mxu0 0.0
    %252 = vmatpush1.msra.mxu0 0.0
    %253 = vmatprep.subr.mxu0 0.0
    %254 = vmatpush1.msra.mxu0 0.0
    %255 = vmatprep.subr.mxu0 0.0
    %256 = vmatpush1.msra.mxu0 0.0
    %257 = vmatprep.subr.mxu0 0.0
    %258 = vmatpush1.msra.mxu0 0.0
    %259 = vmatprep.subr.mxu0 0.0
    %260 = vmatpush1.msra.mxu0 0.0
    %261 = vmatprep.subr.mxu0 0.0
    %262 = vmatpush1.msra.mxu0 0.0
    %263 = vmatprep.subr.mxu0 0.0
    %264 = vmatpush1.msra.mxu0 0.0
    %265 = vmatprep.subr.mxu0 0.0
    %266 = vmatpush1.msra.mxu0 0.0
    %267 = vmatprep.subr.mxu0 0.0
    %268 = vmatpush1.msra.mxu0 0.0
    %269 = vmatprep.subr.mxu0 0.0
    %270 = vmatpush1.msra.mxu0 0.0
    %271 = vmatprep.subr.mxu0 0.0
    %272 = vmatpush1.msra.mxu0 0.0
    %273 = vmatprep.subr.mxu0 0.0
    %274 = vmatpush1.msra.mxu0 0.0
    %275 = vmatprep.subr.mxu0 0.0
    %276 = vmatpush1.msra.mxu0 0.0
    %277 = vmatprep.subr.mxu0 0.0
    %278 = vmatpush1.msra.mxu0 0.0
    %279 = vmatprep.subr.mxu0 0.0
    %280 = vmatpush1.msra.mxu0 0.0
    %281 = vmatprep.subr.mxu0 0.0
    %282 = vmatpush1.msra.mxu0 0.0
    %283 = vmatprep.subr.mxu0 0.0
    %284 = vmatpush1.msra.mxu0 0.0
    %285 = vmatprep.subr.mxu0 0.0
    %286 = vmatpush1.msra.mxu0 0.0
    %287 = vmatprep.subr.mxu0 0.0
    %288 = vmatpush1.msra.mxu0 0.0
    %289 = vmatprep.subr.mxu0 0.0
    %290 = vmatpush1.msra.mxu0 0.0
    %291 = vmatprep.mubr.f32.mxu0 0.0
    %292 = vmatmul.mubr.f32.gmra.mrb[0].mxu0 %v222
    %v293 = vpop.f32.mrb[0].mxu0
    %v294 = vadd.f32 0.0, %v293
    %v295 = vpop.f32.mrb[0].mxu0
    %296 = vmatprep.mubr.f32.mxu0 0.0
    %297 = vmatmul.mubr.f32.gmra.mrb[0].mxu0 %v225
    %v298 = vpop.f32.mrb[0].mxu0
    %v299 = vadd.f32 0.0, %v298
    %v300 = vpop.f32.mrb[0].mxu0
    %301 = vdwg.mxu0
    %v302 = vld [vmem:[#allocation2] sm:$0xff]
    %v303 = vld [vmem:[#allocation2 + $0x8] sm:$0xff]
    %v304 = vld [vmem:[%s3] sm:$0x1]
    %v306 = vlaneseq
    %v307 = vshrl.u32 %v306, 7
    %v308 = vsub.s32 0, %v307
    %v309 = vrot.slane %v304, %v308
    %vm311 = vcmask 130048
    %v313 = vsel %vm311, %v294, 0
    %v316 = vsel %vm311, %v299, 0
    %318 = vmatprep.subr.mxu0 0.0
    %319 = vmatpush1.msra.mxu0 %v302
    %320 = vmatprep.subr.mxu0 0.0
    %321 = vmatpush1.msra.mxu0 %v303
    %322 = vmatprep.subr.mxu0 0.0
    %323 = vmatpush1.msra.mxu0 0.0
    %324 = vmatprep.subr.mxu0 0.0
    %325 = vmatpush1.msra.mxu0 0.0
    %326 = vmatprep.subr.mxu0 0.0
    %327 = vmatpush1.msra.mxu0 0.0
    %328 = vmatprep.subr.mxu0 0.0
    %329 = vmatpush1.msra.mxu0 0.0
    %330 = vmatprep.subr.mxu0 0.0
    %331 = vmatpush1.msra.mxu0 0.0
    %332 = vmatprep.subr.mxu0 0.0
    %333 = vmatpush1.msra.mxu0 0.0
    %334 = vmatprep.subr.mxu0 0.0
    %335 = vmatpush1.msra.mxu0 0.0
    %336 = vmatprep.subr.mxu0 0.0
    %337 = vmatpush1.msra.mxu0 0.0
    %338 = vmatprep.subr.mxu0 0.0
    %339 = vmatpush1.msra.mxu0 0.0
    %340 = vmatprep.subr.mxu0 0.0
    %341 = vmatpush1.msra.mxu0 0.0
    %342 = vmatprep.subr.mxu0 0.0
    %343 = vmatpush1.msra.mxu0 0.0
    %344 = vmatprep.subr.mxu0 0.0
    %345 = vmatpush1.msra.mxu0 0.0
    %346 = vmatprep.subr.mxu0 0.0
    %347 = vmatpush1.msra.mxu0 0.0
    %348 = vmatprep.subr.mxu0 0.0
    %349 = vmatpush1.msra.mxu0 0.0
    %350 = vmatprep.subr.mxu0 0.0
    %351 = vmatpush1.msra.mxu0 0.0
    %352 = vmatprep.subr.mxu0 0.0
    %353 = vmatpush1.msra.mxu0 0.0
    %354 = vmatprep.subr.mxu0 0.0
    %355 = vmatpush1.msra.mxu0 0.0
    %356 = vmatprep.subr.mxu0 0.0
    %357 = vmatpush1.msra.mxu0 0.0
    %358 = vmatprep.subr.mxu0 0.0
    %359 = vmatpush1.msra.mxu0 0.0
    %360 = vmatprep.subr.mxu0 0.0
    %361 = vmatpush1.msra.mxu0 0.0
    %362 = vmatprep.subr.mxu0 0.0
    %363 = vmatpush1.msra.mxu0 0.0
    %364 = vmatprep.subr.mxu0 0.0
    %365 = vmatpush1.msra.mxu0 0.0
    %366 = vmatprep.subr.mxu0 0.0
    %367 = vmatpush1.msra.mxu0 0.0
    %368 = vmatprep.subr.mxu0 0.0
    %369 = vmatpush1.msra.mxu0 0.0
    %370 = vmatprep.subr.mxu0 0.0
    %371 = vmatpush1.msra.mxu0 0.0
    %372 = vmatprep.subr.mxu0 0.0
    %373 = vmatpush1.msra.mxu0 0.0
    %374 = vmatprep.subr.mxu0 0.0
    %375 = vmatpush1.msra.mxu0 0.0
    %376 = vmatprep.subr.mxu0 0.0
    %377 = vmatpush1.msra.mxu0 0.0
    %378 = vmatprep.subr.mxu0 0.0
    %379 = vmatpush1.msra.mxu0 0.0
    %380 = vmatprep.subr.mxu0 0.0
    %381 = vmatpush1.msra.mxu0 0.0
    %382 = vmatprep.mubr.f32.mxu0 0.0
    %383 = vmatmul.mubr.f32.gmra.mrb[0].mxu0 %v313
    %v384 = vpop.f32.mrb[0].mxu0
    %v385 = vadd.f32 %v309, %v384
    %v386 = vpop.f32.mrb[0].mxu0
    %387 = vmatprep.mubr.f32.mxu0 0.0
    %388 = vmatmul.mubr.f32.gmra.mrb[0].mxu0 %v316
    %v389 = vpop.f32.mrb[0].mxu0
    %v390 = vadd.f32 %v309, %v389
    %v391 = vpop.f32.mrb[0].mxu0
    %392 = vdwg.mxu0
    %v393 = vld [vmem:[%s4] sm:$0xff]
    %v394 = vld [vmem:[%s4 + $0x8] sm:$0xff]
    %v395 = vld [vmem:[%s4 + $0x10] sm:$0xff]
    %v396 = vld [vmem:[%s4 + $0x18] sm:$0xff]
    %v397 = vld [vmem:[%s5] sm:$0xff]
    %v398 = vld [vmem:[%s5 + $0x8] sm:$0xff]
    %v399 = vld [vmem:[%s5 + $0x10] sm:$0xff]
    %v400 = vld [vmem:[%s5 + $0x18] sm:$0xff]
    %v401 = vld [vmem:[#allocation5] sm:$0x1]
    %v403 = vlaneseq
    %v404 = vshrl.u32 %v403, 7
    %v405 = vsub.s32 0, %v404
    %v406 = vrot.slane %v401, %v405
    %v409 = vsel %vm220, %v385, 0
    %v412 = vsel %vm220, %v390, 0
    %414 = vmatprep.subr.mxu0 0.0
    %415 = vmatpush1.msra.mxu0 %v393
    %416 = vmatprep.subr.mxu0 0.0
    %417 = vmatpush1.msra.mxu0 %v394
    %418 = vmatprep.subr.mxu0 0.0
    %419 = vmatpush1.msra.mxu0 %v395
    %420 = vmatprep.subr.mxu0 0.0
    %421 = vmatpush1.msra.mxu0 %v396
    %422 = vmatprep.subr.mxu0 0.0
    %423 = vmatpush1.msra.mxu0 0.0
    %424 = vmatprep.subr.mxu0 0.0
    %425 = vmatpush1.msra.mxu0 0.0
    %426 = vmatprep.subr.mxu0 0.0
    %427 = vmatpush1.msra.mxu0 0.0
    %428 = vmatprep.subr.mxu0 0.0
    %429 = vmatpush1.msra.mxu0 0.0
    %430 = vmatprep.subr.mxu0 0.0
    %431 = vmatpush1.msra.mxu0 0.0
    %432 = vmatprep.subr.mxu0 0.0
    %433 = vmatpush1.msra.mxu0 0.0
    %434 = vmatprep.subr.mxu0 0.0
    %435 = vmatpush1.msra.mxu0 0.0
    %436 = vmatprep.subr.mxu0 0.0
    %437 = vmatpush1.msra.mxu0 0.0
    %438 = vmatprep.subr.mxu0 0.0
    %439 = vmatpush1.msra.mxu0 0.0
    %440 = vmatprep.subr.mxu0 0.0
    %441 = vmatpush1.msra.mxu0 0.0
    %442 = vmatprep.subr.mxu0 0.0
    %443 = vmatpush1.msra.mxu0 0.0
    %444 = vmatprep.subr.mxu0 0.0
    %445 = vmatpush1.msra.mxu0 0.0
    %446 = vmatprep.subr.mxu0 0.0
    %447 = vmatpush1.msra.mxu0 0.0
    %448 = vmatprep.subr.mxu0 0.0
    %449 = vmatpush1.msra.mxu0 0.0
    %450 = vmatprep.subr.mxu0 0.0
    %451 = vmatpush1.msra.mxu0 0.0
    %452 = vmatprep.subr.mxu0 0.0
    %453 = vmatpush1.msra.mxu0 0.0
    %454 = vmatprep.subr.mxu0 0.0
    %455 = vmatpush1.msra.mxu0 0.0
    %456 = vmatprep.subr.mxu0 0.0
    %457 = vmatpush1.msra.mxu0 0.0
    %458 = vmatprep.subr.mxu0 0.0
    %459 = vmatpush1.msra.mxu0 0.0
    %460 = vmatprep.subr.mxu0 0.0
    %461 = vmatpush1.msra.mxu0 0.0
    %462 = vmatprep.subr.mxu0 0.0
    %463 = vmatpush1.msra.mxu0 0.0
    %464 = vmatprep.subr.mxu0 0.0
    %465 = vmatpush1.msra.mxu0 0.0
    %466 = vmatprep.subr.mxu0 0.0
    %467 = vmatpush1.msra.mxu0 0.0
    %468 = vmatprep.subr.mxu0 0.0
    %469 = vmatpush1.msra.mxu0 0.0
    %470 = vmatprep.subr.mxu0 0.0
    %471 = vmatpush1.msra.mxu0 0.0
    %472 = vmatprep.subr.mxu0 0.0
    %473 = vmatpush1.msra.mxu0 0.0
    %474 = vmatprep.subr.mxu0 0.0
    %475 = vmatpush1.msra.mxu0 0.0
    %476 = vmatprep.subr.mxu0 0.0
    %477 = vmatpush1.msra.mxu0 0.0
    %478 = vmatprep.mubr.f32.mxu0 0.0
    %479 = vmatmul.mubr.f32.gmra.mrb[0].mxu0 %v409
    %v480 = vpop.f32.mrb[0].mxu0
    %v481 = vadd.f32 %v406, %v480
    %v482 = vpop.f32.mrb[0].mxu0
    %483 = vmatprep.mubr.f32.mxu0 0.0
    %484 = vmatmul.mubr.f32.gmra.mrb[0].mxu0 %v412
    %v485 = vpop.f32.mrb[0].mxu0
    %v486 = vadd.f32 %v406, %v485
    %v487 = vpop.f32.mrb[0].mxu0
    %488 = vdwg.mxu0
    %v490 = vsel %vm220, 0.0, 0
    %492 = vmatprep.subr.mxu0 0.0
    %493 = vmatpush1.msra.mxu0 %v397
    %494 = vmatprep.subr.mxu0 0.0
    %495 = vmatpush1.msra.mxu0 %v398
    %496 = vmatprep.subr.mxu0 0.0
    %497 = vmatpush1.msra.mxu0 %v399
    %498 = vmatprep.subr.mxu0 0.0
    %499 = vmatpush1.msra.mxu0 %v400
    %500 = vmatprep.subr.mxu0 0.0
    %501 = vmatpush1.msra.mxu0 0.0
    %502 = vmatprep.subr.mxu0 0.0
    %503 = vmatpush1.msra.mxu0 0.0
    %504 = vmatprep.subr.mxu0 0.0
    %505 = vmatpush1.msra.mxu0 0.0
    %506 = vmatprep.subr.mxu0 0.0
    %507 = vmatpush1.msra.mxu0 0.0
    %508 = vmatprep.subr.mxu0 0.0
    %509 = vmatpush1.msra.mxu0 0.0
    %510 = vmatprep.subr.mxu0 0.0
    %511 = vmatpush1.msra.mxu0 0.0
    %512 = vmatprep.subr.mxu0 0.0
    %513 = vmatpush1.msra.mxu0 0.0
    %514 = vmatprep.subr.mxu0 0.0
    %515 = vmatpush1.msra.mxu0 0.0
    %516 = vmatprep.subr.mxu0 0.0
    %517 = vmatpush1.msra.mxu0 0.0
    %518 = vmatprep.subr.mxu0 0.0
    %519 = vmatpush1.msra.mxu0 0.0
    %520 = vmatprep.subr.mxu0 0.0
    %521 = vmatpush1.msra.mxu0 0.0
    %522 = vmatprep.subr.mxu0 0.0
    %523 = vmatpush1.msra.mxu0 0.0
    %524 = vmatprep.subr.mxu0 0.0
    %525 = vmatpush1.msra.mxu0 0.0
    %526 = vmatprep.subr.mxu0 0.0
    %527 = vmatpush1.msra.mxu0 0.0
    %528 = vmatprep.subr.mxu0 0.0
    %529 = vmatpush1.msra.mxu0 0.0
    %530 = vmatprep.subr.mxu0 0.0
    %531 = vmatpush1.msra.mxu0 0.0
    %532 = vmatprep.subr.mxu0 0.0
    %533 = vmatpush1.msra.mxu0 0.0
    %534 = vmatprep.subr.mxu0 0.0
    %535 = vmatpush1.msra.mxu0 0.0
    %536 = vmatprep.subr.mxu0 0.0
    %537 = vmatpush1.msra.mxu0 0.0
    %538 = vmatprep.subr.mxu0 0.0
    %539 = vmatpush1.msra.mxu0 0.0
    %540 = vmatprep.subr.mxu0 0.0
    %541 = vmatpush1.msra.mxu0 0.0
    %542 = vmatprep.subr.mxu0 0.0
    %543 = vmatpush1.msra.mxu0 0.0
    %544 = vmatprep.subr.mxu0 0.0
    %545 = vmatpush1.msra.mxu0 0.0
    %546 = vmatprep.subr.mxu0 0.0
    %547 = vmatpush1.msra.mxu0 0.0
    %548 = vmatprep.subr.mxu0 0.0
    %549 = vmatpush1.msra.mxu0 0.0
    %550 = vmatprep.subr.mxu0 0.0
    %551 = vmatpush1.msra.mxu0 0.0
    %552 = vmatprep.subr.mxu0 0.0
    %553 = vmatpush1.msra.mxu0 0.0
    %554 = vmatprep.subr.mxu0 0.0
    %555 = vmatpush1.msra.mxu0 0.0
    %556 = vmatprep.mubr.f32.mxu0 0.0
    %557 = vmatmul.mubr.f32.gmra.mrb[0].mxu0 %v490
    %v558 = vpop.f32.mrb[0].mxu0
    %v559 = vadd.f32 0.0, %v558
    %v560 = vpop.f32.mrb[0].mxu0
    %561 = vdwg.mxu0
    %v562 = vadd.f32 %v481, %v559
    %v563 = vxor.u32 %v562, 2147483648
    %v564 = vmul.f32 %v563, 1.442695
    %v565 = vpow.pop %v564
    %v566 = vadd.f32 %v565, 1.0
    %v567 = vrcp.pop %v566
    %v568 = vmul.f32 1.0, %v567
    %v569 = vtanh.pop %v562
    %v570 = vmul.f32 %v568, 0.0
    %572 = vrot.lane.b32.xlu0 %v569, 64
    %v573 = vpop.permute.xlu0 %572
    %v575 = vmul.f32 %v568, %v573
    %577 = vrot.lane.b32.xlu0 %v575, 32
    %v578 = vpop.permute.xlu0 %577
    %v580 = vadd.f32 %v570, %v578
    %v581 = vtanh.pop %v580
    %583 = vrot.lane.b32.xlu0 %v581, 64
    %v584 = vpop.permute.xlu0 %583
    %v586 = vmul.f32 %v568, %v584
    %588 = vrot.lane.b32.xlu0 %v586, 32
    %v589 = vpop.permute.xlu0 %588
    %v590 = vsel %vm220, %v589, 0
    %592 = vmatprep.subr.mxu0 0.0
    %593 = vmatpush1.msra.mxu0 %v397
    %594 = vmatprep.subr.mxu0 0.0
    %595 = vmatpush1.msra.mxu0 %v398
    %596 = vmatprep.subr.mxu0 0.0
    %597 = vmatpush1.msra.mxu0 %v399
    %598 = vmatprep.subr.mxu0 0.0
    %599 = vmatpush1.msra.mxu0 %v400
    %600 = vmatprep.subr.mxu0 0.0
    %601 = vmatpush1.msra.mxu0 0.0
    %602 = vmatprep.subr.mxu0 0.0
    %603 = vmatpush1.msra.mxu0 0.0
    %604 = vmatprep.subr.mxu0 0.0
    %605 = vmatpush1.msra.mxu0 0.0
    %606 = vmatprep.subr.mxu0 0.0
    %607 = vmatpush1.msra.mxu0 0.0
    %608 = vmatprep.subr.mxu0 0.0
    %609 = vmatpush1.msra.mxu0 0.0
    %610 = vmatprep.subr.mxu0 0.0
    %611 = vmatpush1.msra.mxu0 0.0
    %612 = vmatprep.subr.mxu0 0.0
    %613 = vmatpush1.msra.mxu0 0.0
    %614 = vmatprep.subr.mxu0 0.0
    %615 = vmatpush1.msra.mxu0 0.0
    %616 = vmatprep.subr.mxu0 0.0
    %617 = vmatpush1.msra.mxu0 0.0
    %618 = vmatprep.subr.mxu0 0.0
    %619 = vmatpush1.msra.mxu0 0.0
    %620 = vmatprep.subr.mxu0 0.0
    %621 = vmatpush1.msra.mxu0 0.0
    %622 = vmatprep.subr.mxu0 0.0
    %623 = vmatpush1.msra.mxu0 0.0
    %624 = vmatprep.subr.mxu0 0.0
    %625 = vmatpush1.msra.mxu0 0.0
    %626 = vmatprep.subr.mxu0 0.0
    %627 = vmatpush1.msra.mxu0 0.0
    %628 = vmatprep.subr.mxu0 0.0
    %629 = vmatpush1.msra.mxu0 0.0
    %630 = vmatprep.subr.mxu0 0.0
    %631 = vmatpush1.msra.mxu0 0.0
    %632 = vmatprep.subr.mxu0 0.0
    %633 = vmatpush1.msra.mxu0 0.0
    %634 = vmatprep.subr.mxu0 0.0
    %635 = vmatpush1.msra.mxu0 0.0
    %636 = vmatprep.subr.mxu0 0.0
    %637 = vmatpush1.msra.mxu0 0.0
    %638 = vmatprep.subr.mxu0 0.0
    %639 = vmatpush1.msra.mxu0 0.0
    %640 = vmatprep.subr.mxu0 0.0
    %641 = vmatpush1.msra.mxu0 0.0
    %642 = vmatprep.subr.mxu0 0.0
    %643 = vmatpush1.msra.mxu0 0.0
    %644 = vmatprep.subr.mxu0 0.0
    %645 = vmatpush1.msra.mxu0 0.0
    %646 = vmatprep.subr.mxu0 0.0
    %647 = vmatpush1.msra.mxu0 0.0
    %648 = vmatprep.subr.mxu0 0.0
    %649 = vmatpush1.msra.mxu0 0.0
    %650 = vmatprep.subr.mxu0 0.0
    %651 = vmatpush1.msra.mxu0 0.0
    %652 = vmatprep.subr.mxu0 0.0
    %653 = vmatpush1.msra.mxu0 0.0
    %654 = vmatprep.subr.mxu0 0.0
    %655 = vmatpush1.msra.mxu0 0.0
    %656 = vmatprep.mubr.f32.mxu0 0.0
    %657 = vmatmul.mubr.f32.gmra.mrb[0].mxu0 %v590
    %v658 = vpop.f32.mrb[0].mxu0
    %v659 = vadd.f32 0.0, %v658
    %v660 = vpop.f32.mrb[0].mxu0
    %661 = vdwg.mxu0
    %v663 = vrot.slane %v659, 6
    %v665 = vadd.f32 %v481, %v663
    %v666 = vxor.u32 %v665, 2147483648
    %v667 = vmul.f32 %v666, 1.442695
    %v668 = vpow.pop %v667
    %v669 = vadd.f32 %v668, 1.0
    %v670 = vrcp.pop %v669
    %v671 = vmul.f32 1.0, %v670
    %v672 = vtanh.pop %v665
    %v674 = vrot.slane %v580, 6
    %v676 = vmul.f32 %v671, %v674
    %678 = vrot.lane.b32.xlu0 %v672, 64
    %v679 = vpop.permute.xlu0 %678
    %v681 = vmul.f32 %v671, %v679
    %683 = vrot.lane.b32.xlu0 %v681, 32
    %v684 = vpop.permute.xlu0 %683
    %v686 = vadd.f32 %v676, %v684
    %v687 = vtanh.pop %v686
    %689 = vrot.lane.b32.xlu0 %v687, 64
    %v690 = vpop.permute.xlu0 %689
    %v692 = vmul.f32 %v671, %v690
    %v694 = vrot.slane %v692, 2
    %695 = vrot.lane.b32.xlu0 %v694, 32
    %v696 = vpop.permute.xlu0 %695
    %v697 = vsel %vm220, %v696, 0
    %699 = vmatprep.subr.mxu0 0.0
    %700 = vmatpush1.msra.mxu0 %v397
    %701 = vmatprep.subr.mxu0 0.0
    %702 = vmatpush1.msra.mxu0 %v398
    %703 = vmatprep.subr.mxu0 0.0
    %704 = vmatpush1.msra.mxu0 %v399
    %705 = vmatprep.subr.mxu0 0.0
    %706 = vmatpush1.msra.mxu0 %v400
    %707 = vmatprep.subr.mxu0 0.0
    %708 = vmatpush1.msra.mxu0 0.0
    %709 = vmatprep.subr.mxu0 0.0
    %710 = vmatpush1.msra.mxu0 0.0
    %711 = vmatprep.subr.mxu0 0.0
    %712 = vmatpush1.msra.mxu0 0.0
    %713 = vmatprep.subr.mxu0 0.0
    %714 = vmatpush1.msra.mxu0 0.0
    %715 = vmatprep.subr.mxu0 0.0
    %716 = vmatpush1.msra.mxu0 0.0
    %717 = vmatprep.subr.mxu0 0.0
    %718 = vmatpush1.msra.mxu0 0.0
    %719 = vmatprep.subr.mxu0 0.0
    %720 = vmatpush1.msra.mxu0 0.0
    %721 = vmatprep.subr.mxu0 0.0
    %722 = vmatpush1.msra.mxu0 0.0
    %723 = vmatprep.subr.mxu0 0.0
    %724 = vmatpush1.msra.mxu0 0.0
    %725 = vmatprep.subr.mxu0 0.0
    %726 = vmatpush1.msra.mxu0 0.0
    %727 = vmatprep.subr.mxu0 0.0
    %728 = vmatpush1.msra.mxu0 0.0
    %729 = vmatprep.subr.mxu0 0.0
    %730 = vmatpush1.msra.mxu0 0.0
    %731 = vmatprep.subr.mxu0 0.0
    %732 = vmatpush1.msra.mxu0 0.0
    %733 = vmatprep.subr.mxu0 0.0
    %734 = vmatpush1.msra.mxu0 0.0
    %735 = vmatprep.subr.mxu0 0.0
    %736 = vmatpush1.msra.mxu0 0.0
    %737 = vmatprep.subr.mxu0 0.0
    %738 = vmatpush1.msra.mxu0 0.0
    %739 = vmatprep.subr.mxu0 0.0
    %740 = vmatpush1.msra.mxu0 0.0
    %741 = vmatprep.subr.mxu0 0.0
    %742 = vmatpush1.msra.mxu0 0.0
    %743 = vmatprep.subr.mxu0 0.0
    %744 = vmatpush1.msra.mxu0 0.0
    %745 = vmatprep.subr.mxu0 0.0
    %746 = vmatpush1.msra.mxu0 0.0
    %747 = vmatprep.subr.mxu0 0.0
    %748 = vmatpush1.msra.mxu0 0.0
    %749 = vmatprep.subr.mxu0 0.0
    %750 = vmatpush1.msra.mxu0 0.0
    %751 = vmatprep.subr.mxu0 0.0
    %752 = vmatpush1.msra.mxu0 0.0
    %753 = vmatprep.subr.mxu0 0.0
    %754 = vmatpush1.msra.mxu0 0.0
    %755 = vmatprep.subr.mxu0 0.0
    %756 = vmatpush1.msra.mxu0 0.0
    %757 = vmatprep.subr.mxu0 0.0
    %758 = vmatpush1.msra.mxu0 0.0
    %759 = vmatprep.subr.mxu0 0.0
    %760 = vmatpush1.msra.mxu0 0.0
    %761 = vmatprep.subr.mxu0 0.0
    %762 = vmatpush1.msra.mxu0 0.0
    %763 = vmatprep.mubr.f32.mxu0 0.0
    %764 = vmatmul.mubr.f32.gmra.mrb[0].mxu0 %v697
    %v765 = vpop.f32.mrb[0].mxu0
    %v766 = vadd.f32 0.0, %v765
    %v767 = vpop.f32.mrb[0].mxu0
    %768 = vdwg.mxu0
    %v770 = vrot.slane %v766, 4
    %v772 = vadd.f32 %v481, %v770
    %v773 = vxor.u32 %v772, 2147483648
    %v774 = vmul.f32 %v773, 1.442695
    %v775 = vpow.pop %v774
    %v776 = vadd.f32 %v775, 1.0
    %v777 = vrcp.pop %v776
    %v778 = vmul.f32 1.0, %v777
    %v779 = vtanh.pop %v772
    %v781 = vrot.slane %v686, 6
    %v783 = vmul.f32 %v778, %v781
    %785 = vrot.lane.b32.xlu0 %v779, 64
    %v786 = vpop.permute.xlu0 %785
    %v788 = vmul.f32 %v778, %v786
    %790 = vrot.lane.b32.xlu0 %v788, 32
    %v791 = vpop.permute.xlu0 %790
    %v793 = vadd.f32 %v783, %v791
    %v794 = vtanh.pop %v793
    %796 = vrot.lane.b32.xlu0 %v794, 64
    %v797 = vpop.permute.xlu0 %796
    %v799 = vmul.f32 %v778, %v797
    %v801 = vrot.slane %v799, 4
    %802 = vrot.lane.b32.xlu0 %v801, 32
    %v803 = vpop.permute.xlu0 %802
    %v804 = vsel %vm220, %v803, 0
    %806 = vmatprep.subr.mxu0 0.0
    %807 = vmatpush1.msra.mxu0 %v397
    %808 = vmatprep.subr.mxu0 0.0
    %809 = vmatpush1.msra.mxu0 %v398
    %810 = vmatprep.subr.mxu0 0.0
    %811 = vmatpush1.msra.mxu0 %v399
    %812 = vmatprep.subr.mxu0 0.0
    %813 = vmatpush1.msra.mxu0 %v400
    %814 = vmatprep.subr.mxu0 0.0
    %815 = vmatpush1.msra.mxu0 0.0
    %816 = vmatprep.subr.mxu0 0.0
    %817 = vmatpush1.msra.mxu0 0.0
    %818 = vmatprep.subr.mxu0 0.0
    %819 = vmatpush1.msra.mxu0 0.0
    %820 = vmatprep.subr.mxu0 0.0
    %821 = vmatpush1.msra.mxu0 0.0
    %822 = vmatprep.subr.mxu0 0.0
    %823 = vmatpush1.msra.mxu0 0.0
    %824 = vmatprep.subr.mxu0 0.0
    %825 = vmatpush1.msra.mxu0 0.0
    %826 = vmatprep.subr.mxu0 0.0
    %827 = vmatpush1.msra.mxu0 0.0
    %828 = vmatprep.subr.mxu0 0.0
    %829 = vmatpush1.msra.mxu0 0.0
    %830 = vmatprep.subr.mxu0 0.0
    %831 = vmatpush1.msra.mxu0 0.0
    %832 = vmatprep.subr.mxu0 0.0
    %833 = vmatpush1.msra.mxu0 0.0
    %834 = vmatprep.subr.mxu0 0.0
    %835 = vmatpush1.msra.mxu0 0.0
    %836 = vmatprep.subr.mxu0 0.0
    %837 = vmatpush1.msra.mxu0 0.0
    %838 = vmatprep.subr.mxu0 0.0
    %839 = vmatpush1.msra.mxu0 0.0
    %840 = vmatprep.subr.mxu0 0.0
    %841 = vmatpush1.msra.mxu0 0.0
    %842 = vmatprep.subr.mxu0 0.0
    %843 = vmatpush1.msra.mxu0 0.0
    %844 = vmatprep.subr.mxu0 0.0
    %845 = vmatpush1.msra.mxu0 0.0
    %846 = vmatprep.subr.mxu0 0.0
    %847 = vmatpush1.msra.mxu0 0.0
    %848 = vmatprep.subr.mxu0 0.0
    %849 = vmatpush1.msra.mxu0 0.0
    %850 = vmatprep.subr.mxu0 0.0
    %851 = vmatpush1.msra.mxu0 0.0
    %852 = vmatprep.subr.mxu0 0.0
    %853 = vmatpush1.msra.mxu0 0.0
    %854 = vmatprep.subr.mxu0 0.0
    %855 = vmatpush1.msra.mxu0 0.0
    %856 = vmatprep.subr.mxu0 0.0
    %857 = vmatpush1.msra.mxu0 0.0
    %858 = vmatprep.subr.mxu0 0.0
    %859 = vmatpush1.msra.mxu0 0.0
    %860 = vmatprep.subr.mxu0 0.0
    %861 = vmatpush1.msra.mxu0 0.0
    %862 = vmatprep.subr.mxu0 0.0
    %863 = vmatpush1.msra.mxu0 0.0
    %864 = vmatprep.subr.mxu0 0.0
    %865 = vmatpush1.msra.mxu0 0.0
    %866 = vmatprep.subr.mxu0 0.0
    %867 = vmatpush1.msra.mxu0 0.0
    %868 = vmatprep.subr.mxu0 0.0
    %869 = vmatpush1.msra.mxu0 0.0
    %870 = vmatprep.mubr.f32.mxu0 0.0
    %871 = vmatmul.mubr.f32.gmra.mrb[0].mxu0 %v804
    %v872 = vpop.f32.mrb[0].mxu0
    %v873 = vadd.f32 0.0, %v872
    %v874 = vpop.f32.mrb[0].mxu0
    %875 = vdwg.mxu0
    %v877 = vrot.slane %v873, 2
    %v879 = vadd.f32 %v481, %v877
    %v880 = vxor.u32 %v879, 2147483648
    %v881 = vmul.f32 %v880, 1.442695
    %v882 = vpow.pop %v881
    %v883 = vadd.f32 %v882, 1.0
    %v884 = vrcp.pop %v883
    %v885 = vmul.f32 1.0, %v884
    %v886 = vtanh.pop %v879
    %v888 = vrot.slane %v793, 6
    %v890 = vmul.f32 %v885, %v888
    %892 = vrot.lane.b32.xlu0 %v886, 64
    %v893 = vpop.permute.xlu0 %892
    %v895 = vmul.f32 %v885, %v893
    %897 = vrot.lane.b32.xlu0 %v895, 32
    %v898 = vpop.permute.xlu0 %897
    %v900 = vadd.f32 %v890, %v898
    %v901 = vtanh.pop %v900
    %903 = vrot.lane.b32.xlu0 %v901, 64
    %v904 = vpop.permute.xlu0 %903
    %v906 = vmul.f32 %v885, %v904
    %v908 = vrot.slane %v906, 6
    %909 = vrot.lane.b32.xlu0 %v908, 32
    %v910 = vpop.permute.xlu0 %909
    %v911 = vsel %vm220, %v910, 0
    %913 = vmatprep.subr.mxu0 0.0
    %914 = vmatpush1.msra.mxu0 %v397
    %915 = vmatprep.subr.mxu0 0.0
    %916 = vmatpush1.msra.mxu0 %v398
    %917 = vmatprep.subr.mxu0 0.0
    %918 = vmatpush1.msra.mxu0 %v399
    %919 = vmatprep.subr.mxu0 0.0
    %920 = vmatpush1.msra.mxu0 %v400
    %921 = vmatprep.subr.mxu0 0.0
    %922 = vmatpush1.msra.mxu0 0.0
    %923 = vmatprep.subr.mxu0 0.0
    %924 = vmatpush1.msra.mxu0 0.0
    %925 = vmatprep.subr.mxu0 0.0
    %926 = vmatpush1.msra.mxu0 0.0
    %927 = vmatprep.subr.mxu0 0.0
    %928 = vmatpush1.msra.mxu0 0.0
    %929 = vmatprep.subr.mxu0 0.0
    %930 = vmatpush1.msra.mxu0 0.0
    %931 = vmatprep.subr.mxu0 0.0
    %932 = vmatpush1.msra.mxu0 0.0
    %933 = vmatprep.subr.mxu0 0.0
    %934 = vmatpush1.msra.mxu0 0.0
    %935 = vmatprep.subr.mxu0 0.0
    %936 = vmatpush1.msra.mxu0 0.0
    %937 = vmatprep.subr.mxu0 0.0
    %938 = vmatpush1.msra.mxu0 0.0
    %939 = vmatprep.subr.mxu0 0.0
    %940 = vmatpush1.msra.mxu0 0.0
    %941 = vmatprep.subr.mxu0 0.0
    %942 = vmatpush1.msra.mxu0 0.0
    %943 = vmatprep.subr.mxu0 0.0
    %944 = vmatpush1.msra.mxu0 0.0
    %945 = vmatprep.subr.mxu0 0.0
    %946 = vmatpush1.msra.mxu0 0.0
    %947 = vmatprep.subr.mxu0 0.0
    %948 = vmatpush1.msra.mxu0 0.0
    %949 = vmatprep.subr.mxu0 0.0
    %950 = vmatpush1.msra.mxu0 0.0
    %951 = vmatprep.subr.mxu0 0.0
    %952 = vmatpush1.msra.mxu0 0.0
    %953 = vmatprep.subr.mxu0 0.0
    %954 = vmatpush1.msra.mxu0 0.0
    %955 = vmatprep.subr.mxu0 0.0
    %956 = vmatpush1.msra.mxu0 0.0
    %957 = vmatprep.subr.mxu0 0.0
    %958 = vmatpush1.msra.mxu0 0.0
    %959 = vmatprep.subr.mxu0 0.0
    %960 = vmatpush1.msra.mxu0 0.0
    %961 = vmatprep.subr.mxu0 0.0
    %962 = vmatpush1.msra.mxu0 0.0
    %963 = vmatprep.subr.mxu0 0.0
    %964 = vmatpush1.msra.mxu0 0.0
    %965 = vmatprep.subr.mxu0 0.0
    %966 = vmatpush1.msra.mxu0 0.0
    %967 = vmatprep.subr.mxu0 0.0
    %968 = vmatpush1.msra.mxu0 0.0
    %969 = vmatprep.subr.mxu0 0.0
    %970 = vmatpush1.msra.mxu0 0.0
    %971 = vmatprep.subr.mxu0 0.0
    %972 = vmatpush1.msra.mxu0 0.0
    %973 = vmatprep.subr.mxu0 0.0
    %974 = vmatpush1.msra.mxu0 0.0
    %975 = vmatprep.subr.mxu0 0.0
    %976 = vmatpush1.msra.mxu0 0.0
    %977 = vmatprep.mubr.f32.mxu0 0.0
    %978 = vmatmul.mubr.f32.gmra.mrb[0].mxu0 %v911
    %v979 = vpop.f32.mrb[0].mxu0
    %v980 = vadd.f32 0.0, %v979
    %v981 = vpop.f32.mrb[0].mxu0
    %982 = vdwg.mxu0
    %v983 = vadd.f32 %v486, %v980
    %v984 = vxor.u32 %v983, 2147483648
    %v985 = vmul.f32 %v984, 1.442695
    %v986 = vpow.pop %v985
    %v987 = vadd.f32 %v986, 1.0
    %v988 = vrcp.pop %v987
    %v989 = vmul.f32 1.0, %v988
    %v990 = vtanh.pop %v983
    %v992 = vrot.slane %v900, 6
    %v994 = vmul.f32 %v989, %v992
    %996 = vrot.lane.b32.xlu0 %v990, 64
    %v997 = vpop.permute.xlu0 %996
    %v999 = vmul.f32 %v989, %v997
    %1001 = vrot.lane.b32.xlu0 %v999, 32
    %v1002 = vpop.permute.xlu0 %1001
    %v1004 = vadd.f32 %v994, %v1002
    %v1005 = vtanh.pop %v1004
    %1007 = vrot.lane.b32.xlu0 %v1005, 64
    %v1008 = vpop.permute.xlu0 %1007
    %v1010 = vmul.f32 %v989, %v1008
    %1012 = vrot.lane.b32.xlu0 %v1010, 32
    %v1013 = vpop.permute.xlu0 %1012
    %v1014 = vsel %vm220, %v1013, 0
    %1016 = vmatprep.subr.mxu0 0.0
    %1017 = vmatpush1.msra.mxu0 %v397
    %1018 = vmatprep.subr.mxu0 0.0
    %1019 = vmatpush1.msra.mxu0 %v398
    %1020 = vmatprep.subr.mxu0 0.0
    %1021 = vmatpush1.msra.mxu0 %v399
    %1022 = vmatprep.subr.mxu0 0.0
    %1023 = vmatpush1.msra.mxu0 %v400
    %1024 = vmatprep.subr.mxu0 0.0
    %1025 = vmatpush1.msra.mxu0 0.0
    %1026 = vmatprep.subr.mxu0 0.0
    %1027 = vmatpush1.msra.mxu0 0.0
    %1028 = vmatprep.subr.mxu0 0.0
    %1029 = vmatpush1.msra.mxu0 0.0
    %1030 = vmatprep.subr.mxu0 0.0
    %1031 = vmatpush1.msra.mxu0 0.0
    %1032 = vmatprep.subr.mxu0 0.0
    %1033 = vmatpush1.msra.mxu0 0.0
    %1034 = vmatprep.subr.mxu0 0.0
    %1035 = vmatpush1.msra.mxu0 0.0
    %1036 = vmatprep.subr.mxu0 0.0
    %1037 = vmatpush1.msra.mxu0 0.0
    %1038 = vmatprep.subr.mxu0 0.0
    %1039 = vmatpush1.msra.mxu0 0.0
    %1040 = vmatprep.subr.mxu0 0.0
    %1041 = vmatpush1.msra.mxu0 0.0
    %1042 = vmatprep.subr.mxu0 0.0
    %1043 = vmatpush1.msra.mxu0 0.0
    %1044 = vmatprep.subr.mxu0 0.0
    %1045 = vmatpush1.msra.mxu0 0.0
    %1046 = vmatprep.subr.mxu0 0.0
    %1047 = vmatpush1.msra.mxu0 0.0
    %1048 = vmatprep.subr.mxu0 0.0
    %1049 = vmatpush1.msra.mxu0 0.0
    %1050 = vmatprep.subr.mxu0 0.0
    %1051 = vmatpush1.msra.mxu0 0.0
    %1052 = vmatprep.subr.mxu0 0.0
    %1053 = vmatpush1.msra.mxu0 0.0
    %1054 = vmatprep.subr.mxu0 0.0
    %1055 = vmatpush1.msra.mxu0 0.0
    %1056 = vmatprep.subr.mxu0 0.0
    %1057 = vmatpush1.msra.mxu0 0.0
    %1058 = vmatprep.subr.mxu0 0.0
    %1059 = vmatpush1.msra.mxu0 0.0
    %1060 = vmatprep.subr.mxu0 0.0
    %1061 = vmatpush1.msra.mxu0 0.0
    %1062 = vmatprep.subr.mxu0 0.0
    %1063 = vmatpush1.msra.mxu0 0.0
    %1064 = vmatprep.subr.mxu0 0.0
    %1065 = vmatpush1.msra.mxu0 0.0
    %1066 = vmatprep.subr.mxu0 0.0
    %1067 = vmatpush1.msra.mxu0 0.0
    %1068 = vmatprep.subr.mxu0 0.0
    %1069 = vmatpush1.msra.mxu0 0.0
    %1070 = vmatprep.subr.mxu0 0.0
    %1071 = vmatpush1.msra.mxu0 0.0
    %1072 = vmatprep.subr.mxu0 0.0
    %1073 = vmatpush1.msra.mxu0 0.0
    %1074 = vmatprep.subr.mxu0 0.0
    %1075 = vmatpush1.msra.mxu0 0.0
    %1076 = vmatprep.subr.mxu0 0.0
    %1077 = vmatpush1.msra.mxu0 0.0
    %1078 = vmatprep.subr.mxu0 0.0
    %1079 = vmatpush1.msra.mxu0 0.0
    %1080 = vmatprep.mubr.f32.mxu0 0.0
    %1081 = vmatmul.mubr.f32.gmra.mrb[0].mxu0 %v1014
    %v1082 = vpop.f32.mrb[0].mxu0
    %v1083 = vadd.f32 0.0, %v1082
    %v1084 = vpop.f32.mrb[0].mxu0
    %1085 = vdwg.mxu0
    %v1087 = vrot.slane %v1083, 6
    %v1089 = vadd.f32 %v486, %v1087
    %v1090 = vxor.u32 %v1089, 2147483648
    %v1091 = vmul.f32 %v1090, 1.442695
    %v1092 = vpow.pop %v1091
    %v1093 = vadd.f32 %v1092, 1.0
    %v1094 = vrcp.pop %v1093
    %v1095 = vmul.f32 1.0, %v1094
    %v1096 = vtanh.pop %v1089
    %v1098 = vrot.slane %v1004, 6
    %v1100 = vmul.f32 %v1095, %v1098
    %1102 = vrot.lane.b32.xlu0 %v1096, 64
    %v1103 = vpop.permute.xlu0 %1102
    %v1105 = vmul.f32 %v1095, %v1103
    %1107 = vrot.lane.b32.xlu0 %v1105, 32
    %v1108 = vpop.permute.xlu0 %1107
    %v1110 = vadd.f32 %v1100, %v1108
    %v1111 = vtanh.pop %v1110
    %1113 = vrot.lane.b32.xlu0 %v1111, 64
    %v1114 = vpop.permute.xlu0 %1113
    %v1116 = vmul.f32 %v1095, %v1114
    %v1118 = vrot.slane %v1116, 2
    %1119 = vrot.lane.b32.xlu0 %v1118, 32
    %v1120 = vpop.permute.xlu0 %1119
    %v1121 = vsel %vm220, %v1120, 0
    %1123 = vmatprep.subr.mxu0 0.0
    %1124 = vmatpush1.msra.mxu0 %v397
    %1125 = vmatprep.subr.mxu0 0.0
    %1126 = vmatpush1.msra.mxu0 %v398
    %1127 = vmatprep.subr.mxu0 0.0
    %1128 = vmatpush1.msra.mxu0 %v399
    %1129 = vmatprep.subr.mxu0 0.0
    %1130 = vmatpush1.msra.mxu0 %v400
    %1131 = vmatprep.subr.mxu0 0.0
    %1132 = vmatpush1.msra.mxu0 0.0
    %1133 = vmatprep.subr.mxu0 0.0
    %1134 = vmatpush1.msra.mxu0 0.0
    %1135 = vmatprep.subr.mxu0 0.0
    %1136 = vmatpush1.msra.mxu0 0.0
    %1137 = vmatprep.subr.mxu0 0.0
    %1138 = vmatpush1.msra.mxu0 0.0
    %1139 = vmatprep.subr.mxu0 0.0
    %1140 = vmatpush1.msra.mxu0 0.0
    %1141 = vmatprep.subr.mxu0 0.0
    %1142 = vmatpush1.msra.mxu0 0.0
    %1143 = vmatprep.subr.mxu0 0.0
    %1144 = vmatpush1.msra.mxu0 0.0
    %1145 = vmatprep.subr.mxu0 0.0
    %1146 = vmatpush1.msra.mxu0 0.0
    %1147 = vmatprep.subr.mxu0 0.0
    %1148 = vmatpush1.msra.mxu0 0.0
    %1149 = vmatprep.subr.mxu0 0.0
    %1150 = vmatpush1.msra.mxu0 0.0
    %1151 = vmatprep.subr.mxu0 0.0
    %1152 = vmatpush1.msra.mxu0 0.0
    %1153 = vmatprep.subr.mxu0 0.0
    %1154 = vmatpush1.msra.mxu0 0.0
    %1155 = vmatprep.subr.mxu0 0.0
    %1156 = vmatpush1.msra.mxu0 0.0
    %1157 = vmatprep.subr.mxu0 0.0
    %1158 = vmatpush1.msra.mxu0 0.0
    %1159 = vmatprep.subr.mxu0 0.0
    %1160 = vmatpush1.msra.mxu0 0.0
    %1161 = vmatprep.subr.mxu0 0.0
    %1162 = vmatpush1.msra.mxu0 0.0
    %1163 = vmatprep.subr.mxu0 0.0
    %1164 = vmatpush1.msra.mxu0 0.0
    %1165 = vmatprep.subr.mxu0 0.0
    %1166 = vmatpush1.msra.mxu0 0.0
    %1167 = vmatprep.subr.mxu0 0.0
    %1168 = vmatpush1.msra.mxu0 0.0
    %1169 = vmatprep.subr.mxu0 0.0
    %1170 = vmatpush1.msra.mxu0 0.0
    %1171 = vmatprep.subr.mxu0 0.0
    %1172 = vmatpush1.msra.mxu0 0.0
    %1173 = vmatprep.subr.mxu0 0.0
    %1174 = vmatpush1.msra.mxu0 0.0
    %1175 = vmatprep.subr.mxu0 0.0
    %1176 = vmatpush1.msra.mxu0 0.0
    %1177 = vmatprep.subr.mxu0 0.0
    %1178 = vmatpush1.msra.mxu0 0.0
    %1179 = vmatprep.subr.mxu0 0.0
    %1180 = vmatpush1.msra.mxu0 0.0
    %1181 = vmatprep.subr.mxu0 0.0
    %1182 = vmatpush1.msra.mxu0 0.0
    %1183 = vmatprep.subr.mxu0 0.0
    %1184 = vmatpush1.msra.mxu0 0.0
    %1185 = vmatprep.subr.mxu0 0.0
    %1186 = vmatpush1.msra.mxu0 0.0
    %1187 = vmatprep.mubr.f32.mxu0 0.0
    %1188 = vmatmul.mubr.f32.gmra.mrb[0].mxu0 %v1121
    %v1189 = vpop.f32.mrb[0].mxu0
    %v1190 = vadd.f32 0.0, %v1189
    %v1191 = vpop.f32.mrb[0].mxu0
    %1192 = vdwg.mxu0
    %v1194 = vrot.slane %v1190, 4
    %v1196 = vadd.f32 %v486, %v1194
    %v1197 = vxor.u32 %v1196, 2147483648
    %v1198 = vmul.f32 %v1197, 1.442695
    %v1199 = vpow.pop %v1198
    %v1200 = vadd.f32 %v1199, 1.0
    %v1201 = vrcp.pop %v1200
    %v1202 = vmul.f32 1.0, %v1201
    %v1203 = vtanh.pop %v1196
    %v1205 = vrot.slane %v1110, 6
    %v1207 = vmul.f32 %v1202, %v1205
    %1209 = vrot.lane.b32.xlu0 %v1203, 64
    %v1210 = vpop.permute.xlu0 %1209
    %v1212 = vmul.f32 %v1202, %v1210
    %1214 = vrot.lane.b32.xlu0 %v1212, 32
    %v1215 = vpop.permute.xlu0 %1214
    %v1217 = vadd.f32 %v1207, %v1215
    %v1218 = vtanh.pop %v1217
    %1220 = vrot.lane.b32.xlu0 %v1218, 64
    %v1221 = vpop.permute.xlu0 %1220
    %v1223 = vmul.f32 %v1202, %v1221
    %v1225 = vrot.slane %v1223, 4
    %1226 = vrot.lane.b32.xlu0 %v1225, 32
    %v1227 = vpop.permute.xlu0 %1226
    %v1228 = vsel %vm220, %v1227, 0
    %1230 = vmatprep.subr.mxu0 0.0
    %1231 = vmatpush1.msra.mxu0 %v397
    %1232 = vmatprep.subr.mxu0 0.0
    %1233 = vmatpush1.msra.mxu0 %v398
    %1234 = vmatprep.subr.mxu0 0.0
    %1235 = vmatpush1.msra.mxu0 %v399
    %1236 = vmatprep.subr.mxu0 0.0
    %1237 = vmatpush1.msra.mxu0 %v400
    %1238 = vmatprep.subr.mxu0 0.0
    %1239 = vmatpush1.msra.mxu0 0.0
    %1240 = vmatprep.subr.mxu0 0.0
    %1241 = vmatpush1.msra.mxu0 0.0
    %1242 = vmatprep.subr.mxu0 0.0
    %1243 = vmatpush1.msra.mxu0 0.0
    %1244 = vmatprep.subr.mxu0 0.0
    %1245 = vmatpush1.msra.mxu0 0.0
    %1246 = vmatprep.subr.mxu0 0.0
    %1247 = vmatpush1.msra.mxu0 0.0
    %1248 = vmatprep.subr.mxu0 0.0
    %1249 = vmatpush1.msra.mxu0 0.0
    %1250 = vmatprep.subr.mxu0 0.0
    %1251 = vmatpush1.msra.mxu0 0.0
    %1252 = vmatprep.subr.mxu0 0.0
    %1253 = vmatpush1.msra.mxu0 0.0
    %1254 = vmatprep.subr.mxu0 0.0
    %1255 = vmatpush1.msra.mxu0 0.0
    %1256 = vmatprep.subr.mxu0 0.0
    %1257 = vmatpush1.msra.mxu0 0.0
    %1258 = vmatprep.subr.mxu0 0.0
    %1259 = vmatpush1.msra.mxu0 0.0
    %1260 = vmatprep.subr.mxu0 0.0
    %1261 = vmatpush1.msra.mxu0 0.0
    %1262 = vmatprep.subr.mxu0 0.0
    %1263 = vmatpush1.msra.mxu0 0.0
    %1264 = vmatprep.subr.mxu0 0.0
    %1265 = vmatpush1.msra.mxu0 0.0
    %1266 = vmatprep.subr.mxu0 0.0
    %1267 = vmatpush1.msra.mxu0 0.0
    %1268 = vmatprep.subr.mxu0 0.0
    %1269 = vmatpush1.msra.mxu0 0.0
    %1270 = vmatprep.subr.mxu0 0.0
    %1271 = vmatpush1.msra.mxu0 0.0
    %1272 = vmatprep.subr.mxu0 0.0
    %1273 = vmatpush1.msra.mxu0 0.0
    %1274 = vmatprep.subr.mxu0 0.0
    %1275 = vmatpush1.msra.mxu0 0.0
    %1276 = vmatprep.subr.mxu0 0.0
    %1277 = vmatpush1.msra.mxu0 0.0
    %1278 = vmatprep.subr.mxu0 0.0
    %1279 = vmatpush1.msra.mxu0 0.0
    %1280 = vmatprep.subr.mxu0 0.0
    %1281 = vmatpush1.msra.mxu0 0.0
    %1282 = vmatprep.subr.mxu0 0.0
    %1283 = vmatpush1.msra.mxu0 0.0
    %1284 = vmatprep.subr.mxu0 0.0
    %1285 = vmatpush1.msra.mxu0 0.0
    %1286 = vmatprep.subr.mxu0 0.0
    %1287 = vmatpush1.msra.mxu0 0.0
    %1288 = vmatprep.subr.mxu0 0.0
    %1289 = vmatpush1.msra.mxu0 0.0
    %1290 = vmatprep.subr.mxu0 0.0
    %1291 = vmatpush1.msra.mxu0 0.0
    %1292 = vmatprep.subr.mxu0 0.0
    %1293 = vmatpush1.msra.mxu0 0.0
    %1294 = vmatprep.mubr.f32.mxu0 0.0
    %1295 = vmatmul.mubr.f32.gmra.mrb[0].mxu0 %v1228
    %v1296 = vpop.f32.mrb[0].mxu0
    %v1297 = vadd.f32 0.0, %v1296
    %v1298 = vpop.f32.mrb[0].mxu0
    %1299 = vdwg.mxu0
    %v1301 = vrot.slane %v1297, 2
    %v1303 = vadd.f32 %v486, %v1301
    %v1304 = vxor.u32 %v1303, 2147483648
    %v1305 = vmul.f32 %v1304, 1.442695
    %v1306 = vpow.pop %v1305
    %v1307 = vadd.f32 %v1306, 1.0
    %v1308 = vrcp.pop %v1307
    %v1309 = vmul.f32 1.0, %v1308
    %v1310 = vtanh.pop %v1303
    %v1312 = vrot.slane %v1217, 6
    %v1314 = vmul.f32 %v1309, %v1312
    %1316 = vrot.lane.b32.xlu0 %v1310, 64
    %v1317 = vpop.permute.xlu0 %1316
    %v1319 = vmul.f32 %v1309, %v1317
    %1321 = vrot.lane.b32.xlu0 %v1319, 32
    %v1322 = vpop.permute.xlu0 %1321
    %v1324 = vadd.f32 %v1314, %v1322
    %v1325 = vtanh.pop %v1324
    %1327 = vrot.lane.b32.xlu0 %v1325, 64
    %v1328 = vpop.permute.xlu0 %1327
    %v1330 = vmul.f32 %v1309, %v1328
    %vm1331 = vcmask 1041408
    %v1332 = vsel %vm1331, %v586, %v692
    %vm1333 = vcmask 1043456
    %v1334 = vsel %vm1333, %v1332, %v799
    %vm1335 = vcmask 1045504
    %v1336 = vsel %vm1335, %v1334, %v906
    %v1337 = vsel %vm1331, %v1010, %v1116
    %v1338 = vsel %vm1333, %v1337, %v1223
    %v1339 = vsel %vm1335, %v1338, %v1330
    %v1340 = vld [vmem:[%s7] sm:$0xff]
    %v1341 = vld [vmem:[%s7 + $0x8] sm:$0xff]
    %v1342 = vld [vmem:[%s7 + $0x10] sm:$0xff]
    %v1343 = vld [vmem:[%s7 + $0x18] sm:$0xff]
    %v1344 = vld [vmem:[%s8] sm:$0xff]
    %v1345 = vld [vmem:[%s8 + $0x8] sm:$0xff]
    %v1346 = vld [vmem:[%s8 + $0x10] sm:$0xff]
    %v1347 = vld [vmem:[%s8 + $0x18] sm:$0xff]
    %v1348 = vld [vmem:[#allocation7] sm:$0x1]
    %v1350 = vlaneseq
    %v1351 = vshrl.u32 %v1350, 7
    %v1352 = vsub.s32 0, %v1351
    %v1353 = vrot.slane %v1348, %v1352
    %1357 = vrot.lane.b32.xlu0 %v1336, 32
    %v1358 = vpop.permute.xlu0 %1357
    %1359 = vrot.lane.b32.xlu0 %v1339, 32
    %v1360 = vpop.permute.xlu0 %1359
    %v1361 = vsel %vm220, %v1358, 0
    %v1363 = vsel %vm220, %v1360, 0
    %1365 = vmatprep.subr.mxu0 0.0
    %1366 = vmatpush1.msra.mxu0 %v1340
    %1367 = vmatprep.subr.mxu0 0.0
    %1368 = vmatpush1.msra.mxu0 %v1341
    %1369 = vmatprep.subr.mxu0 0.0
    %1370 = vmatpush1.msra.mxu0 %v1342
    %1371 = vmatprep.subr.mxu0 0.0
    %1372 = vmatpush1.msra.mxu0 %v1343
    %1373 = vmatprep.subr.mxu0 0.0
    %1374 = vmatpush1.msra.mxu0 0.0
    %1375 = vmatprep.subr.mxu0 0.0
    %1376 = vmatpush1.msra.mxu0 0.0
    %1377 = vmatprep.subr.mxu0 0.0
    %1378 = vmatpush1.msra.mxu0 0.0
    %1379 = vmatprep.subr.mxu0 0.0
    %1380 = vmatpush1.msra.mxu0 0.0
    %1381 = vmatprep.subr.mxu0 0.0
    %1382 = vmatpush1.msra.mxu0 0.0
    %1383 = vmatprep.subr.mxu0 0.0
    %1384 = vmatpush1.msra.mxu0 0.0
    %1385 = vmatprep.subr.mxu0 0.0
    %1386 = vmatpush1.msra.mxu0 0.0
    %1387 = vmatprep.subr.mxu0 0.0
    %1388 = vmatpush1.msra.mxu0 0.0
    %1389 = vmatprep.subr.mxu0 0.0
    %1390 = vmatpush1.msra.mxu0 0.0
    %1391 = vmatprep.subr.mxu0 0.0
    %1392 = vmatpush1.msra.mxu0 0.0
    %1393 = vmatprep.subr.mxu0 0.0
    %1394 = vmatpush1.msra.mxu0 0.0
    %1395 = vmatprep.subr.mxu0 0.0
    %1396 = vmatpush1.msra.mxu0 0.0
    %1397 = vmatprep.subr.mxu0 0.0
    %1398 = vmatpush1.msra.mxu0 0.0
    %1399 = vmatprep.subr.mxu0 0.0
    %1400 = vmatpush1.msra.mxu0 0.0
    %1401 = vmatprep.subr.mxu0 0.0
    %1402 = vmatpush1.msra.mxu0 0.0
    %1403 = vmatprep.subr.mxu0 0.0
    %1404 = vmatpush1.msra.mxu0 0.0
    %1405 = vmatprep.subr.mxu0 0.0
    %1406 = vmatpush1.msra.mxu0 0.0
    %1407 = vmatprep.subr.mxu0 0.0
    %1408 = vmatpush1.msra.mxu0 0.0
    %1409 = vmatprep.subr.mxu0 0.0
    %1410 = vmatpush1.msra.mxu0 0.0
    %1411 = vmatprep.subr.mxu0 0.0
    %1412 = vmatpush1.msra.mxu0 0.0
    %1413 = vmatprep.subr.mxu0 0.0
    %1414 = vmatpush1.msra.mxu0 0.0
    %1415 = vmatprep.subr.mxu0 0.0
    %1416 = vmatpush1.msra.mxu0 0.0
    %1417 = vmatprep.subr.mxu0 0.0
    %1418 = vmatpush1.msra.mxu0 0.0
    %1419 = vmatprep.subr.mxu0 0.0
    %1420 = vmatpush1.msra.mxu0 0.0
    %1421 = vmatprep.subr.mxu0 0.0
    %1422 = vmatpush1.msra.mxu0 0.0
    %1423 = vmatprep.subr.mxu0 0.0
    %1424 = vmatpush1.msra.mxu0 0.0
    %1425 = vmatprep.subr.mxu0 0.0
    %1426 = vmatpush1.msra.mxu0 0.0
    %1427 = vmatprep.subr.mxu0 0.0
    %1428 = vmatpush1.msra.mxu0 0.0
    %1429 = vmatprep.mubr.f32.mxu0 0.0
    %1430 = vmatmul.mubr.f32.gmra.mrb[0].mxu0 %v1361
    %v1431 = vpop.f32.mrb[0].mxu0
    %v1432 = vadd.f32 %v1353, %v1431
    %v1433 = vpop.f32.mrb[0].mxu0
    %1434 = vmatprep.mubr.f32.mxu0 0.0
    %1435 = vmatmul.mubr.f32.gmra.mrb[0].mxu0 %v1363
    %v1436 = vpop.f32.mrb[0].mxu0
    %v1437 = vadd.f32 %v1353, %v1436
    %v1438 = vpop.f32.mrb[0].mxu0
    %1439 = vdwg.mxu0
    %1440 = vmatprep.subr.mxu0 0.0
    %1441 = vmatpush1.msra.mxu0 %v1344
    %1442 = vmatprep.subr.mxu0 0.0
    %1443 = vmatpush1.msra.mxu0 %v1345
    %1444 = vmatprep.subr.mxu0 0.0
    %1445 = vmatpush1.msra.mxu0 %v1346
    %1446 = vmatprep.subr.mxu0 0.0
    %1447 = vmatpush1.msra.mxu0 %v1347
    %1448 = vmatprep.subr.mxu0 0.0
    %1449 = vmatpush1.msra.mxu0 0.0
    %1450 = vmatprep.subr.mxu0 0.0
    %1451 = vmatpush1.msra.mxu0 0.0
    %1452 = vmatprep.subr.mxu0 0.0
    %1453 = vmatpush1.msra.mxu0 0.0
    %1454 = vmatprep.subr.mxu0 0.0
    %1455 = vmatpush1.msra.mxu0 0.0
    %1456 = vmatprep.subr.mxu0 0.0
    %1457 = vmatpush1.msra.mxu0 0.0
    %1458 = vmatprep.subr.mxu0 0.0
    %1459 = vmatpush1.msra.mxu0 0.0
    %1460 = vmatprep.subr.mxu0 0.0
    %1461 = vmatpush1.msra.mxu0 0.0
    %1462 = vmatprep.subr.mxu0 0.0
    %1463 = vmatpush1.msra.mxu0 0.0
    %1464 = vmatprep.subr.mxu0 0.0
    %1465 = vmatpush1.msra.mxu0 0.0
    %1466 = vmatprep.subr.mxu0 0.0
    %1467 = vmatpush1.msra.mxu0 0.0
    %1468 = vmatprep.subr.mxu0 0.0
    %1469 = vmatpush1.msra.mxu0 0.0
    %1470 = vmatprep.subr.mxu0 0.0
    %1471 = vmatpush1.msra.mxu0 0.0
    %1472 = vmatprep.subr.mxu0 0.0
    %1473 = vmatpush1.msra.mxu0 0.0
    %1474 = vmatprep.subr.mxu0 0.0
    %1475 = vmatpush1.msra.mxu0 0.0
    %1476 = vmatprep.subr.mxu0 0.0
    %1477 = vmatpush1.msra.mxu0 0.0
    %1478 = vmatprep.subr.mxu0 0.0
    %1479 = vmatpush1.msra.mxu0 0.0
    %1480 = vmatprep.subr.mxu0 0.0
    %1481 = vmatpush1.msra.mxu0 0.0
    %1482 = vmatprep.subr.mxu0 0.0
    %1483 = vmatpush1.msra.mxu0 0.0
    %1484 = vmatprep.subr.mxu0 0.0
    %1485 = vmatpush1.msra.mxu0 0.0
    %1486 = vmatprep.subr.mxu0 0.0
    %1487 = vmatpush1.msra.mxu0 0.0
    %1488 = vmatprep.subr.mxu0 0.0
    %1489 = vmatpush1.msra.mxu0 0.0
    %1490 = vmatprep.subr.mxu0 0.0
    %1491 = vmatpush1.msra.mxu0 0.0
    %1492 = vmatprep.subr.mxu0 0.0
    %1493 = vmatpush1.msra.mxu0 0.0
    %1494 = vmatprep.subr.mxu0 0.0
    %1495 = vmatpush1.msra.mxu0 0.0
    %1496 = vmatprep.subr.mxu0 0.0
    %1497 = vmatpush1.msra.mxu0 0.0
    %1498 = vmatprep.subr.mxu0 0.0
    %1499 = vmatpush1.msra.mxu0 0.0
    %1500 = vmatprep.subr.mxu0 0.0
    %1501 = vmatpush1.msra.mxu0 0.0
    %1502 = vmatprep.subr.mxu0 0.0
    %1503 = vmatpush1.msra.mxu0 0.0
    %1504 = vmatprep.mubr.f32.mxu0 0.0
    %1505 = vmatmul.mubr.f32.gmra.mrb[0].mxu0 %v490
    %v1506 = vpop.f32.mrb[0].mxu0
    %v1507 = vadd.f32 0.0, %v1506
    %v1508 = vpop.f32.mrb[0].mxu0
    %1509 = vdwg.mxu0
    %v1510 = vadd.f32 %v1432, %v1507
    %v1511 = vxor.u32 %v1510, 2147483648
    %v1512 = vmul.f32 %v1511, 1.442695
    %v1513 = vpow.pop %v1512
    %v1514 = vadd.f32 %v1513, 1.0
    %v1515 = vrcp.pop %v1514
    %v1516 = vmul.f32 1.0, %v1515
    %v1517 = vtanh.pop %v1510
    %v1518 = vmul.f32 %v1516, 0.0
    %1520 = vrot.lane.b32.xlu0 %v1517, 64
    %v1521 = vpop.permute.xlu0 %1520
    %v1523 = vmul.f32 %v1516, %v1521
    %1525 = vrot.lane.b32.xlu0 %v1523, 32
    %v1526 = vpop.permute.xlu0 %1525
    %v1528 = vadd.f32 %v1518, %v1526
    %v1529 = vtanh.pop %v1528
    %1531 = vrot.lane.b32.xlu0 %v1529, 64
    %v1532 = vpop.permute.xlu0 %1531
    %v1534 = vmul.f32 %v1516, %v1532
    %1536 = vrot.lane.b32.xlu0 %v1534, 32
    %v1537 = vpop.permute.xlu0 %1536
    %v1538 = vsel %vm220, %v1537, 0
    %1540 = vmatprep.subr.mxu0 0.0
    %1541 = vmatpush1.msra.mxu0 %v1344
    %1542 = vmatprep.subr.mxu0 0.0
    %1543 = vmatpush1.msra.mxu0 %v1345
    %1544 = vmatprep.subr.mxu0 0.0
    %1545 = vmatpush1.msra.mxu0 %v1346
    %1546 = vmatprep.subr.mxu0 0.0
    %1547 = vmatpush1.msra.mxu0 %v1347
    %1548 = vmatprep.subr.mxu0 0.0
    %1549 = vmatpush1.msra.mxu0 0.0
    %1550 = vmatprep.subr.mxu0 0.0
    %1551 = vmatpush1.msra.mxu0 0.0
    %1552 = vmatprep.subr.mxu0 0.0
    %1553 = vmatpush1.msra.mxu0 0.0
    %1554 = vmatprep.subr.mxu0 0.0
    %1555 = vmatpush1.msra.mxu0 0.0
    %1556 = vmatprep.subr.mxu0 0.0
    %1557 = vmatpush1.msra.mxu0 0.0
    %1558 = vmatprep.subr.mxu0 0.0
    %1559 = vmatpush1.msra.mxu0 0.0
    %1560 = vmatprep.subr.mxu0 0.0
    %1561 = vmatpush1.msra.mxu0 0.0
    %1562 = vmatprep.subr.mxu0 0.0
    %1563 = vmatpush1.msra.mxu0 0.0
    %1564 = vmatprep.subr.mxu0 0.0
    %1565 = vmatpush1.msra.mxu0 0.0
    %1566 = vmatprep.subr.mxu0 0.0
    %1567 = vmatpush1.msra.mxu0 0.0
    %1568 = vmatprep.subr.mxu0 0.0
    %1569 = vmatpush1.msra.mxu0 0.0
    %1570 = vmatprep.subr.mxu0 0.0
    %1571 = vmatpush1.msra.mxu0 0.0
    %1572 = vmatprep.subr.mxu0 0.0
    %1573 = vmatpush1.msra.mxu0 0.0
    %1574 = vmatprep.subr.mxu0 0.0
    %1575 = vmatpush1.msra.mxu0 0.0
    %1576 = vmatprep.subr.mxu0 0.0
    %1577 = vmatpush1.msra.mxu0 0.0
    %1578 = vmatprep.subr.mxu0 0.0
    %1579 = vmatpush1.msra.mxu0 0.0
    %1580 = vmatprep.subr.mxu0 0.0
    %1581 = vmatpush1.msra.mxu0 0.0
    %1582 = vmatprep.subr.mxu0 0.0
    %1583 = vmatpush1.msra.mxu0 0.0
    %1584 = vmatprep.subr.mxu0 0.0
    %1585 = vmatpush1.msra.mxu0 0.0
    %1586 = vmatprep.subr.mxu0 0.0
    %1587 = vmatpush1.msra.mxu0 0.0
    %1588 = vmatprep.subr.mxu0 0.0
    %1589 = vmatpush1.msra.mxu0 0.0
    %1590 = vmatprep.subr.mxu0 0.0
    %1591 = vmatpush1.msra.mxu0 0.0
    %1592 = vmatprep.subr.mxu0 0.0
    %1593 = vmatpush1.msra.mxu0 0.0
    %1594 = vmatprep.subr.mxu0 0.0
    %1595 = vmatpush1.msra.mxu0 0.0
    %1596 = vmatprep.subr.mxu0 0.0
    %1597 = vmatpush1.msra.mxu0 0.0
    %1598 = vmatprep.subr.mxu0 0.0
    %1599 = vmatpush1.msra.mxu0 0.0
    %1600 = vmatprep.subr.mxu0 0.0
    %1601 = vmatpush1.msra.mxu0 0.0
    %1602 = vmatprep.subr.mxu0 0.0
    %1603 = vmatpush1.msra.mxu0 0.0
    %1604 = vmatprep.mubr.f32.mxu0 0.0
    %1605 = vmatmul.mubr.f32.gmra.mrb[0].mxu0 %v1538
    %v1606 = vpop.f32.mrb[0].mxu0
    %v1607 = vadd.f32 0.0, %v1606
    %v1608 = vpop.f32.mrb[0].mxu0
    %1609 = vdwg.mxu0
    %v1611 = vrot.slane %v1607, 6
    %v1613 = vadd.f32 %v1432, %v1611
    %v1614 = vxor.u32 %v1613, 2147483648
    %v1615 = vmul.f32 %v1614, 1.442695
    %v1616 = vpow.pop %v1615
    %v1617 = vadd.f32 %v1616, 1.0
    %v1618 = vrcp.pop %v1617
    %v1619 = vmul.f32 1.0, %v1618
    %v1620 = vtanh.pop %v1613
    %v1622 = vrot.slane %v1528, 6
    %v1624 = vmul.f32 %v1619, %v1622
    %1626 = vrot.lane.b32.xlu0 %v1620, 64
    %v1627 = vpop.permute.xlu0 %1626
    %v1629 = vmul.f32 %v1619, %v1627
    %1631 = vrot.lane.b32.xlu0 %v1629, 32
    %v1632 = vpop.permute.xlu0 %1631
    %v1634 = vadd.f32 %v1624, %v1632
    %v1635 = vtanh.pop %v1634
    %1637 = vrot.lane.b32.xlu0 %v1635, 64
    %v1638 = vpop.permute.xlu0 %1637
    %v1640 = vmul.f32 %v1619, %v1638
    %v1642 = vrot.slane %v1640, 2
    %1643 = vrot.lane.b32.xlu0 %v1642, 32
    %v1644 = vpop.permute.xlu0 %1643
    %v1645 = vsel %vm220, %v1644, 0
    %1647 = vmatprep.subr.mxu0 0.0
    %1648 = vmatpush1.msra.mxu0 %v1344
    %1649 = vmatprep.subr.mxu0 0.0
    %1650 = vmatpush1.msra.mxu0 %v1345
    %1651 = vmatprep.subr.mxu0 0.0
    %1652 = vmatpush1.msra.mxu0 %v1346
    %1653 = vmatprep.subr.mxu0 0.0
    %1654 = vmatpush1.msra.mxu0 %v1347
    %1655 = vmatprep.subr.mxu0 0.0
    %1656 = vmatpush1.msra.mxu0 0.0
    %1657 = vmatprep.subr.mxu0 0.0
    %1658 = vmatpush1.msra.mxu0 0.0
    %1659 = vmatprep.subr.mxu0 0.0
    %1660 = vmatpush1.msra.mxu0 0.0
    %1661 = vmatprep.subr.mxu0 0.0
    %1662 = vmatpush1.msra.mxu0 0.0
    %1663 = vmatprep.subr.mxu0 0.0
    %1664 = vmatpush1.msra.mxu0 0.0
    %1665 = vmatprep.subr.mxu0 0.0
    %1666 = vmatpush1.msra.mxu0 0.0
    %1667 = vmatprep.subr.mxu0 0.0
    %1668 = vmatpush1.msra.mxu0 0.0
    %1669 = vmatprep.subr.mxu0 0.0
    %1670 = vmatpush1.msra.mxu0 0.0
    %1671 = vmatprep.subr.mxu0 0.0
    %1672 = vmatpush1.msra.mxu0 0.0
    %1673 = vmatprep.subr.mxu0 0.0
    %1674 = vmatpush1.msra.mxu0 0.0
    %1675 = vmatprep.subr.mxu0 0.0
    %1676 = vmatpush1.msra.mxu0 0.0
    %1677 = vmatprep.subr.mxu0 0.0
    %1678 = vmatpush1.msra.mxu0 0.0
    %1679 = vmatprep.subr.mxu0 0.0
    %1680 = vmatpush1.msra.mxu0 0.0
    %1681 = vmatprep.subr.mxu0 0.0
    %1682 = vmatpush1.msra.mxu0 0.0
    %1683 = vmatprep.subr.mxu0 0.0
    %1684 = vmatpush1.msra.mxu0 0.0
    %1685 = vmatprep.subr.mxu0 0.0
    %1686 = vmatpush1.msra.mxu0 0.0
    %1687 = vmatprep.subr.mxu0 0.0
    %1688 = vmatpush1.msra.mxu0 0.0
    %1689 = vmatprep.subr.mxu0 0.0
    %1690 = vmatpush1.msra.mxu0 0.0
    %1691 = vmatprep.subr.mxu0 0.0
    %1692 = vmatpush1.msra.mxu0 0.0
    %1693 = vmatprep.subr.mxu0 0.0
    %1694 = vmatpush1.msra.mxu0 0.0
    %1695 = vmatprep.subr.mxu0 0.0
    %1696 = vmatpush1.msra.mxu0 0.0
    %1697 = vmatprep.subr.mxu0 0.0
    %1698 = vmatpush1.msra.mxu0 0.0
    %1699 = vmatprep.subr.mxu0 0.0
    %1700 = vmatpush1.msra.mxu0 0.0
    %1701 = vmatprep.subr.mxu0 0.0
    %1702 = vmatpush1.msra.mxu0 0.0
    %1703 = vmatprep.subr.mxu0 0.0
    %1704 = vmatpush1.msra.mxu0 0.0
    %1705 = vmatprep.subr.mxu0 0.0
    %1706 = vmatpush1.msra.mxu0 0.0
    %1707 = vmatprep.subr.mxu0 0.0
    %1708 = vmatpush1.msra.mxu0 0.0
    %1709 = vmatprep.subr.mxu0 0.0
    %1710 = vmatpush1.msra.mxu0 0.0
    %1711 = vmatprep.mubr.f32.mxu0 0.0
    %1712 = vmatmul.mubr.f32.gmra.mrb[0].mxu0 %v1645
    %v1713 = vpop.f32.mrb[0].mxu0
    %v1714 = vadd.f32 0.0, %v1713
    %v1715 = vpop.f32.mrb[0].mxu0
    %1716 = vdwg.mxu0
    %v1718 = vrot.slane %v1714, 4
    %v1720 = vadd.f32 %v1432, %v1718
    %v1721 = vxor.u32 %v1720, 2147483648
    %v1722 = vmul.f32 %v1721, 1.442695
    %v1723 = vpow.pop %v1722
    %v1724 = vadd.f32 %v1723, 1.0
    %v1725 = vrcp.pop %v1724
    %v1726 = vmul.f32 1.0, %v1725
    %v1727 = vtanh.pop %v1720
    %v1729 = vrot.slane %v1634, 6
    %v1731 = vmul.f32 %v1726, %v1729
    %1733 = vrot.lane.b32.xlu0 %v1727, 64
    %v1734 = vpop.permute.xlu0 %1733
    %v1736 = vmul.f32 %v1726, %v1734
    %1738 = vrot.lane.b32.xlu0 %v1736, 32
    %v1739 = vpop.permute.xlu0 %1738
    %v1741 = vadd.f32 %v1731, %v1739
    %v1742 = vtanh.pop %v1741
    %1744 = vrot.lane.b32.xlu0 %v1742, 64
    %v1745 = vpop.permute.xlu0 %1744
    %v1747 = vmul.f32 %v1726, %v1745
    %v1749 = vrot.slane %v1747, 4
    %1750 = vrot.lane.b32.xlu0 %v1749, 32
    %v1751 = vpop.permute.xlu0 %1750
    %v1752 = vsel %vm220, %v1751, 0
    %1754 = vmatprep.subr.mxu0 0.0
    %1755 = vmatpush1.msra.mxu0 %v1344
    %1756 = vmatprep.subr.mxu0 0.0
    %1757 = vmatpush1.msra.mxu0 %v1345
    %1758 = vmatprep.subr.mxu0 0.0
    %1759 = vmatpush1.msra.mxu0 %v1346
    %1760 = vmatprep.subr.mxu0 0.0
    %1761 = vmatpush1.msra.mxu0 %v1347
    %1762 = vmatprep.subr.mxu0 0.0
    %1763 = vmatpush1.msra.mxu0 0.0
    %1764 = vmatprep.subr.mxu0 0.0
    %1765 = vmatpush1.msra.mxu0 0.0
    %1766 = vmatprep.subr.mxu0 0.0
    %1767 = vmatpush1.msra.mxu0 0.0
    %1768 = vmatprep.subr.mxu0 0.0
    %1769 = vmatpush1.msra.mxu0 0.0
    %1770 = vmatprep.subr.mxu0 0.0
    %1771 = vmatpush1.msra.mxu0 0.0
    %1772 = vmatprep.subr.mxu0 0.0
    %1773 = vmatpush1.msra.mxu0 0.0
    %1774 = vmatprep.subr.mxu0 0.0
    %1775 = vmatpush1.msra.mxu0 0.0
    %1776 = vmatprep.subr.mxu0 0.0
    %1777 = vmatpush1.msra.mxu0 0.0
    %1778 = vmatprep.subr.mxu0 0.0
    %1779 = vmatpush1.msra.mxu0 0.0
    %1780 = vmatprep.subr.mxu0 0.0
    %1781 = vmatpush1.msra.mxu0 0.0
    %1782 = vmatprep.subr.mxu0 0.0
    %1783 = vmatpush1.msra.mxu0 0.0
    %1784 = vmatprep.subr.mxu0 0.0
    %1785 = vmatpush1.msra.mxu0 0.0
    %1786 = vmatprep.subr.mxu0 0.0
    %1787 = vmatpush1.msra.mxu0 0.0
    %1788 = vmatprep.subr.mxu0 0.0
    %1789 = vmatpush1.msra.mxu0 0.0
    %1790 = vmatprep.subr.mxu0 0.0
    %1791 = vmatpush1.msra.mxu0 0.0
    %1792 = vmatprep.subr.mxu0 0.0
    %1793 = vmatpush1.msra.mxu0 0.0
    %1794 = vmatprep.subr.mxu0 0.0
    %1795 = vmatpush1.msra.mxu0 0.0
    %1796 = vmatprep.subr.mxu0 0.0
    %1797 = vmatpush1.msra.mxu0 0.0
    %1798 = vmatprep.subr.mxu0 0.0
    %1799 = vmatpush1.msra.mxu0 0.0
    %1800 = vmatprep.subr.mxu0 0.0
    %1801 = vmatpush1.msra.mxu0 0.0
    %1802 = vmatprep.subr.mxu0 0.0
    %1803 = vmatpush1.msra.mxu0 0.0
    %1804 = vmatprep.subr.mxu0 0.0
    %1805 = vmatpush1.msra.mxu0 0.0
    %1806 = vmatprep.subr.mxu0 0.0
    %1807 = vmatpush1.msra.mxu0 0.0
    %1808 = vmatprep.subr.mxu0 0.0
    %1809 = vmatpush1.msra.mxu0 0.0
    %1810 = vmatprep.subr.mxu0 0.0
    %1811 = vmatpush1.msra.mxu0 0.0
    %1812 = vmatprep.subr.mxu0 0.0
    %1813 = vmatpush1.msra.mxu0 0.0
    %1814 = vmatprep.subr.mxu0 0.0
    %1815 = vmatpush1.msra.mxu0 0.0
    %1816 = vmatprep.subr.mxu0 0.0
    %1817 = vmatpush1.msra.mxu0 0.0
    %1818 = vmatprep.mubr.f32.mxu0 0.0
    %1819 = vmatmul.mubr.f32.gmra.mrb[0].mxu0 %v1752
    %v1820 = vpop.f32.mrb[0].mxu0
    %v1821 = vadd.f32 0.0, %v1820
    %v1822 = vpop.f32.mrb[0].mxu0
    %1823 = vdwg.mxu0
    %v1825 = vrot.slane %v1821, 2
    %v1827 = vadd.f32 %v1432, %v1825
    %v1828 = vxor.u32 %v1827, 2147483648
    %v1829 = vmul.f32 %v1828, 1.442695
    %v1830 = vpow.pop %v1829
    %v1831 = vadd.f32 %v1830, 1.0
    %v1832 = vrcp.pop %v1831
    %v1833 = vmul.f32 1.0, %v1832
    %v1834 = vtanh.pop %v1827
    %v1836 = vrot.slane %v1741, 6
    %v1838 = vmul.f32 %v1833, %v1836
    %1840 = vrot.lane.b32.xlu0 %v1834, 64
    %v1841 = vpop.permute.xlu0 %1840
    %v1843 = vmul.f32 %v1833, %v1841
    %1845 = vrot.lane.b32.xlu0 %v1843, 32
    %v1846 = vpop.permute.xlu0 %1845
    %v1848 = vadd.f32 %v1838, %v1846
    %v1849 = vtanh.pop %v1848
    %1851 = vrot.lane.b32.xlu0 %v1849, 64
    %v1852 = vpop.permute.xlu0 %1851
    %v1854 = vmul.f32 %v1833, %v1852
    %v1856 = vrot.slane %v1854, 6
    %1857 = vrot.lane.b32.xlu0 %v1856, 32
    %v1858 = vpop.permute.xlu0 %1857
    %v1859 = vsel %vm220, %v1858, 0
    %1861 = vmatprep.subr.mxu0 0.0
    %1862 = vmatpush1.msra.mxu0 %v1344
    %1863 = vmatprep.subr.mxu0 0.0
    %1864 = vmatpush1.msra.mxu0 %v1345
    %1865 = vmatprep.subr.mxu0 0.0
    %1866 = vmatpush1.msra.mxu0 %v1346
    %1867 = vmatprep.subr.mxu0 0.0
    %1868 = vmatpush1.msra.mxu0 %v1347
    %1869 = vmatprep.subr.mxu0 0.0
    %1870 = vmatpush1.msra.mxu0 0.0
    %1871 = vmatprep.subr.mxu0 0.0
    %1872 = vmatpush1.msra.mxu0 0.0
    %1873 = vmatprep.subr.mxu0 0.0
    %1874 = vmatpush1.msra.mxu0 0.0
    %1875 = vmatprep.subr.mxu0 0.0
    %1876 = vmatpush1.msra.mxu0 0.0
    %1877 = vmatprep.subr.mxu0 0.0
    %1878 = vmatpush1.msra.mxu0 0.0
    %1879 = vmatprep.subr.mxu0 0.0
    %1880 = vmatpush1.msra.mxu0 0.0
    %1881 = vmatprep.subr.mxu0 0.0
    %1882 = vmatpush1.msra.mxu0 0.0
    %1883 = vmatprep.subr.mxu0 0.0
    %1884 = vmatpush1.msra.mxu0 0.0
    %1885 = vmatprep.subr.mxu0 0.0
    %1886 = vmatpush1.msra.mxu0 0.0
    %1887 = vmatprep.subr.mxu0 0.0
    %1888 = vmatpush1.msra.mxu0 0.0
    %1889 = vmatprep.subr.mxu0 0.0
    %1890 = vmatpush1.msra.mxu0 0.0
    %1891 = vmatprep.subr.mxu0 0.0
    %1892 = vmatpush1.msra.mxu0 0.0
    %1893 = vmatprep.subr.mxu0 0.0
    %1894 = vmatpush1.msra.mxu0 0.0
    %1895 = vmatprep.subr.mxu0 0.0
    %1896 = vmatpush1.msra.mxu0 0.0
    %1897 = vmatprep.subr.mxu0 0.0
    %1898 = vmatpush1.msra.mxu0 0.0
    %1899 = vmatprep.subr.mxu0 0.0
    %1900 = vmatpush1.msra.mxu0 0.0
    %1901 = vmatprep.subr.mxu0 0.0
    %1902 = vmatpush1.msra.mxu0 0.0
    %1903 = vmatprep.subr.mxu0 0.0
    %1904 = vmatpush1.msra.mxu0 0.0
    %1905 = vmatprep.subr.mxu0 0.0
    %1906 = vmatpush1.msra.mxu0 0.0
    %1907 = vmatprep.subr.mxu0 0.0
    %1908 = vmatpush1.msra.mxu0 0.0
    %1909 = vmatprep.subr.mxu0 0.0
    %1910 = vmatpush1.msra.mxu0 0.0
    %1911 = vmatprep.subr.mxu0 0.0
    %1912 = vmatpush1.msra.mxu0 0.0
    %1913 = vmatprep.subr.mxu0 0.0
    %1914 = vmatpush1.msra.mxu0 0.0
    %1915 = vmatprep.subr.mxu0 0.0
    %1916 = vmatpush1.msra.mxu0 0.0
    %1917 = vmatprep.subr.mxu0 0.0
    %1918 = vmatpush1.msra.mxu0 0.0
    %1919 = vmatprep.subr.mxu0 0.0
    %1920 = vmatpush1.msra.mxu0 0.0
    %1921 = vmatprep.subr.mxu0 0.0
    %1922 = vmatpush1.msra.mxu0 0.0
    %1923 = vmatprep.subr.mxu0 0.0
    %1924 = vmatpush1.msra.mxu0 0.0
    %1925 = vmatprep.mubr.f32.mxu0 0.0
    %1926 = vmatmul.mubr.f32.gmra.mrb[0].mxu0 %v1859
    %v1927 = vpop.f32.mrb[0].mxu0
    %v1928 = vadd.f32 0.0, %v1927
    %v1929 = vpop.f32.mrb[0].mxu0
    %1930 = vdwg.mxu0
    %v1931 = vadd.f32 %v1437, %v1928
    %v1932 = vxor.u32 %v1931, 2147483648
    %v1933 = vmul.f32 %v1932, 1.442695
    %v1934 = vpow.pop %v1933
    %v1935 = vadd.f32 %v1934, 1.0
    %v1936 = vrcp.pop %v1935
    %v1937 = vmul.f32 1.0, %v1936
    %v1938 = vtanh.pop %v1931
    %v1940 = vrot.slane %v1848, 6
    %v1942 = vmul.f32 %v1937, %v1940
    %1944 = vrot.lane.b32.xlu0 %v1938, 64
    %v1945 = vpop.permute.xlu0 %1944
    %v1947 = vmul.f32 %v1937, %v1945
    %1949 = vrot.lane.b32.xlu0 %v1947, 32
    %v1950 = vpop.permute.xlu0 %1949
    %v1952 = vadd.f32 %v1942, %v1950
    %v1953 = vtanh.pop %v1952
    %1955 = vrot.lane.b32.xlu0 %v1953, 64
    %v1956 = vpop.permute.xlu0 %1955
    %v1958 = vmul.f32 %v1937, %v1956
    %1960 = vrot.lane.b32.xlu0 %v1958, 32
    %v1961 = vpop.permute.xlu0 %1960
    %v1962 = vsel %vm220, %v1961, 0
    %1964 = vmatprep.subr.mxu0 0.0
    %1965 = vmatpush1.msra.mxu0 %v1344
    %1966 = vmatprep.subr.mxu0 0.0
    %1967 = vmatpush1.msra.mxu0 %v1345
    %1968 = vmatprep.subr.mxu0 0.0
    %1969 = vmatpush1.msra.mxu0 %v1346
    %1970 = vmatprep.subr.mxu0 0.0
    %1971 = vmatpush1.msra.mxu0 %v1347
    %1972 = vmatprep.subr.mxu0 0.0
    %1973 = vmatpush1.msra.mxu0 0.0
    %1974 = vmatprep.subr.mxu0 0.0
    %1975 = vmatpush1.msra.mxu0 0.0
    %1976 = vmatprep.subr.mxu0 0.0
    %1977 = vmatpush1.msra.mxu0 0.0
    %1978 = vmatprep.subr.mxu0 0.0
    %1979 = vmatpush1.msra.mxu0 0.0
    %1980 = vmatprep.subr.mxu0 0.0
    %1981 = vmatpush1.msra.mxu0 0.0
    %1982 = vmatprep.subr.mxu0 0.0
    %1983 = vmatpush1.msra.mxu0 0.0
    %1984 = vmatprep.subr.mxu0 0.0
    %1985 = vmatpush1.msra.mxu0 0.0
    %1986 = vmatprep.subr.mxu0 0.0
    %1987 = vmatpush1.msra.mxu0 0.0
    %1988 = vmatprep.subr.mxu0 0.0
    %1989 = vmatpush1.msra.mxu0 0.0
    %1990 = vmatprep.subr.mxu0 0.0
    %1991 = vmatpush1.msra.mxu0 0.0
    %1992 = vmatprep.subr.mxu0 0.0
    %1993 = vmatpush1.msra.mxu0 0.0
    %1994 = vmatprep.subr.mxu0 0.0
    %1995 = vmatpush1.msra.mxu0 0.0
    %1996 = vmatprep.subr.mxu0 0.0
    %1997 = vmatpush1.msra.mxu0 0.0
    %1998 = vmatprep.subr.mxu0 0.0
    %1999 = vmatpush1.msra.mxu0 0.0
    %2000 = vmatprep.subr.mxu0 0.0
    %2001 = vmatpush1.msra.mxu0 0.0
    %2002 = vmatprep.subr.mxu0 0.0
    %2003 = vmatpush1.msra.mxu0 0.0
    %2004 = vmatprep.subr.mxu0 0.0
    %2005 = vmatpush1.msra.mxu0 0.0
    %2006 = vmatprep.subr.mxu0 0.0
    %2007 = vmatpush1.msra.mxu0 0.0
    %2008 = vmatprep.subr.mxu0 0.0
    %2009 = vmatpush1.msra.mxu0 0.0
    %2010 = vmatprep.subr.mxu0 0.0
    %2011 = vmatpush1.msra.mxu0 0.0
    %2012 = vmatprep.subr.mxu0 0.0
    %2013 = vmatpush1.msra.mxu0 0.0
    %2014 = vmatprep.subr.mxu0 0.0
    %2015 = vmatpush1.msra.mxu0 0.0
    %2016 = vmatprep.subr.mxu0 0.0
    %2017 = vmatpush1.msra.mxu0 0.0
    %2018 = vmatprep.subr.mxu0 0.0
    %2019 = vmatpush1.msra.mxu0 0.0
    %2020 = vmatprep.subr.mxu0 0.0
    %2021 = vmatpush1.msra.mxu0 0.0
    %2022 = vmatprep.subr.mxu0 0.0
    %2023 = vmatpush1.msra.mxu0 0.0
    %2024 = vmatprep.subr.mxu0 0.0
    %2025 = vmatpush1.msra.mxu0 0.0
    %2026 = vmatprep.subr.mxu0 0.0
    %2027 = vmatpush1.msra.mxu0 0.0
    %2028 = vmatprep.mubr.f32.mxu0 0.0
    %2029 = vmatmul.mubr.f32.gmra.mrb[0].mxu0 %v1962
    %v2030 = vpop.f32.mrb[0].mxu0
    %v2031 = vadd.f32 0.0, %v2030
    %v2032 = vpop.f32.mrb[0].mxu0
    %2033 = vdwg.mxu0
    %v2035 = vrot.slane %v2031, 6
    %v2037 = vadd.f32 %v1437, %v2035
    %v2038 = vxor.u32 %v2037, 2147483648
    %v2039 = vmul.f32 %v2038, 1.442695
    %v2040 = vpow.pop %v2039
    %v2041 = vadd.f32 %v2040, 1.0
    %v2042 = vrcp.pop %v2041
    %v2043 = vmul.f32 1.0, %v2042
    %v2044 = vtanh.pop %v2037
    %v2046 = vrot.slane %v1952, 6
    %v2048 = vmul.f32 %v2043, %v2046
    %2050 = vrot.lane.b32.xlu0 %v2044, 64
    %v2051 = vpop.permute.xlu0 %2050
    %v2053 = vmul.f32 %v2043, %v2051
    %2055 = vrot.lane.b32.xlu0 %v2053, 32
    %v2056 = vpop.permute.xlu0 %2055
    %v2058 = vadd.f32 %v2048, %v2056
    %v2059 = vtanh.pop %v2058
    %2061 = vrot.lane.b32.xlu0 %v2059, 64
    %v2062 = vpop.permute.xlu0 %2061
    %v2064 = vmul.f32 %v2043, %v2062
    %v2066 = vrot.slane %v2064, 2
    %2067 = vrot.lane.b32.xlu0 %v2066, 32
    %v2068 = vpop.permute.xlu0 %2067
    %v2069 = vsel %vm220, %v2068, 0
    %2071 = vmatprep.subr.mxu0 0.0
    %2072 = vmatpush1.msra.mxu0 %v1344
    %2073 = vmatprep.subr.mxu0 0.0
    %2074 = vmatpush1.msra.mxu0 %v1345
    %2075 = vmatprep.subr.mxu0 0.0
    %2076 = vmatpush1.msra.mxu0 %v1346
    %2077 = vmatprep.subr.mxu0 0.0
    %2078 = vmatpush1.msra.mxu0 %v1347
    %2079 = vmatprep.subr.mxu0 0.0
    %2080 = vmatpush1.msra.mxu0 0.0
    %2081 = vmatprep.subr.mxu0 0.0
    %2082 = vmatpush1.msra.mxu0 0.0
    %2083 = vmatprep.subr.mxu0 0.0
    %2084 = vmatpush1.msra.mxu0 0.0
    %2085 = vmatprep.subr.mxu0 0.0
    %2086 = vmatpush1.msra.mxu0 0.0
    %2087 = vmatprep.subr.mxu0 0.0
    %2088 = vmatpush1.msra.mxu0 0.0
    %2089 = vmatprep.subr.mxu0 0.0
    %2090 = vmatpush1.msra.mxu0 0.0
    %2091 = vmatprep.subr.mxu0 0.0
    %2092 = vmatpush1.msra.mxu0 0.0
    %2093 = vmatprep.subr.mxu0 0.0
    %2094 = vmatpush1.msra.mxu0 0.0
    %2095 = vmatprep.subr.mxu0 0.0
    %2096 = vmatpush1.msra.mxu0 0.0
    %2097 = vmatprep.subr.mxu0 0.0
    %2098 = vmatpush1.msra.mxu0 0.0
    %2099 = vmatprep.subr.mxu0 0.0
    %2100 = vmatpush1.msra.mxu0 0.0
    %2101 = vmatprep.subr.mxu0 0.0
    %2102 = vmatpush1.msra.mxu0 0.0
    %2103 = vmatprep.subr.mxu0 0.0
    %2104 = vmatpush1.msra.mxu0 0.0
    %2105 = vmatprep.subr.mxu0 0.0
    %2106 = vmatpush1.msra.mxu0 0.0
    %2107 = vmatprep.subr.mxu0 0.0
    %2108 = vmatpush1.msra.mxu0 0.0
    %2109 = vmatprep.subr.mxu0 0.0
    %2110 = vmatpush1.msra.mxu0 0.0
    %2111 = vmatprep.subr.mxu0 0.0
    %2112 = vmatpush1.msra.mxu0 0.0
    %2113 = vmatprep.subr.mxu0 0.0
    %2114 = vmatpush1.msra.mxu0 0.0
    %2115 = vmatprep.subr.mxu0 0.0
    %2116 = vmatpush1.msra.mxu0 0.0
    %2117 = vmatprep.subr.mxu0 0.0
    %2118 = vmatpush1.msra.mxu0 0.0
    %2119 = vmatprep.subr.mxu0 0.0
    %2120 = vmatpush1.msra.mxu0 0.0
    %2121 = vmatprep.subr.mxu0 0.0
    %2122 = vmatpush1.msra.mxu0 0.0
    %2123 = vmatprep.subr.mxu0 0.0
    %2124 = vmatpush1.msra.mxu0 0.0
    %2125 = vmatprep.subr.mxu0 0.0
    %2126 = vmatpush1.msra.mxu0 0.0
    %2127 = vmatprep.subr.mxu0 0.0
    %2128 = vmatpush1.msra.mxu0 0.0
    %2129 = vmatprep.subr.mxu0 0.0
    %2130 = vmatpush1.msra.mxu0 0.0
    %2131 = vmatprep.subr.mxu0 0.0
    %2132 = vmatpush1.msra.mxu0 0.0
    %2133 = vmatprep.subr.mxu0 0.0
    %2134 = vmatpush1.msra.mxu0 0.0
    %2135 = vmatprep.mubr.f32.mxu0 0.0
    %2136 = vmatmul.mubr.f32.gmra.mrb[0].mxu0 %v2069
    %v2137 = vpop.f32.mrb[0].mxu0
    %v2138 = vadd.f32 0.0, %v2137
    %v2139 = vpop.f32.mrb[0].mxu0
    %2140 = vdwg.mxu0
    %v2142 = vrot.slane %v2138, 4
    %v2144 = vadd.f32 %v1437, %v2142
    %v2145 = vxor.u32 %v2144, 2147483648
    %v2146 = vmul.f32 %v2145, 1.442695
    %v2147 = vpow.pop %v2146
    %v2148 = vadd.f32 %v2147, 1.0
    %v2149 = vrcp.pop %v2148
    %v2150 = vmul.f32 1.0, %v2149
    %v2151 = vtanh.pop %v2144
    %v2153 = vrot.slane %v2058, 6
    %v2155 = vmul.f32 %v2150, %v2153
    %2157 = vrot.lane.b32.xlu0 %v2151, 64
    %v2158 = vpop.permute.xlu0 %2157
    %v2160 = vmul.f32 %v2150, %v2158
    %2162 = vrot.lane.b32.xlu0 %v2160, 32
    %v2163 = vpop.permute.xlu0 %2162
    %v2165 = vadd.f32 %v2155, %v2163
    %v2166 = vtanh.pop %v2165
    %2168 = vrot.lane.b32.xlu0 %v2166, 64
    %v2169 = vpop.permute.xlu0 %2168
    %v2171 = vmul.f32 %v2150, %v2169
    %v2173 = vrot.slane %v2171, 4
    %2174 = vrot.lane.b32.xlu0 %v2173, 32
    %v2175 = vpop.permute.xlu0 %2174
    %v2176 = vsel %vm220, %v2175, 0
    %2178 = vmatprep.subr.mxu0 0.0
    %2179 = vmatpush1.msra.mxu0 %v1344
    %2180 = vmatprep.subr.mxu0 0.0
    %2181 = vmatpush1.msra.mxu0 %v1345
    %2182 = vmatprep.subr.mxu0 0.0
    %2183 = vmatpush1.msra.mxu0 %v1346
    %2184 = vmatprep.subr.mxu0 0.0
    %2185 = vmatpush1.msra.mxu0 %v1347
    %2186 = vmatprep.subr.mxu0 0.0
    %2187 = vmatpush1.msra.mxu0 0.0
    %2188 = vmatprep.subr.mxu0 0.0
    %2189 = vmatpush1.msra.mxu0 0.0
    %2190 = vmatprep.subr.mxu0 0.0
    %2191 = vmatpush1.msra.mxu0 0.0
    %2192 = vmatprep.subr.mxu0 0.0
    %2193 = vmatpush1.msra.mxu0 0.0
    %2194 = vmatprep.subr.mxu0 0.0
    %2195 = vmatpush1.msra.mxu0 0.0
    %2196 = vmatprep.subr.mxu0 0.0
    %2197 = vmatpush1.msra.mxu0 0.0
    %2198 = vmatprep.subr.mxu0 0.0
    %2199 = vmatpush1.msra.mxu0 0.0
    %2200 = vmatprep.subr.mxu0 0.0
    %2201 = vmatpush1.msra.mxu0 0.0
    %2202 = vmatprep.subr.mxu0 0.0
    %2203 = vmatpush1.msra.mxu0 0.0
    %2204 = vmatprep.subr.mxu0 0.0
    %2205 = vmatpush1.msra.mxu0 0.0
    %2206 = vmatprep.subr.mxu0 0.0
    %2207 = vmatpush1.msra.mxu0 0.0
    %2208 = vmatprep.subr.mxu0 0.0
    %2209 = vmatpush1.msra.mxu0 0.0
    %2210 = vmatprep.subr.mxu0 0.0
    %2211 = vmatpush1.msra.mxu0 0.0
    %2212 = vmatprep.subr.mxu0 0.0
    %2213 = vmatpush1.msra.mxu0 0.0
    %2214 = vmatprep.subr.mxu0 0.0
    %2215 = vmatpush1.msra.mxu0 0.0
    %2216 = vmatprep.subr.mxu0 0.0
    %2217 = vmatpush1.msra.mxu0 0.0
    %2218 = vmatprep.subr.mxu0 0.0
    %2219 = vmatpush1.msra.mxu0 0.0
    %2220 = vmatprep.subr.mxu0 0.0
    %2221 = vmatpush1.msra.mxu0 0.0
    %2222 = vmatprep.subr.mxu0 0.0
    %2223 = vmatpush1.msra.mxu0 0.0
    %2224 = vmatprep.subr.mxu0 0.0
    %2225 = vmatpush1.msra.mxu0 0.0
    %2226 = vmatprep.subr.mxu0 0.0
    %2227 = vmatpush1.msra.mxu0 0.0
    %2228 = vmatprep.subr.mxu0 0.0
    %2229 = vmatpush1.msra.mxu0 0.0
    %2230 = vmatprep.subr.mxu0 0.0
    %2231 = vmatpush1.msra.mxu0 0.0
    %2232 = vmatprep.subr.mxu0 0.0
    %2233 = vmatpush1.msra.mxu0 0.0
    %2234 = vmatprep.subr.mxu0 0.0
    %2235 = vmatpush1.msra.mxu0 0.0
    %2236 = vmatprep.subr.mxu0 0.0
    %2237 = vmatpush1.msra.mxu0 0.0
    %2238 = vmatprep.subr.mxu0 0.0
    %2239 = vmatpush1.msra.mxu0 0.0
    %2240 = vmatprep.subr.mxu0 0.0
    %2241 = vmatpush1.msra.mxu0 0.0
    %2242 = vmatprep.mubr.f32.mxu0 0.0
    %2243 = vmatmul.mubr.f32.gmra.mrb[0].mxu0 %v2176
    %v2244 = vpop.f32.mrb[0].mxu0
    %v2245 = vadd.f32 0.0, %v2244
    %v2246 = vpop.f32.mrb[0].mxu0
    %2247 = vdwg.mxu0
    %v2249 = vrot.slane %v2245, 2
    %v2251 = vadd.f32 %v1437, %v2249
    %v2252 = vxor.u32 %v2251, 2147483648
    %v2253 = vmul.f32 %v2252, 1.442695
    %v2254 = vpow.pop %v2253
    %v2255 = vadd.f32 %v2254, 1.0
    %v2256 = vrcp.pop %v2255
    %v2257 = vmul.f32 1.0, %v2256
    %v2258 = vtanh.pop %v2251
    %v2260 = vrot.slane %v2165, 6
    %v2262 = vmul.f32 %v2257, %v2260
    %2264 = vrot.lane.b32.xlu0 %v2258, 64
    %v2265 = vpop.permute.xlu0 %2264
    %v2267 = vmul.f32 %v2257, %v2265
    %2269 = vrot.lane.b32.xlu0 %v2267, 32
    %v2270 = vpop.permute.xlu0 %2269
    %v2272 = vadd.f32 %v2262, %v2270
    %v2273 = vtanh.pop %v2272
    %2275 = vrot.lane.b32.xlu0 %v2273, 64
    %v2276 = vpop.permute.xlu0 %2275
    %v2278 = vmul.f32 %v2257, %v2276
    %v2279 = vsel %vm1331, %v1534, %v1640
    %v2280 = vsel %vm1333, %v2279, %v1747
    %v2281 = vsel %vm1335, %v2280, %v1854
    %v2282 = vsel %vm1331, %v1958, %v2064
    %v2283 = vsel %vm1333, %v2282, %v2171
    %v2284 = vsel %vm1335, %v2283, %v2278
    %v2285 = vld [vmem:[%s10] sm:$0xff]
    %v2286 = vld [vmem:[%s10 + $0x8] sm:$0xff]
    %v2287 = vld [vmem:[%s10 + $0x10] sm:$0xff]
    %v2288 = vld [vmem:[%s10 + $0x18] sm:$0xff]
    %v2289 = vld [vmem:[#allocation8] sm:$0x1]
    %v2291 = vlaneseq
    %v2292 = vshrl.u32 %v2291, 7
    %v2293 = vsub.s32 0, %v2292
    %v2294 = vrot.slane %v2289, %v2293
    %2296 = vmatprep.subr.mxu0 0.0
    %2297 = vmatpush1.msra.mxu0 %v2285
    %2298 = vmatprep.subr.mxu0 0.0
    %2299 = vmatpush1.msra.mxu0 %v2286
    %2300 = vmatprep.subr.mxu0 0.0
    %2301 = vmatpush1.msra.mxu0 %v2287
    %2302 = vmatprep.subr.mxu0 0.0
    %2303 = vmatpush1.msra.mxu0 %v2288
    %2304 = vmatprep.subr.mxu0 0.0
    %2305 = vmatpush1.msra.mxu0 0.0
    %2306 = vmatprep.subr.mxu0 0.0
    %2307 = vmatpush1.msra.mxu0 0.0
    %2308 = vmatprep.subr.mxu0 0.0
    %2309 = vmatpush1.msra.mxu0 0.0
    %2310 = vmatprep.subr.mxu0 0.0
    %2311 = vmatpush1.msra.mxu0 0.0
    %2312 = vmatprep.subr.mxu0 0.0
    %2313 = vmatpush1.msra.mxu0 0.0
    %2314 = vmatprep.subr.mxu0 0.0
    %2315 = vmatpush1.msra.mxu0 0.0
    %2316 = vmatprep.subr.mxu0 0.0
    %2317 = vmatpush1.msra.mxu0 0.0
    %2318 = vmatprep.subr.mxu0 0.0
    %2319 = vmatpush1.msra.mxu0 0.0
    %2320 = vmatprep.subr.mxu0 0.0
    %2321 = vmatpush1.msra.mxu0 0.0
    %2322 = vmatprep.subr.mxu0 0.0
    %2323 = vmatpush1.msra.mxu0 0.0
    %2324 = vmatprep.subr.mxu0 0.0
    %2325 = vmatpush1.msra.mxu0 0.0
    %2326 = vmatprep.subr.mxu0 0.0
    %2327 = vmatpush1.msra.mxu0 0.0
    %2328 = vmatprep.subr.mxu0 0.0
    %2329 = vmatpush1.msra.mxu0 0.0
    %2330 = vmatprep.subr.mxu0 0.0
    %2331 = vmatpush1.msra.mxu0 0.0
    %2332 = vmatprep.subr.mxu0 0.0
    %2333 = vmatpush1.msra.mxu0 0.0
    %2334 = vmatprep.subr.mxu0 0.0
    %2335 = vmatpush1.msra.mxu0 0.0
    %2336 = vmatprep.subr.mxu0 0.0
    %2337 = vmatpush1.msra.mxu0 0.0
    %2338 = vmatprep.subr.mxu0 0.0
    %2339 = vmatpush1.msra.mxu0 0.0
    %2340 = vmatprep.subr.mxu0 0.0
    %2341 = vmatpush1.msra.mxu0 0.0
    %2342 = vmatprep.subr.mxu0 0.0
    %2343 = vmatpush1.msra.mxu0 0.0
    %2344 = vmatprep.subr.mxu0 0.0
    %2345 = vmatpush1.msra.mxu0 0.0
    %2346 = vmatprep.subr.mxu0 0.0
    %2347 = vmatpush1.msra.mxu0 0.0
    %2348 = vmatprep.subr.mxu0 0.0
    %2349 = vmatpush1.msra.mxu0 0.0
    %2350 = vmatprep.subr.mxu0 0.0
    %2351 = vmatpush1.msra.mxu0 0.0
    %2352 = vmatprep.subr.mxu0 0.0
    %2353 = vmatpush1.msra.mxu0 0.0
    %2354 = vmatprep.subr.mxu0 0.0
    %2355 = vmatpush1.msra.mxu0 0.0
    %2356 = vmatprep.subr.mxu0 0.0
    %2357 = vmatpush1.msra.mxu0 0.0
    %2358 = vmatprep.subr.mxu0 0.0
    %2359 = vmatpush1.msra.mxu0 0.0
    %2360 = vmatprep.mubr.f32.mxu0 0.0
    %2361 = vmatmul.mubr.f32.gmra.mrb[0].mxu0 %v409
    %v2362 = vpop.f32.mrb[0].mxu0
    %v2363 = vadd.f32 %v2294, %v2362
    %v2364 = vpop.f32.mrb[0].mxu0
    %2365 = vmatprep.mubr.f32.mxu0 0.0
    %2366 = vmatmul.mubr.f32.gmra.mrb[0].mxu0 %v412
    %v2367 = vpop.f32.mrb[0].mxu0
    %v2368 = vadd.f32 %v2294, %v2367
    %v2369 = vpop.f32.mrb[0].mxu0
    %2370 = vdwg.mxu0
    %v2371 = vld [vmem:[#allocation10] sm:$0xff]
    %v2372 = vld [vmem:[#allocation10 + $0x8] sm:$0xff]
    %v2373 = vld [vmem:[#allocation10 + $0x10] sm:$0xff]
    %v2374 = vld [vmem:[#allocation10 + $0x18] sm:$0xff]
    %v2375 = vld [vmem:[#allocation11] sm:$0x1]
    %v2377 = vlaneseq
    %v2378 = vshrl.u32 %v2377, 7
    %v2379 = vsub.s32 0, %v2378
    %v2380 = vrot.slane %v2375, %v2379
    %v2383 = vsel %vm220, %v2363, 0
    %v2386 = vsel %vm220, %v2368, 0
    %2388 = vmatprep.subr.mxu0 0.0
    %2389 = vmatpush1.msra.mxu0 %v2371
    %2390 = vmatprep.subr.mxu0 0.0
    %2391 = vmatpush1.msra.mxu0 %v2372
    %2392 = vmatprep.subr.mxu0 0.0
    %2393 = vmatpush1.msra.mxu0 %v2373
    %2394 = vmatprep.subr.mxu0 0.0
    %2395 = vmatpush1.msra.mxu0 %v2374
    %2396 = vmatprep.subr.mxu0 0.0
    %2397 = vmatpush1.msra.mxu0 0.0
    %2398 = vmatprep.subr.mxu0 0.0
    %2399 = vmatpush1.msra.mxu0 0.0
    %2400 = vmatprep.subr.mxu0 0.0
    %2401 = vmatpush1.msra.mxu0 0.0
    %2402 = vmatprep.subr.mxu0 0.0
    %2403 = vmatpush1.msra.mxu0 0.0
    %2404 = vmatprep.subr.mxu0 0.0
    %2405 = vmatpush1.msra.mxu0 0.0
    %2406 = vmatprep.subr.mxu0 0.0
    %2407 = vmatpush1.msra.mxu0 0.0
    %2408 = vmatprep.subr.mxu0 0.0
    %2409 = vmatpush1.msra.mxu0 0.0
    %2410 = vmatprep.subr.mxu0 0.0
    %2411 = vmatpush1.msra.mxu0 0.0
    %2412 = vmatprep.subr.mxu0 0.0
    %2413 = vmatpush1.msra.mxu0 0.0
    %2414 = vmatprep.subr.mxu0 0.0
    %2415 = vmatpush1.msra.mxu0 0.0
    %2416 = vmatprep.subr.mxu0 0.0
    %2417 = vmatpush1.msra.mxu0 0.0
    %2418 = vmatprep.subr.mxu0 0.0
    %2419 = vmatpush1.msra.mxu0 0.0
    %2420 = vmatprep.subr.mxu0 0.0
    %2421 = vmatpush1.msra.mxu0 0.0
    %2422 = vmatprep.subr.mxu0 0.0
    %2423 = vmatpush1.msra.mxu0 0.0
    %2424 = vmatprep.subr.mxu0 0.0
    %2425 = vmatpush1.msra.mxu0 0.0
    %2426 = vmatprep.subr.mxu0 0.0
    %2427 = vmatpush1.msra.mxu0 0.0
    %2428 = vmatprep.subr.mxu0 0.0
    %2429 = vmatpush1.msra.mxu0 0.0
    %2430 = vmatprep.subr.mxu0 0.0
    %2431 = vmatpush1.msra.mxu0 0.0
    %2432 = vmatprep.subr.mxu0 0.0
    %2433 = vmatpush1.msra.mxu0 0.0
    %2434 = vmatprep.subr.mxu0 0.0
    %2435 = vmatpush1.msra.mxu0 0.0
    %2436 = vmatprep.subr.mxu0 0.0
    %2437 = vmatpush1.msra.mxu0 0.0
    %2438 = vmatprep.subr.mxu0 0.0
    %2439 = vmatpush1.msra.mxu0 0.0
    %2440 = vmatprep.subr.mxu0 0.0
    %2441 = vmatpush1.msra.mxu0 0.0
    %2442 = vmatprep.subr.mxu0 0.0
    %2443 = vmatpush1.msra.mxu0 0.0
    %2444 = vmatprep.subr.mxu0 0.0
    %2445 = vmatpush1.msra.mxu0 0.0
    %2446 = vmatprep.subr.mxu0 0.0
    %2447 = vmatpush1.msra.mxu0 0.0
    %2448 = vmatprep.subr.mxu0 0.0
    %2449 = vmatpush1.msra.mxu0 0.0
    %2450 = vmatprep.subr.mxu0 0.0
    %2451 = vmatpush1.msra.mxu0 0.0
    %2452 = vmatprep.mubr.f32.mxu0 0.0
    %2453 = vmatmul.mubr.f32.gmra.mrb[0].mxu0 %v2383
    %v2454 = vpop.f32.mrb[0].mxu0
    %v2455 = vadd.f32 %v2380, %v2454
    %v2456 = vpop.f32.mrb[0].mxu0
    %2457 = vmatprep.mubr.f32.mxu0 0.0
    %2458 = vmatmul.mubr.f32.gmra.mrb[0].mxu0 %v2386
    %v2459 = vpop.f32.mrb[0].mxu0
    %v2460 = vadd.f32 %v2380, %v2459
    %v2461 = vpop.f32.mrb[0].mxu0
    %2462 = vdwg.mxu0
    %v2463 = vld [vmem:[#allocation13] sm:$0xff]
    %v2464 = vld [vmem:[#allocation13 + $0x8] sm:$0xff]
    %v2465 = vld [vmem:[#allocation13 + $0x10] sm:$0xff]
    %v2466 = vld [vmem:[#allocation13 + $0x18] sm:$0xff]
    %v2467 = vld [vmem:[#allocation14] sm:$0xff]
    %v2468 = vld [vmem:[#allocation14 + $0x8] sm:$0xff]
    %v2469 = vld [vmem:[#allocation14 + $0x10] sm:$0xff]
    %v2470 = vld [vmem:[#allocation14 + $0x18] sm:$0xff]
    %v2472 = vsel %vm220, %v2455, 0
    %v2475 = vsel %vm220, %v2460, 0
    %2477 = vmatprep.subr.mxu0 0.0
    %2478 = vmatpush1.msra.mxu0 %v2467
    %2479 = vmatprep.subr.mxu0 0.0
    %2480 = vmatpush1.msra.mxu0 %v2468
    %2481 = vmatprep.subr.mxu0 0.0
    %2482 = vmatpush1.msra.mxu0 %v2469
    %2483 = vmatprep.subr.mxu0 0.0
    %2484 = vmatpush1.msra.mxu0 %v2470
    %2485 = vmatprep.subr.mxu0 0.0
    %2486 = vmatpush1.msra.mxu0 0.0
    %2487 = vmatprep.subr.mxu0 0.0
    %2488 = vmatpush1.msra.mxu0 0.0
    %2489 = vmatprep.subr.mxu0 0.0
    %2490 = vmatpush1.msra.mxu0 0.0
    %2491 = vmatprep.subr.mxu0 0.0
    %2492 = vmatpush1.msra.mxu0 0.0
    %2493 = vmatprep.subr.mxu0 0.0
    %2494 = vmatpush1.msra.mxu0 0.0
    %2495 = vmatprep.subr.mxu0 0.0
    %2496 = vmatpush1.msra.mxu0 0.0
    %2497 = vmatprep.subr.mxu0 0.0
    %2498 = vmatpush1.msra.mxu0 0.0
    %2499 = vmatprep.subr.mxu0 0.0
    %2500 = vmatpush1.msra.mxu0 0.0
    %2501 = vmatprep.subr.mxu0 0.0
    %2502 = vmatpush1.msra.mxu0 0.0
    %2503 = vmatprep.subr.mxu0 0.0
    %2504 = vmatpush1.msra.mxu0 0.0
    %2505 = vmatprep.subr.mxu0 0.0
    %2506 = vmatpush1.msra.mxu0 0.0
    %2507 = vmatprep.subr.mxu0 0.0
    %2508 = vmatpush1.msra.mxu0 0.0
    %2509 = vmatprep.subr.mxu0 0.0
    %2510 = vmatpush1.msra.mxu0 0.0
    %2511 = vmatprep.subr.mxu0 0.0
    %2512 = vmatpush1.msra.mxu0 0.0
    %2513 = vmatprep.subr.mxu0 0.0
    %2514 = vmatpush1.msra.mxu0 0.0
    %2515 = vmatprep.subr.mxu0 0.0
    %2516 = vmatpush1.msra.mxu0 0.0
    %2517 = vmatprep.subr.mxu0 0.0
    %2518 = vmatpush1.msra.mxu0 0.0
    %2519 = vmatprep.subr.mxu0 0.0
    %2520 = vmatpush1.msra.mxu0 0.0
    %2521 = vmatprep.subr.mxu0 0.0
    %2522 = vmatpush1.msra.mxu0 0.0
    %2523 = vmatprep.subr.mxu0 0.0
    %2524 = vmatpush1.msra.mxu0 0.0
    %2525 = vmatprep.subr.mxu0 0.0
    %2526 = vmatpush1.msra.mxu0 0.0
    %2527 = vmatprep.subr.mxu0 0.0
    %2528 = vmatpush1.msra.mxu0 0.0
    %2529 = vmatprep.subr.mxu0 0.0
    %2530 = vmatpush1.msra.mxu0 0.0
    %2531 = vmatprep.subr.mxu0 0.0
    %2532 = vmatpush1.msra.mxu0 0.0
    %2533 = vmatprep.subr.mxu0 0.0
    %2534 = vmatpush1.msra.mxu0 0.0
    %2535 = vmatprep.subr.mxu0 0.0
    %2536 = vmatpush1.msra.mxu0 0.0
    %2537 = vmatprep.subr.mxu0 0.0
    %2538 = vmatpush1.msra.mxu0 0.0
    %2539 = vmatprep.subr.mxu0 0.0
    %2540 = vmatpush1.msra.mxu0 0.0
    %2541 = vmatprep.mubr.f32.mxu0 0.0
    %2542 = vmatmul.mubr.f32.gmra.mrb[0].mxu0 %v2472
    %v2543 = vpop.f32.mrb[0].mxu0
    %v2544 = vadd.f32 0.0, %v2543
    %v2545 = vpop.f32.mrb[0].mxu0
    %2546 = vmatprep.mubr.f32.mxu0 0.0
    %2547 = vmatmul.mubr.f32.gmra.mrb[0].mxu0 %v2475
    %v2548 = vpop.f32.mrb[0].mxu0
    %v2549 = vadd.f32 0.0, %v2548
    %v2550 = vpop.f32.mrb[0].mxu0
    %2551 = vdwg.mxu0
    %2554 = vrot.lane.b32.xlu0 %v2281, 32
    %v2555 = vpop.permute.xlu0 %2554
    %2556 = vrot.lane.b32.xlu0 %v2284, 32
    %v2557 = vpop.permute.xlu0 %2556
    %v2558 = vsel %vm220, %v2555, 0
    %v2560 = vsel %vm220, %v2557, 0
    %2562 = vmatprep.subr.mxu0 0.0
    %2563 = vmatpush1.msra.mxu0 %v2463
    %2564 = vmatprep.subr.mxu0 0.0
    %2565 = vmatpush1.msra.mxu0 %v2464
    %2566 = vmatprep.subr.mxu0 0.0
    %2567 = vmatpush1.msra.mxu0 %v2465
    %2568 = vmatprep.subr.mxu0 0.0
    %2569 = vmatpush1.msra.mxu0 %v2466
    %2570 = vmatprep.subr.mxu0 0.0
    %2571 = vmatpush1.msra.mxu0 0.0
    %2572 = vmatprep.subr.mxu0 0.0
    %2573 = vmatpush1.msra.mxu0 0.0
    %2574 = vmatprep.subr.mxu0 0.0
    %2575 = vmatpush1.msra.mxu0 0.0
    %2576 = vmatprep.subr.mxu0 0.0
    %2577 = vmatpush1.msra.mxu0 0.0
    %2578 = vmatprep.subr.mxu0 0.0
    %2579 = vmatpush1.msra.mxu0 0.0
    %2580 = vmatprep.subr.mxu0 0.0
    %2581 = vmatpush1.msra.mxu0 0.0
    %2582 = vmatprep.subr.mxu0 0.0
    %2583 = vmatpush1.msra.mxu0 0.0
    %2584 = vmatprep.subr.mxu0 0.0
    %2585 = vmatpush1.msra.mxu0 0.0
    %2586 = vmatprep.subr.mxu0 0.0
    %2587 = vmatpush1.msra.mxu0 0.0
    %2588 = vmatprep.subr.mxu0 0.0
    %2589 = vmatpush1.msra.mxu0 0.0
    %2590 = vmatprep.subr.mxu0 0.0
    %2591 = vmatpush1.msra.mxu0 0.0
    %2592 = vmatprep.subr.mxu0 0.0
    %2593 = vmatpush1.msra.mxu0 0.0
    %2594 = vmatprep.subr.mxu0 0.0
    %2595 = vmatpush1.msra.mxu0 0.0
    %2596 = vmatprep.subr.mxu0 0.0
    %2597 = vmatpush1.msra.mxu0 0.0
    %2598 = vmatprep.subr.mxu0 0.0
    %2599 = vmatpush1.msra.mxu0 0.0
    %2600 = vmatprep.subr.mxu0 0.0
    %2601 = vmatpush1.msra.mxu0 0.0
    %2602 = vmatprep.subr.mxu0 0.0
    %2603 = vmatpush1.msra.mxu0 0.0
    %2604 = vmatprep.subr.mxu0 0.0
    %2605 = vmatpush1.msra.mxu0 0.0
    %2606 = vmatprep.subr.mxu0 0.0
    %2607 = vmatpush1.msra.mxu0 0.0
    %2608 = vmatprep.subr.mxu0 0.0
    %2609 = vmatpush1.msra.mxu0 0.0
    %2610 = vmatprep.subr.mxu0 0.0
    %2611 = vmatpush1.msra.mxu0 0.0
    %2612 = vmatprep.subr.mxu0 0.0
    %2613 = vmatpush1.msra.mxu0 0.0
    %2614 = vmatprep.subr.mxu0 0.0
    %2615 = vmatpush1.msra.mxu0 0.0
    %2616 = vmatprep.subr.mxu0 0.0
    %2617 = vmatpush1.msra.mxu0 0.0
    %2618 = vmatprep.subr.mxu0 0.0
    %2619 = vmatpush1.msra.mxu0 0.0
    %2620 = vmatprep.subr.mxu0 0.0
    %2621 = vmatpush1.msra.mxu0 0.0
    %2622 = vmatprep.subr.mxu0 0.0
    %2623 = vmatpush1.msra.mxu0 0.0
    %2624 = vmatprep.subr.mxu0 0.0
    %2625 = vmatpush1.msra.mxu0 0.0
    %2626 = vmatprep.mubr.f32.mxu0 0.0
    %2627 = vmatmul.mubr.f32.gmra.mrb[0].mxu0 %v2558
    %v2628 = vpop.f32.mrb[0].mxu0
    %v2629 = vadd.f32 %v2544, %v2628
    %v2630 = vpop.f32.mrb[0].mxu0
    %2631 = vmatprep.mubr.f32.mxu0 0.0
    %2632 = vmatmul.mubr.f32.gmra.mrb[0].mxu0 %v2560
    %v2633 = vpop.f32.mrb[0].mxu0
    %v2634 = vadd.f32 %v2549, %v2633
    %v2635 = vpop.f32.mrb[0].mxu0
    %2636 = vdwg.mxu0
    %v2637 = vld [vmem:[#allocation16] sm:$0x1]
    %v2639 = vlaneseq
    %v2640 = vshrl.u32 %v2639, 7
    %v2641 = vsub.s32 0, %v2640
    %v2642 = vrot.slane %v2637, %v2641
    %v2644 = vadd.f32 %v2629, %v2642
    %v2645 = vadd.f32 %v2634, %v2642
    %v2646 = vld [vmem:[#allocation17] sm:$0xff]
    %v2647 = vld [vmem:[#allocation17 + $0x8] sm:$0xff]
    %v2648 = vld [vmem:[#allocation17 + $0x10] sm:$0xff]
    %v2649 = vld [vmem:[#allocation17 + $0x18] sm:$0xff]
    %v2650 = vld [vmem:[#allocation19] sm:$0x1]
    %v2652 = vlaneseq
    %v2653 = vshrl.u32 %v2652, 7
    %v2654 = vsub.s32 0, %v2653
    %v2655 = vrot.slane %v2650, %v2654
    %v2658 = vsel %vm220, %v2644, 0
    %v2661 = vsel %vm220, %v2645, 0
    %2663 = vmatprep.subr.mxu0 0.0
    %2664 = vmatpush1.msra.mxu0 %v2646
    %2665 = vmatprep.subr.mxu0 0.0
    %2666 = vmatpush1.msra.mxu0 %v2647
    %2667 = vmatprep.subr.mxu0 0.0
    %2668 = vmatpush1.msra.mxu0 %v2648
    %2669 = vmatprep.subr.mxu0 0.0
    %2670 = vmatpush1.msra.mxu0 %v2649
    %2671 = vmatprep.subr.mxu0 0.0
    %2672 = vmatpush1.msra.mxu0 0.0
    %2673 = vmatprep.subr.mxu0 0.0
    %2674 = vmatpush1.msra.mxu0 0.0
    %2675 = vmatprep.subr.mxu0 0.0
    %2676 = vmatpush1.msra.mxu0 0.0
    %2677 = vmatprep.subr.mxu0 0.0
    %2678 = vmatpush1.msra.mxu0 0.0
    %2679 = vmatprep.subr.mxu0 0.0
    %2680 = vmatpush1.msra.mxu0 0.0
    %2681 = vmatprep.subr.mxu0 0.0
    %2682 = vmatpush1.msra.mxu0 0.0
    %2683 = vmatprep.subr.mxu0 0.0
    %2684 = vmatpush1.msra.mxu0 0.0
    %2685 = vmatprep.subr.mxu0 0.0
    %2686 = vmatpush1.msra.mxu0 0.0
    %2687 = vmatprep.subr.mxu0 0.0
    %2688 = vmatpush1.msra.mxu0 0.0
    %2689 = vmatprep.subr.mxu0 0.0
    %2690 = vmatpush1.msra.mxu0 0.0
    %2691 = vmatprep.subr.mxu0 0.0
    %2692 = vmatpush1.msra.mxu0 0.0
    %2693 = vmatprep.subr.mxu0 0.0
    %2694 = vmatpush1.msra.mxu0 0.0
    %2695 = vmatprep.subr.mxu0 0.0
    %2696 = vmatpush1.msra.mxu0 0.0
    %2697 = vmatprep.subr.mxu0 0.0
    %2698 = vmatpush1.msra.mxu0 0.0
    %2699 = vmatprep.subr.mxu0 0.0
    %2700 = vmatpush1.msra.mxu0 0.0
    %2701 = vmatprep.subr.mxu0 0.0
    %2702 = vmatpush1.msra.mxu0 0.0
    %2703 = vmatprep.subr.mxu0 0.0
    %2704 = vmatpush1.msra.mxu0 0.0
    %2705 = vmatprep.subr.mxu0 0.0
    %2706 = vmatpush1.msra.mxu0 0.0
    %2707 = vmatprep.subr.mxu0 0.0
    %2708 = vmatpush1.msra.mxu0 0.0
    %2709 = vmatprep.subr.mxu0 0.0
    %2710 = vmatpush1.msra.mxu0 0.0
    %2711 = vmatprep.subr.mxu0 0.0
    %2712 = vmatpush1.msra.mxu0 0.0
    %2713 = vmatprep.subr.mxu0 0.0
    %2714 = vmatpush1.msra.mxu0 0.0
    %2715 = vmatprep.subr.mxu0 0.0
    %2716 = vmatpush1.msra.mxu0 0.0
    %2717 = vmatprep.subr.mxu0 0.0
    %2718 = vmatpush1.msra.mxu0 0.0
    %2719 = vmatprep.subr.mxu0 0.0
    %2720 = vmatpush1.msra.mxu0 0.0
    %2721 = vmatprep.subr.mxu0 0.0
    %2722 = vmatpush1.msra.mxu0 0.0
    %2723 = vmatprep.subr.mxu0 0.0
    %2724 = vmatpush1.msra.mxu0 0.0
    %2725 = vmatprep.subr.mxu0 0.0
    %2726 = vmatpush1.msra.mxu0 0.0
    %2727 = vmatprep.mubr.f32.mxu0 0.0
    %2728 = vmatmul.mubr.f32.gmra.mrb[0].mxu0 %v2658
    %v2729 = vpop.f32.mrb[0].mxu0
    %v2730 = vadd.f32 %v2655, %v2729
    %v2731 = vpop.f32.mrb[0].mxu0
    %2732 = vmatprep.mubr.f32.mxu0 0.0
    %2733 = vmatmul.mubr.f32.gmra.mrb[0].mxu0 %v2661
    %v2734 = vpop.f32.mrb[0].mxu0
    %v2735 = vadd.f32 %v2655, %v2734
    %v2736 = vpop.f32.mrb[0].mxu0
    %2737 = vdwg.mxu0
    %v2739 = vrot.slane %v2730, 1
    %v2741 = vrot.slane %v2730, 2
    %v2743 = vrot.slane %v2730, 3
    %v2746 = vrot.slane %v2735, 4
    %v2748 = vrot.slane %v2735, 5
    %v2750 = vrot.slane %v2735, 6
    %v2752 = vrot.slane %v2735, 7
    %vm2754 = vcmask 1040384
    %v2755 = vsel %vm2754, %v2730, %v2739
    %v2756 = vsel %vm1331, %v2755, %v2741
    %vm2757 = vcmask 1042432
    %v2758 = vsel %vm2757, %v2756, %v2743
    %v2759 = vsel %vm1333, %v2758, %v2746
    %vm2760 = vcmask 1044480
    %v2761 = vsel %vm2760, %v2759, %v2748
    %v2762 = vsel %vm1335, %v2761, %v2750
    %vm2763 = vcmask 1046528
    %v2764 = vsel %vm2763, %v2762, %v2752
    %2765 = vst.msk [vmem:[#allocation20] sm:$0xff] %vm220, %v2764
    %v2766 = vrot.slane %v2730, 4
    %v2768 = vsel %vm2754, %v2739, %v2741
    %v2769 = vsel %vm1331, %v2768, %v2743
    %v2770 = vsel %vm2757, %v2769, %v2766
    %v2771 = vsel %vm1333, %v2770, %v2748
    %v2772 = vsel %vm2760, %v2771, %v2750
    %v2773 = vsel %vm1335, %v2772, %v2752
    %v2774 = vsel %vm2763, %v2773, %v2735
    %s2775 = scalar_lea.vmem [#allocation20], 8
    %2776 = vst.msk [vmem:[%s2775] sm:$0xff] %vm220, %v2774
    // Predicated region
    $region122: #{tweet_model_forward.1} parent=1 // pred_check
      _
    $region123: #{tweet_model_forward.1} parent=1 // pred_check_branch
      %2778 = sbr.rel (0) target = $region125
    $region124: #{tweet_model_forward.1} parent=1 // pred_region
      %s2780 = ssub.s32 256, 256
      %2781 = vsyncadd [#allocation4], %s2780
      %s2782 = sshll.u32 [#allocation20], 4
      %s2783 = int_to_ptr.vmem [resolvable:$true] %s2782
      %2788 = dma.vmem_to_hbm [thread:$0]  %s2783, 256, %s19, [#allocation4], 128, 128, 8
    $region125: #{tweet_model_forward.1} parent=1 // pred_fallthru
      _
    // Predicated region
    $region126: #{tweet_model_forward.1} parent=1 // pred_check
      _
    $region127: #{tweet_model_forward.1} parent=1 // pred_check_branch
      %2790 = sbr.rel (0) target = $region129
    $region128: #{tweet_model_forward.1} parent=1 // pred_region
      %2791 = dma.done [#allocation4], 256
    $region129: #{tweet_model_forward.1} parent=1 // pred_fallthru
      _
    %2792 = vsyncpa [#allocation3], 1
    %2793 = vsyncpa [#allocation6], 1
    %2794 = vsyncpa [#allocation9], 1
    %2795 = vsyncpa [#allocation12], 1
    %2796 = vsyncpa [#allocation15], 1
    %2797 = vsyncpa [#allocation18], 1
    %2798 = vsyncpa [#allocation4], 1

</llo_original>
